<compile_context>
chip_gen: v7x
topology: tpu7x:2x2x1
jax: 0.10.0
libtpu: 0.0.40
codegen_flags: <defaults>
</compile_context>

<pallas_src>
import functools

import jax
import jax.numpy as jnp
from jax.experimental import pallas as pl
from jax.experimental.pallas import tpu as pltpu


# -----------------------------------------------------------------------------
# In-kernel helper: 3x3 "SAME" conv as a single im2col matmul + folded BN + ReLU
# -----------------------------------------------------------------------------
def _conv3x3_bn_relu(x, wcol, scale, shift):
    """x: (1, H, W, C) activations (compute dtype); wcol: (9*C, Cout) compute
    dtype; scale/shift: (1, Cout) f32.  Returns (H*W, Cout) f32."""
    _, H, W, C = x.shape
    # Zero halo along H: concat on a leading (non-tiled) dim, trivially cheap.
    zrow = jnp.zeros((1, 1, W, C), x.dtype)
    xp = jnp.concatenate([zrow, x, zrow], axis=1)              # (1, H+2, W, C)
    # Zero halo along W (sublane axis): 8-wide halos so every concat piece is
    # sublane-tile aligned; the extra zero columns are simply never read.
    zcol = jnp.zeros((1, H + 2, 8, C), x.dtype)
    xp = jnp.concatenate([zcol, xp, zcol], axis=2)             # (1, H+2, W+16, C)
    # im2col: 9 shifted views concatenated on the lane axis, then ONE matmul
    # (replaces 9 tiny MXU dots + 9 retile copies of the previous version).
    cols = [xp[:, kh:kh + H, 7 + kw:7 + kw + W, :]
            for kh in range(3) for kw in range(3)]
    patches = jnp.concatenate(cols, axis=-1).reshape(H * W, 9 * C)
    acc = jnp.dot(patches, wcol, preferred_element_type=jnp.float32)
    # BN (folded) + ReLU epilogue in f32.
    return jnp.maximum(acc * scale + shift, 0.0)


# -----------------------------------------------------------------------------
# Fused kernel: conv1 (+ conv2 (+ GAP+linear)), one batch element per grid step
# -----------------------------------------------------------------------------
def _fused_wrn_kernel(*refs, depth):
    x_ref = refs[0]
    w1_ref, s1_ref, b1_ref = refs[1:4]
    i = 4
    if depth >= 2:
        w2_ref, s2_ref, b2_ref = refs[i:i + 3]
        i += 3
    if depth >= 3:
        wl_ref, bl_ref = refs[i:i + 2]
        i += 2
    out_refs = refs[i:]

    _, H, W, _ = x_ref.shape
    cdtype = x_ref.dtype  # compute (matmul operand) dtype, e.g. bf16

    # ---- block "conv1" -------------------------------------------------------
    y1 = _conv3x3_bn_relu(x_ref[...], w1_ref[...], s1_ref[...], b1_ref[...])
    C1 = y1.shape[-1]
    out_refs[0][...] = y1.reshape(1, H, W, C1).astype(out_refs[0].dtype)

    # ---- block "conv2" -------------------------------------------------------
    if depth >= 2:
        x2 = y1.astype(cdtype).reshape(1, H, W, C1)
        y2 = _conv3x3_bn_relu(x2, w2_ref[...], s2_ref[...], b2_ref[...])
        C2 = y2.shape[-1]
        out_refs[1][...] = y2.reshape(1, H, W, C2).astype(out_refs[1].dtype)

    # ---- block "classifier" (1/(H*W) already folded into wl) ----------------
    if depth >= 3:
        pooled = jnp.sum(y2, axis=0, keepdims=True)            # (1, C2) f32
        logits = jnp.dot(pooled.astype(cdtype), wl_ref[...],
                         preferred_element_type=jnp.float32) + bl_ref[...]
        out_refs[2][...] = logits.reshape(1, 1, -1).astype(out_refs[2].dtype)


def _build_fused_call(params, depth, N, H, W, compute_dtype):
    """Build one fused pallas_call computing feature blocks [0, depth)."""
    Cin, C1 = params["w1"].shape[2], params["w1"].shape[3]
    C2 = params["w2"].shape[3]
    F = params["wl"].shape[1]
    const2 = lambda n: (0, 0)

    # --- conv1 params (im2col-reshaped weights, bf16 matmul operands) --------
    inputs = [
        params["w1"].reshape(9 * Cin, C1).astype(compute_dtype),
        params["bn1_scale"].reshape(1, C1).astype(jnp.float32),
        params["bn1_shift"].reshape(1, C1).astype(jnp.float32),
    ]
    in_specs = [
        pl.BlockSpec((1, H, W, Cin), lambda n: (n, 0, 0, 0)),   # x
        pl.BlockSpec((9 * Cin, C1), const2),
        pl.BlockSpec((1, C1), const2),
        pl.BlockSpec((1, C1), const2),
    ]
    out_shape = [jax.ShapeDtypeStruct((N, H, W, C1), jnp.float32)]
    out_specs = [pl.BlockSpec((1, H, W, C1), lambda n: (n, 0, 0, 0))]

    if depth >= 2:
        inputs += [
            params["w2"].reshape(9 * C1, C2).astype(compute_dtype),
            params["bn2_scale"].reshape(1, C2).astype(jnp.float32),
            params["bn2_shift"].reshape(1, C2).astype(jnp.float32),
        ]
        in_specs += [
            pl.BlockSpec((9 * C1, C2), const2),
            pl.BlockSpec((1, C2), const2),
            pl.BlockSpec((1, C2), const2),
        ]
        out_shape.append(jax.ShapeDtypeStruct((N, H, W, C2), jnp.float32))
        out_specs.append(pl.BlockSpec((1, H, W, C2), lambda n: (n, 0, 0, 0)))

    if depth >= 3:
        # Fold the 1/(H*W) mean-pool scale into the linear weight.
        inputs += [
            (params["wl"] * (1.0 / (H * W))).astype(compute_dtype),
            params["bl"].reshape(1, F).astype(jnp.float32),
        ]
        in_specs += [
            pl.BlockSpec((C2, F), const2),
            pl.BlockSpec((1, F), const2),
        ]
        # (N, 1, F) keeps the block's trailing dims equal to full array dims.
        out_shape.append(jax.ShapeDtypeStruct((N, 1, F), jnp.float32))
        out_specs.append(pl.BlockSpec((1, 1, F), lambda n: (n, 0, 0)))

    call = pl.pallas_call(
        functools.partial(_fused_wrn_kernel, depth=depth),
        out_shape=out_shape,
        grid_spec=pltpu.PrefetchScalarGridSpec(
            num_scalar_prefetch=0,
            grid=(N,),
            in_specs=in_specs,
            out_specs=out_specs,
        ),
        compiler_params=pltpu.CompilerParams(
            dimension_semantics=("parallel",),   # batch across v7x's 2 TCs
        ),
    )
    return call, inputs


# -----------------------------------------------------------------------------
# Pure-JAX per-block reference implementations (used by the generic sequential
# forward of the base class; also serve as the numerical reference in __main__).
# -----------------------------------------------------------------------------
def _ref_conv_block(x, w, scale, shift):
    y = jax.lax.conv_general_dilated(
        x, w, window_strides=(1, 1), padding="SAME",
        dimension_numbers=("NHWC", "HWIO", "NHWC"))
    y = y * scale[None, None, None, :] + shift[None, None, None, :]
    return jnp.maximum(y, 0.0)


def _ref_classifier(x, wl, bl):
    return jnp.mean(x, axis=(1, 2)) @ wl + bl


# -----------------------------------------------------------------------------
# SequentialFeatureExtractor (JAX port of the abstract PyTorch class)
# -----------------------------------------------------------------------------
class SequentialFeatureExtractor:
    def __init__(self, all_feat_names, feature_blocks):
        assert isinstance(feature_blocks, list)
        assert isinstance(all_feat_names, list)
        assert len(all_feat_names) == len(feature_blocks)
        self.all_feat_names = all_feat_names
        self._feature_blocks = feature_blocks

    def _parse_out_keys_arg(self, out_feat_keys):
        out_feat_keys = (
            [self.all_feat_names[-1]] if out_feat_keys is None else out_feat_keys
        )
        if len(out_feat_keys) == 0:
            raise ValueError("Empty list of output feature keys.")
        for f, key in enumerate(out_feat_keys):
            if key not in self.all_feat_names:
                raise ValueError(
                    "Feature with name {} does not exist. Existing features: {}.".format(
                        key, self.all_feat_names))
            elif key in out_feat_keys[:f]:
                raise ValueError(f"Duplicate output feature key: {key}.")
        max_out_feat = max(self.all_feat_names.index(key) for key in out_feat_keys)
        return out_feat_keys, max_out_feat

    def forward(self, x, out_feat_keys=None):
        out_feat_keys, max_out_feat = self._parse_out_keys_arg(out_feat_keys)
        out_feats = [None] * len(out_feat_keys)
        feat = x
        for f in range(max_out_feat + 1):
            feat = self._feature_blocks[f](feat)
            key = self.all_feat_names[f]
            if key in out_feat_keys:
                out_feats[out_feat_keys.index(key)] = feat
        out_feats = out_feats[0] if len(out_feats) == 1 else out_feats
        return out_feats

    def __call__(self, *args, **kwargs):
        return self.forward(*args, **kwargs)


class FusedWideResNetExtractor(SequentialFeatureExtractor):
    """Concrete extractor whose forward() runs all requested blocks in a single
    fused Pallas kernel; semantics (keys, ordering, single-vs-list return,
    only running blocks up to max_out_feat) match the abstract class."""

    def __init__(self, params, compute_dtype=jnp.bfloat16):
        blocks = [
            functools.partial(_ref_conv_block, w=params["w1"],
                              scale=params["bn1_scale"], shift=params["bn1_shift"]),
            functools.partial(_ref_conv_block, w=params["w2"],
                              scale=params["bn2_scale"], shift=params["bn2_shift"]),
            functools.partial(_ref_classifier, wl=params["wl"], bl=params["bl"]),
        ]
        super().__init__(["conv1", "conv2", "classifier"], blocks)
        self.params = params
        self.compute_dtype = compute_dtype
        self._fused_cache = {}

    def _fused_features(self, x, depth):
        N, H, W, Cin = x.shape
        key = (depth, N, H, W, Cin)
        if key not in self._fused_cache:
            self._fused_cache[key] = _build_fused_call(
                self.params, depth, N, H, W, self.compute_dtype)
        call, prepped = self._fused_cache[key]
        feats = list(call(x.astype(self.compute_dtype), *prepped))
        if depth >= 3:
            feats[2] = feats[2].reshape(N, -1)   # (N,1,F) -> (N,F)
        return feats

    def forward(self, x, out_feat_keys=None):
        out_feat_keys, max_out_feat = self._parse_out_keys_arg(out_feat_keys)
        feats = self._fused_features(x, depth=max_out_feat + 1)
        by_name = dict(zip(self.all_feat_names[:max_out_feat + 1], feats))
        out_feats = [by_name[k] for k in out_feat_keys]
        return out_feats[0] if len(out_feats) == 1 else out_feats


# -----------------------------------------------------------------------------
# Deterministic parameter setup
# -----------------------------------------------------------------------------
def build_model(key, cin=4, c1=8, c2=8, num_feats=16):
    k1, k2, k3 = jax.random.split(key, 3)
    eps = 1e-5
    params = dict(
        w1=jax.random.normal(k1, (3, 3, cin, c1), jnp.float32) / jnp.sqrt(9.0 * cin),
        w2=jax.random.normal(k2, (3, 3, c1, c2), jnp.float32) / jnp.sqrt(9.0 * c1),
        # BatchNorm eval mode, PyTorch defaults (gamma=1, beta=0, mean=0, var=1).
        bn1_scale=jnp.ones((c1,), jnp.float32) / jnp.sqrt(1.0 + eps),
        bn1_shift=jnp.zeros((c1,), jnp.float32),
        bn2_scale=jnp.ones((c2,), jnp.float32) / jnp.sqrt(1.0 + eps),
        bn2_shift=jnp.zeros((c2,), jnp.float32),
        wl=jax.random.normal(k3, (c2, num_feats), jnp.float32) / jnp.sqrt(c2),
        bl=jnp.zeros((num_feats,), jnp.float32),
    )
    return FusedWideResNetExtractor(params)


if __name__ == "__main__":
    key = jax.random.PRNGKey(0)
    kx, kp = jax.random.split(key)

    # PyTorch-style NCHW input -> NHWC for the TPU kernels (channels on lanes).
    x_nchw = jax.random.normal(kx, (2, 4, 16, 16), jnp.float32)
    x_nhwc = jnp.transpose(x_nchw, (0, 2, 3, 1))

    model = build_model(kp, cin=4, c1=8, c2=8, num_feats=16)

    # Default behaviour: return last feature only ("classifier").
    out_last = jax.block_until_ready(model(x_nhwc))
    assert out_last.shape == (2, 16)

    # Multi-key request: list in the requested order.
    out_multi = jax.block_until_ready(model(x_nhwc, out_feat_keys=["conv1", "classifier"]))
    assert isinstance(out_multi, list) and len(out_multi) == 2
    assert out_multi[0].shape == (2, 16, 16, 8)
    assert out_multi[1].shape == (2, 16)

    # Single intermediate feature: exercises the depth-1 fused kernel
    # (only blocks up to max_out_feat are run).
    out_c1 = jax.block_until_ready(model(x_nhwc, out_feat_keys=["conv1"]))
    assert out_c1.shape == (2, 16, 16, 8)

    # Pure-JAX sequential reference via the base-class forward (f32 end to end).
    ref_last = SequentialFeatureExtractor.forward(model, x_nhwc)
    ref_multi = SequentialFeatureExtractor.forward(
        model, x_nhwc, out_feat_keys=["conv1", "classifier"])

    # bf16 matmul operands (f32 accumulation) -> loose-but-meaningful tolerance.
    assert jnp.allclose(out_last, ref_last, atol=5e-2, rtol=5e-2)
    assert jnp.allclose(out_multi[0], ref_multi[0], atol=5e-2, rtol=5e-2)
    assert jnp.allclose(out_multi[1], ref_multi[1], atol=5e-2, rtol=5e-2)
    assert jnp.allclose(out_c1, ref_multi[0], atol=5e-2, rtol=5e-2)

    print("KERNEL_OK")
</pallas_src>

<mosaic_0001>
module attributes {stable_mosaic.version = 11 : i64} {
  func.func @_fused_wrn_kernel(%arg0: i32, %arg1: memref<1x16x16x4xbf16, #tpu.memory_space<vmem>>, %arg2: memref<36x8xbf16, #tpu.memory_space<vmem>>, %arg3: memref<1x8xf32, #tpu.memory_space<vmem>>, %arg4: memref<1x8xf32, #tpu.memory_space<vmem>>, %arg5: memref<72x8xbf16, #tpu.memory_space<vmem>>, %arg6: memref<1x8xf32, #tpu.memory_space<vmem>>, %arg7: memref<1x8xf32, #tpu.memory_space<vmem>>, %arg8: memref<8x16xbf16, #tpu.memory_space<vmem>>, %arg9: memref<1x16xf32, #tpu.memory_space<vmem>>, %arg10: memref<1x16x16x8xf32, #tpu.memory_space<vmem>>, %arg11: memref<1x16x16x8xf32, #tpu.memory_space<vmem>>, %arg12: memref<1x1x16xf32, #tpu.memory_space<vmem>>) attributes {dimension_semantics = [#tpu.dimension_semantics<parallel>], iteration_bounds = array<i64: 2>, scalar_prefetch = 0 : i64, scratch_operands = 0 : i64, tpu.core_type = #tpu.core_type<tc>, window_params = [{transform_indices = @transform_0, window_bounds = array<i64: 1, 16, 16, 4>}, {pipeline_mode = #tpu.pipeline_mode<synchronous>, transform_indices = @transform_1, window_bounds = array<i64: 36, 8>}, {pipeline_mode = #tpu.pipeline_mode<synchronous>, transform_indices = @transform_2, window_bounds = array<i64: 1, 8>}, {pipeline_mode = #tpu.pipeline_mode<synchronous>, transform_indices = @transform_3, window_bounds = array<i64: 1, 8>}, {pipeline_mode = #tpu.pipeline_mode<synchronous>, transform_indices = @transform_4, window_bounds = array<i64: 72, 8>}, {pipeline_mode = #tpu.pipeline_mode<synchronous>, transform_indices = @transform_5, window_bounds = array<i64: 1, 8>}, {pipeline_mode = #tpu.pipeline_mode<synchronous>, transform_indices = @transform_6, window_bounds = array<i64: 1, 8>}, {pipeline_mode = #tpu.pipeline_mode<synchronous>, transform_indices = @transform_7, window_bounds = array<i64: 8, 16>}, {pipeline_mode = #tpu.pipeline_mode<synchronous>, transform_indices = @transform_8, window_bounds = array<i64: 1, 16>}, {transform_indices = @transform_9, window_bounds = array<i64: 1, 16, 16, 8>}, {transform_indices = @transform_10, window_bounds = array<i64: 1, 16, 16, 8>}, {transform_indices = @transform_11, window_bounds = array<i64: 1, 1, 16>}]} {
    %c0 = arith.constant 0 : index
    %c0_0 = arith.constant 0 : index
    %c0_1 = arith.constant 0 : index
    %c0_2 = arith.constant 0 : index
    %0 = vector.load %arg1[%c0, %c0_0, %c0_1, %c0_2] : memref<1x16x16x4xbf16, #tpu.memory_space<vmem>>, vector<1x16x16x4xbf16>
    %c0_3 = arith.constant 0 : index
    %c0_4 = arith.constant 0 : index
    %1 = vector.load %arg2[%c0_3, %c0_4] : memref<36x8xbf16, #tpu.memory_space<vmem>>, vector<36x8xbf16>
    %c0_5 = arith.constant 0 : index
    %c0_6 = arith.constant 0 : index
    %2 = vector.load %arg3[%c0_5, %c0_6] : memref<1x8xf32, #tpu.memory_space<vmem>>, vector<1x8xf32>
    %c0_7 = arith.constant 0 : index
    %c0_8 = arith.constant 0 : index
    %3 = vector.load %arg4[%c0_7, %c0_8] : memref<1x8xf32, #tpu.memory_space<vmem>>, vector<1x8xf32>
    %cst = arith.constant 0.000000e+00 : bf16
    %4 = vector.broadcast %cst : bf16 to vector<1x1x16x4xbf16>
    %5 = tpu.concatenate %4, %0, %4 in 1 : vector<1x1x16x4xbf16>, vector<1x16x16x4xbf16>, vector<1x1x16x4xbf16> -> vector<1x18x16x4xbf16>
    %cst_9 = arith.constant 0.000000e+00 : bf16
    %6 = vector.broadcast %cst_9 : bf16 to vector<1x18x8x4xbf16>
    %7 = tpu.concatenate %6, %5, %6 in 2 : vector<1x18x8x4xbf16>, vector<1x18x16x4xbf16>, vector<1x18x8x4xbf16> -> vector<1x18x32x4xbf16>
    %8 = vector.extract_strided_slice %7 {offsets = [0, 0, 7, 0], sizes = [1, 16, 16, 4], strides = [1, 1, 1, 1]} : vector<1x18x32x4xbf16> to vector<1x16x16x4xbf16>
    %9 = vector.extract_strided_slice %7 {offsets = [0, 0, 8, 0], sizes = [1, 16, 16, 4], strides = [1, 1, 1, 1]} : vector<1x18x32x4xbf16> to vector<1x16x16x4xbf16>
    %10 = vector.extract_strided_slice %7 {offsets = [0, 0, 9, 0], sizes = [1, 16, 16, 4], strides = [1, 1, 1, 1]} : vector<1x18x32x4xbf16> to vector<1x16x16x4xbf16>
    %11 = vector.extract_strided_slice %7 {offsets = [0, 1, 7, 0], sizes = [1, 16, 16, 4], strides = [1, 1, 1, 1]} : vector<1x18x32x4xbf16> to vector<1x16x16x4xbf16>
    %12 = vector.extract_strided_slice %7 {offsets = [0, 1, 8, 0], sizes = [1, 16, 16, 4], strides = [1, 1, 1, 1]} : vector<1x18x32x4xbf16> to vector<1x16x16x4xbf16>
    %13 = vector.extract_strided_slice %7 {offsets = [0, 1, 9, 0], sizes = [1, 16, 16, 4], strides = [1, 1, 1, 1]} : vector<1x18x32x4xbf16> to vector<1x16x16x4xbf16>
    %14 = vector.extract_strided_slice %7 {offsets = [0, 2, 7, 0], sizes = [1, 16, 16, 4], strides = [1, 1, 1, 1]} : vector<1x18x32x4xbf16> to vector<1x16x16x4xbf16>
    %15 = vector.extract_strided_slice %7 {offsets = [0, 2, 8, 0], sizes = [1, 16, 16, 4], strides = [1, 1, 1, 1]} : vector<1x18x32x4xbf16> to vector<1x16x16x4xbf16>
    %16 = vector.extract_strided_slice %7 {offsets = [0, 2, 9, 0], sizes = [1, 16, 16, 4], strides = [1, 1, 1, 1]} : vector<1x18x32x4xbf16> to vector<1x16x16x4xbf16>
    %17 = tpu.concatenate %8, %9, %10, %11, %12, %13, %14, %15, %16 in 3 : vector<1x16x16x4xbf16>, vector<1x16x16x4xbf16>, vector<1x16x16x4xbf16>, vector<1x16x16x4xbf16>, vector<1x16x16x4xbf16>, vector<1x16x16x4xbf16>, vector<1x16x16x4xbf16>, vector<1x16x16x4xbf16>, vector<1x16x16x4xbf16> -> vector<1x16x16x36xbf16>
    %18 = vector.shape_cast %17 : vector<1x16x16x36xbf16> to vector<256x36xbf16>
    %cst_10 = arith.constant dense<0.000000e+00> : vector<256x8xf32>
    %19 = tpu.matmul %18, %1, %cst_10 {dimension_numbers = #tpu.dot_dimension_numbers<[1], [0], [0], [1], [0, 0, 1, 1], [], []>} : vector<256x36xbf16>, vector<36x8xbf16>, vector<256x8xf32> -> vector<256x8xf32>
    %20 = vector.broadcast %2 : vector<1x8xf32> to vector<256x8xf32>
    %21 = arith.mulf %19, %20 : vector<256x8xf32>
    %22 = vector.broadcast %3 : vector<1x8xf32> to vector<256x8xf32>
    %23 = arith.addf %21, %22 : vector<256x8xf32>
    %cst_11 = arith.constant 0.000000e+00 : f32
    %24 = vector.broadcast %cst_11 : f32 to vector<256x8xf32>
    %25 = arith.maximumf %23, %24 : vector<256x8xf32>
    %26 = vector.shape_cast %25 : vector<256x8xf32> to vector<1x16x16x8xf32>
    %c0_12 = arith.constant 0 : index
    %c0_13 = arith.constant 0 : index
    %c0_14 = arith.constant 0 : index
    %c0_15 = arith.constant 0 : index
    %27 = vector.load %arg10[%c0_12, %c0_13, %c0_14, %c0_15] : memref<1x16x16x8xf32, #tpu.memory_space<vmem>>, vector<1x16x16x8xf32>
    tpu.vector_store %arg10[%c0_12, %c0_13, %c0_14, %c0_15], %26 {strides = array<i32>} : memref<1x16x16x8xf32, #tpu.memory_space<vmem>>, vector<1x16x16x8xf32>,
    %28 = arith.truncf %25 : vector<256x8xf32> to vector<256x8xbf16>
    %29 = vector.shape_cast %28 : vector<256x8xbf16> to vector<1x16x16x8xbf16>
    %c0_16 = arith.constant 0 : index
    %c0_17 = arith.constant 0 : index
    %30 = vector.load %arg5[%c0_16, %c0_17] : memref<72x8xbf16, #tpu.memory_space<vmem>>, vector<72x8xbf16>
    %c0_18 = arith.constant 0 : index
    %c0_19 = arith.constant 0 : index
    %31 = vector.load %arg6[%c0_18, %c0_19] : memref<1x8xf32, #tpu.memory_space<vmem>>, vector<1x8xf32>
    %c0_20 = arith.constant 0 : index
    %c0_21 = arith.constant 0 : index
    %32 = vector.load %arg7[%c0_20, %c0_21] : memref<1x8xf32, #tpu.memory_space<vmem>>, vector<1x8xf32>
    %cst_22 = arith.constant 0.000000e+00 : bf16
    %33 = vector.broadcast %cst_22 : bf16 to vector<1x1x16x8xbf16>
    %34 = tpu.concatenate %33, %29, %33 in 1 : vector<1x1x16x8xbf16>, vector<1x16x16x8xbf16>, vector<1x1x16x8xbf16> -> vector<1x18x16x8xbf16>
    %cst_23 = arith.constant 0.000000e+00 : bf16
    %35 = vector.broadcast %cst_23 : bf16 to vector<1x18x8x8xbf16>
    %36 = tpu.concatenate %35, %34, %35 in 2 : vector<1x18x8x8xbf16>, vector<1x18x16x8xbf16>, vector<1x18x8x8xbf16> -> vector<1x18x32x8xbf16>
    %37 = vector.extract_strided_slice %36 {offsets = [0, 0, 7, 0], sizes = [1, 16, 16, 8], strides = [1, 1, 1, 1]} : vector<1x18x32x8xbf16> to vector<1x16x16x8xbf16>
    %38 = vector.extract_strided_slice %36 {offsets = [0, 0, 8, 0], sizes = [1, 16, 16, 8], strides = [1, 1, 1, 1]} : vector<1x18x32x8xbf16> to vector<1x16x16x8xbf16>
    %39 = vector.extract_strided_slice %36 {offsets = [0, 0, 9, 0], sizes = [1, 16, 16, 8], strides = [1, 1, 1, 1]} : vector<1x18x32x8xbf16> to vector<1x16x16x8xbf16>
    %40 = vector.extract_strided_slice %36 {offsets = [0, 1, 7, 0], sizes = [1, 16, 16, 8], strides = [1, 1, 1, 1]} : vector<1x18x32x8xbf16> to vector<1x16x16x8xbf16>
    %41 = vector.extract_strided_slice %36 {offsets = [0, 1, 8, 0], sizes = [1, 16, 16, 8], strides = [1, 1, 1, 1]} : vector<1x18x32x8xbf16> to vector<1x16x16x8xbf16>
    %42 = vector.extract_strided_slice %36 {offsets = [0, 1, 9, 0], sizes = [1, 16, 16, 8], strides = [1, 1, 1, 1]} : vector<1x18x32x8xbf16> to vector<1x16x16x8xbf16>
    %43 = vector.extract_strided_slice %36 {offsets = [0, 2, 7, 0], sizes = [1, 16, 16, 8], strides = [1, 1, 1, 1]} : vector<1x18x32x8xbf16> to vector<1x16x16x8xbf16>
    %44 = vector.extract_strided_slice %36 {offsets = [0, 2, 8, 0], sizes = [1, 16, 16, 8], strides = [1, 1, 1, 1]} : vector<1x18x32x8xbf16> to vector<1x16x16x8xbf16>
    %45 = vector.extract_strided_slice %36 {offsets = [0, 2, 9, 0], sizes = [1, 16, 16, 8], strides = [1, 1, 1, 1]} : vector<1x18x32x8xbf16> to vector<1x16x16x8xbf16>
    %46 = tpu.concatenate %37, %38, %39, %40, %41, %42, %43, %44, %45 in 3 : vector<1x16x16x8xbf16>, vector<1x16x16x8xbf16>, vector<1x16x16x8xbf16>, vector<1x16x16x8xbf16>, vector<1x16x16x8xbf16>, vector<1x16x16x8xbf16>, vector<1x16x16x8xbf16>, vector<1x16x16x8xbf16>, vector<1x16x16x8xbf16> -> vector<1x16x16x72xbf16>
    %47 = vector.shape_cast %46 : vector<1x16x16x72xbf16> to vector<256x72xbf16>
    %cst_24 = arith.constant dense<0.000000e+00> : vector<256x8xf32>
    %48 = tpu.matmul %47, %30, %cst_24 {dimension_numbers = #tpu.dot_dimension_numbers<[1], [0], [0], [1], [0, 0, 1, 1], [], []>} : vector<256x72xbf16>, vector<72x8xbf16>, vector<256x8xf32> -> vector<256x8xf32>
    %49 = vector.broadcast %31 : vector<1x8xf32> to vector<256x8xf32>
    %50 = arith.mulf %48, %49 : vector<256x8xf32>
    %51 = vector.broadcast %32 : vector<1x8xf32> to vector<256x8xf32>
    %52 = arith.addf %50, %51 : vector<256x8xf32>
    %cst_25 = arith.constant 0.000000e+00 : f32
    %53 = vector.broadcast %cst_25 : f32 to vector<256x8xf32>
    %54 = arith.maximumf %52, %53 : vector<256x8xf32>
    %55 = vector.shape_cast %54 : vector<256x8xf32> to vector<1x16x16x8xf32>
    %c0_26 = arith.constant 0 : index
    %c0_27 = arith.constant 0 : index
    %c0_28 = arith.constant 0 : index
    %c0_29 = arith.constant 0 : index
    %56 = vector.load %arg11[%c0_26, %c0_27, %c0_28, %c0_29] : memref<1x16x16x8xf32, #tpu.memory_space<vmem>>, vector<1x16x16x8xf32>
    tpu.vector_store %arg11[%c0_26, %c0_27, %c0_28, %c0_29], %55 {strides = array<i32>} : memref<1x16x16x8xf32, #tpu.memory_space<vmem>>, vector<1x16x16x8xf32>,
    %cst_30 = arith.constant dense<0.000000e+00> : vector<8xf32>
    %57 = vector.multi_reduction <add>, %54, %cst_30 [0] : vector<256x8xf32> to vector<8xf32>
    %58 = vector.shape_cast %57 : vector<8xf32> to vector<1x8xf32>
    %59 = arith.truncf %58 : vector<1x8xf32> to vector<1x8xbf16>
    %c0_31 = arith.constant 0 : index
    %c0_32 = arith.constant 0 : index
    %60 = vector.load %arg8[%c0_31, %c0_32] : memref<8x16xbf16, #tpu.memory_space<vmem>>, vector<8x16xbf16>
    %cst_33 = arith.constant dense<0.000000e+00> : vector<1x16xf32>
    %61 = tpu.matmul %59, %60, %cst_33 {dimension_numbers = #tpu.dot_dimension_numbers<[1], [0], [0], [1], [0, 0, 1, 1], [], []>} : vector<1x8xbf16>, vector<8x16xbf16>, vector<1x16xf32> -> vector<1x16xf32>
    %c0_34 = arith.constant 0 : index
    %c0_35 = arith.constant 0 : index
    %62 = vector.load %arg9[%c0_34, %c0_35] : memref<1x16xf32, #tpu.memory_space<vmem>>, vector<1x16xf32>
    %63 = arith.addf %61, %62 : vector<1x16xf32>
    %64 = vector.shape_cast %63 : vector<1x16xf32> to vector<1x1x16xf32>
    %c0_36 = arith.constant 0 : index
    %c0_37 = arith.constant 0 : index
    %c0_38 = arith.constant 0 : index
    %65 = vector.load %arg12[%c0_36, %c0_37, %c0_38] : memref<1x1x16xf32, #tpu.memory_space<vmem>>, vector<1x1x16xf32>
    tpu.vector_store %arg12[%c0_36, %c0_37, %c0_38], %64 {strides = array<i32>} : memref<1x1x16xf32, #tpu.memory_space<vmem>>, vector<1x1x16xf32>,
    return
  }
  func.func @transform_0(%arg0: i32) -> (i32, i32, i32, i32) {
    %c0_i32 = arith.constant 0 : i32
    %c0_i32_0 = arith.constant 0 : i32
    %c0_i32_1 = arith.constant 0 : i32
    %c0_i32_2 = arith.constant 0 : i32
    return %arg0, %c0_i32, %c0_i32_0, %c0_i32_1 : i32, i32, i32, i32
  }
  func.func @transform_1(%arg0: i32) -> (i32, i32) {
    %c0_i32 = arith.constant 0 : i32
    %c0_i32_0 = arith.constant 0 : i32
    %c0_i32_1 = arith.constant 0 : i32
    return %c0_i32, %c0_i32_0 : i32, i32
  }
  func.func @transform_2(%arg0: i32) -> (i32, i32) {
    %c0_i32 = arith.constant 0 : i32
    %c0_i32_0 = arith.constant 0 : i32
    %c0_i32_1 = arith.constant 0 : i32
    return %c0_i32, %c0_i32_0 : i32, i32
  }
  func.func @transform_3(%arg0: i32) -> (i32, i32) {
    %c0_i32 = arith.constant 0 : i32
    %c0_i32_0 = arith.constant 0 : i32
    %c0_i32_1 = arith.constant 0 : i32
    return %c0_i32, %c0_i32_0 : i32, i32
  }
  func.func @transform_4(%arg0: i32) -> (i32, i32) {
    %c0_i32 = arith.constant 0 : i32
    %c0_i32_0 = arith.constant 0 : i32
    %c0_i32_1 = arith.constant 0 : i32
    return %c0_i32, %c0_i32_0 : i32, i32
  }
  func.func @transform_5(%arg0: i32) -> (i32, i32) {
    %c0_i32 = arith.constant 0 : i32
    %c0_i32_0 = arith.constant 0 : i32
    %c0_i32_1 = arith.constant 0 : i32
    return %c0_i32, %c0_i32_0 : i32, i32
  }
  func.func @transform_6(%arg0: i32) -> (i32, i32) {
    %c0_i32 = arith.constant 0 : i32
    %c0_i32_0 = arith.constant 0 : i32
    %c0_i32_1 = arith.constant 0 : i32
    return %c0_i32, %c0_i32_0 : i32, i32
  }
  func.func @transform_7(%arg0: i32) -> (i32, i32) {
    %c0_i32 = arith.constant 0 : i32
    %c0_i32_0 = arith.constant 0 : i32
    %c0_i32_1 = arith.constant 0 : i32
    return %c0_i32, %c0_i32_0 : i32, i32
  }
  func.func @transform_8(%arg0: i32) -> (i32, i32) {
    %c0_i32 = arith.constant 0 : i32
    %c0_i32_0 = arith.constant 0 : i32
    %c0_i32_1 = arith.constant 0 : i32
    return %c0_i32, %c0_i32_0 : i32, i32
  }
  func.func @transform_9(%arg0: i32) -> (i32, i32, i32, i32) {
    %c0_i32 = arith.constant 0 : i32
    %c0_i32_0 = arith.constant 0 : i32
    %c0_i32_1 = arith.constant 0 : i32
    %c0_i32_2 = arith.constant 0 : i32
    return %arg0, %c0_i32, %c0_i32_0, %c0_i32_1 : i32, i32, i32, i32
  }
  func.func @transform_10(%arg0: i32) -> (i32, i32, i32, i32) {
    %c0_i32 = arith.constant 0 : i32
    %c0_i32_0 = arith.constant 0 : i32
    %c0_i32_1 = arith.constant 0 : i32
    %c0_i32_2 = arith.constant 0 : i32
    return %arg0, %c0_i32, %c0_i32_0, %c0_i32_1 : i32, i32, i32, i32
  }
  func.func @transform_11(%arg0: i32) -> (i32, i32, i32) {
    %c0_i32 = arith.constant 0 : i32
    %c0_i32_0 = arith.constant 0 : i32
    %c0_i32_1 = arith.constant 0 : i32
    return %arg0, %c0_i32, %c0_i32_0 : i32, i32, i32
  }
}

</mosaic_0001>

<llo_original>
// kernel: tpu_custom_call.1
$region0: #{tpu_custom_call.1}
  #allocation0 [shape = 'u32[]', space=smem, size = 0x4, offset = 0x4, fixed_abs, tag = 'smem constant byte address 0x4 - core index']
  #allocation1 [shape = 'u32[144,128]{1,0:T(1,128)}', space=vmem, size = 0x12000, scoped, tag = 'internal scratch']
  %s0 = inlined_call_operand.vmem [shape: bf16[2,16,16,4], index: 0, kind: input, shape index: {}]
  %s1 = inlined_call_operand.vmem [shape: bf16[36,8], index: 1, kind: input, shape index: {}]
  %s2 = inlined_call_operand.vmem [shape: f32[1,8], index: 2, kind: input, shape index: {}]
  %s3 = inlined_call_operand.vmem [shape: f32[1,8], index: 3, kind: input, shape index: {}]
  %s4 = inlined_call_operand.vmem [shape: bf16[72,8], index: 4, kind: input, shape index: {}]
  %s5 = inlined_call_operand.vmem [shape: f32[1,8], index: 5, kind: input, shape index: {}]
  %s6 = inlined_call_operand.vmem [shape: f32[1,8], index: 6, kind: input, shape index: {}]
  %s7 = inlined_call_operand.vmem [shape: bf16[8,16], index: 7, kind: input, shape index: {}]
  %s8 = inlined_call_operand.vmem [shape: f32[1,16], index: 8, kind: input, shape index: {}]
  %s9 = inlined_call_operand.vmem [shape: f32[2,16,16,8], index: 9, kind: output, shape index: {0}]
  %s10 = inlined_call_operand.vmem [shape: f32[2,16,16,8], index: 10, kind: output, shape index: {1}]
  %s11 = inlined_call_operand.hbm [shape: f32[2,1,16], index: 11, kind: output, shape index: {2}]
  %12 = xla_tuple %s9, %s10, %s11
  %s13 = sld [smem:[#allocation0]]
  $region85: #{tpu_custom_call.1} parent=0
    _
  %s15 = ssub.s32 1, %s13
  %s16 = scalar_select 0, %s15, %s13
  $region1: #{tpu_custom_call.1} parent=0
    #allocation2 [shape = 'u8[1024]{0}', space=vmem, size = 0x400, scoped, tag = 'output window, operand 2']
    #allocation3 [shape = 's32[2]{0}', space=sflag, size = 0x8, scoped, tag = 'scoped memory for tpu_custom_call.1']
    %17 = vsyncpa [#allocation3], 0
    %s18 = scalar_lea.sflag [#allocation3], 1
    %19 = vsyncpa %s18, 0
    loop: start=0, step=1, limit=4
    $region2: #{tpu_custom_call.1} parent=1 // loop_pre_header
      _
    $region3: #{tpu_custom_call.1} parent=1 // loop_header
      %s21 = sphi 0, %s25
      %p22 = scmp.ge.s32.totalorder %s21, 4
      %s31 = sphi 0, %s33
      %s34 = sphi 0, %s31
      %s35 = sphi 0, %s34
      %s51 = sphi 0, %s35
      %s55 = sphi 0, %s55
      %s57 = sphi 0, %s55
      %s58 = sphi 0, %s57
      %s72 = sphi 0, %s58
      %s76 = sphi 0, %s76
      %s78 = sphi 0, %s76
      %s79 = sphi 0, %s78
      %s93 = sphi 0, %s79
      %s97 = sphi 0, %s97
      %s99 = sphi 0, %s97
      %s100 = sphi 0, %s99
      %s114 = sphi 0, %s100
      %s118 = sphi 0, %s118
      %s120 = sphi 0, %s118
      %s121 = sphi 0, %s120
      %s135 = sphi 0, %s121
      %s139 = sphi 0, %s139
      %s141 = sphi 0, %s139
      %s142 = sphi 0, %s141
      %s156 = sphi 0, %s142
      %s160 = sphi 0, %s160
      %s162 = sphi 0, %s160
      %s163 = sphi 0, %s162
      %s177 = sphi 0, %s163
      %s181 = sphi 0, %s181
      %s183 = sphi 0, %s181
      %s184 = sphi 0, %s183
      %s198 = sphi 0, %s184
      %s202 = sphi 0, %s202
      %s204 = sphi 0, %s202
      %s205 = sphi 0, %s204
      %s219 = sphi 0, %s205
      %s225 = sphi 0, %s227
      %s228 = sphi 0, %s225
      %s229 = sphi 0, %s228
      %s245 = sphi 0, %s229
      %s251 = sphi 0, %s253
      %s254 = sphi 0, %s251
      %s255 = sphi 0, %s254
      %s271 = sphi 0, %s255
      %s277 = sphi 0, %s279
      %s280 = sphi 0, %s277
      %s281 = sphi 0, %s280
      %s297 = sphi 0, %s281
    $region4: #{tpu_custom_call.1} parent=1 // loop_header_branch
      %24 = sbr.rel (%p22) target = $region8
    $region5: #{tpu_custom_call.1} parent=1 // loop_body
      %s26 = ssub.s32 %s21, 1
      %s27 = ssub.s32 %s21, 2
      %s28 = sadd.s32 %s21, 1
      %s29 = ssub.s32 %s21, %s28
      %p30 = scmp.eq.s32.totalorder %s29, 0
      %s32 = sadd.s32 %s31, 1
      %s33 = scalar_select %p30, %s31, %s32
      %p36 = pneg %p30
      %p37 = scmp.eq.s32.totalorder %s21, 1
      %p38 = por %p36, %p37
      %p39 = scmp.ne.s32.totalorder %s31, %s34
      %p40 = scmp.eq.s32.totalorder %s21, 0
      %p41 = por %p39, %p40
      %p42 = scmp.ne.s32.totalorder %s31, %s34
      %p43 = scmp.eq.s32.totalorder %s26, 1
      %p44 = por %p42, %p43
      %p45 = scmp.ne.s32.totalorder %s34, %s35
      %p46 = scmp.eq.s32.totalorder %s26, 0
      %p47 = por %p45, %p46
      %p48 = scmp.ne.s32.totalorder %s34, %s35
      %p49 = scmp.eq.s32.totalorder %s27, 1
      %p50 = por %p48, %p49
      %p52 = scmp.ne.s32.totalorder %s35, %s51
      %p53 = scmp.eq.s32.totalorder %s27, 0
      %p54 = por %p52, %p53
      %s56 = sadd.s32 %s55, 1
      %p59 = scmp.eq.s32.totalorder %s21, 1
      %p60 = scmp.ne.s32.totalorder %s55, %s57
      %p61 = scmp.eq.s32.totalorder %s21, 0
      %p62 = por %p60, %p61
      %p63 = scmp.ne.s32.totalorder %s55, %s57
      %p64 = scmp.eq.s32.totalorder %s26, 1
      %p65 = por %p63, %p64
      %p66 = scmp.ne.s32.totalorder %s57, %s58
      %p67 = scmp.eq.s32.totalorder %s26, 0
      %p68 = por %p66, %p67
      %p69 = scmp.ne.s32.totalorder %s57, %s58
      %p70 = scmp.eq.s32.totalorder %s27, 1
      %p71 = por %p69, %p70
      %p73 = scmp.ne.s32.totalorder %s58, %s72
      %p74 = scmp.eq.s32.totalorder %s27, 0
      %p75 = por %p73, %p74
      %s77 = sadd.s32 %s76, 1
      %p80 = scmp.eq.s32.totalorder %s21, 1
      %p81 = scmp.ne.s32.totalorder %s76, %s78
      %p82 = scmp.eq.s32.totalorder %s21, 0
      %p83 = por %p81, %p82
      %p84 = scmp.ne.s32.totalorder %s76, %s78
      %p85 = scmp.eq.s32.totalorder %s26, 1
      %p86 = por %p84, %p85
      %p87 = scmp.ne.s32.totalorder %s78, %s79
      %p88 = scmp.eq.s32.totalorder %s26, 0
      %p89 = por %p87, %p88
      %p90 = scmp.ne.s32.totalorder %s78, %s79
      %p91 = scmp.eq.s32.totalorder %s27, 1
      %p92 = por %p90, %p91
      %p94 = scmp.ne.s32.totalorder %s79, %s93
      %p95 = scmp.eq.s32.totalorder %s27, 0
      %p96 = por %p94, %p95
      %s98 = sadd.s32 %s97, 1
      %p101 = scmp.eq.s32.totalorder %s21, 1
      %p102 = scmp.ne.s32.totalorder %s97, %s99
      %p103 = scmp.eq.s32.totalorder %s21, 0
      %p104 = por %p102, %p103
      %p105 = scmp.ne.s32.totalorder %s97, %s99
      %p106 = scmp.eq.s32.totalorder %s26, 1
      %p107 = por %p105, %p106
      %p108 = scmp.ne.s32.totalorder %s99, %s100
      %p109 = scmp.eq.s32.totalorder %s26, 0
      %p110 = por %p108, %p109
      %p111 = scmp.ne.s32.totalorder %s99, %s100
      %p112 = scmp.eq.s32.totalorder %s27, 1
      %p113 = por %p111, %p112
      %p115 = scmp.ne.s32.totalorder %s100, %s114
      %p116 = scmp.eq.s32.totalorder %s27, 0
      %p117 = por %p115, %p116
      %s119 = sadd.s32 %s118, 1
      %p122 = scmp.eq.s32.totalorder %s21, 1
      %p123 = scmp.ne.s32.totalorder %s118, %s120
      %p124 = scmp.eq.s32.totalorder %s21, 0
      %p125 = por %p123, %p124
      %p126 = scmp.ne.s32.totalorder %s118, %s120
      %p127 = scmp.eq.s32.totalorder %s26, 1
      %p128 = por %p126, %p127
      %p129 = scmp.ne.s32.totalorder %s120, %s121
      %p130 = scmp.eq.s32.totalorder %s26, 0
      %p131 = por %p129, %p130
      %p132 = scmp.ne.s32.totalorder %s120, %s121
      %p133 = scmp.eq.s32.totalorder %s27, 1
      %p134 = por %p132, %p133
      %p136 = scmp.ne.s32.totalorder %s121, %s135
      %p137 = scmp.eq.s32.totalorder %s27, 0
      %p138 = por %p136, %p137
      %s140 = sadd.s32 %s139, 1
      %p143 = scmp.eq.s32.totalorder %s21, 1
      %p144 = scmp.ne.s32.totalorder %s139, %s141
      %p145 = scmp.eq.s32.totalorder %s21, 0
      %p146 = por %p144, %p145
      %p147 = scmp.ne.s32.totalorder %s139, %s141
      %p148 = scmp.eq.s32.totalorder %s26, 1
      %p149 = por %p147, %p148
      %p150 = scmp.ne.s32.totalorder %s141, %s142
      %p151 = scmp.eq.s32.totalorder %s26, 0
      %p152 = por %p150, %p151
      %p153 = scmp.ne.s32.totalorder %s141, %s142
      %p154 = scmp.eq.s32.totalorder %s27, 1
      %p155 = por %p153, %p154
      %p157 = scmp.ne.s32.totalorder %s142, %s156
      %p158 = scmp.eq.s32.totalorder %s27, 0
      %p159 = por %p157, %p158
      %s161 = sadd.s32 %s160, 1
      %p164 = scmp.eq.s32.totalorder %s21, 1
      %p165 = scmp.ne.s32.totalorder %s160, %s162
      %p166 = scmp.eq.s32.totalorder %s21, 0
      %p167 = por %p165, %p166
      %p168 = scmp.ne.s32.totalorder %s160, %s162
      %p169 = scmp.eq.s32.totalorder %s26, 1
      %p170 = por %p168, %p169
      %p171 = scmp.ne.s32.totalorder %s162, %s163
      %p172 = scmp.eq.s32.totalorder %s26, 0
      %p173 = por %p171, %p172
      %p174 = scmp.ne.s32.totalorder %s162, %s163
      %p175 = scmp.eq.s32.totalorder %s27, 1
      %p176 = por %p174, %p175
      %p178 = scmp.ne.s32.totalorder %s163, %s177
      %p179 = scmp.eq.s32.totalorder %s27, 0
      %p180 = por %p178, %p179
      %s182 = sadd.s32 %s181, 1
      %p185 = scmp.eq.s32.totalorder %s21, 1
      %p186 = scmp.ne.s32.totalorder %s181, %s183
      %p187 = scmp.eq.s32.totalorder %s21, 0
      %p188 = por %p186, %p187
      %p189 = scmp.ne.s32.totalorder %s181, %s183
      %p190 = scmp.eq.s32.totalorder %s26, 1
      %p191 = por %p189, %p190
      %p192 = scmp.ne.s32.totalorder %s183, %s184
      %p193 = scmp.eq.s32.totalorder %s26, 0
      %p194 = por %p192, %p193
      %p195 = scmp.ne.s32.totalorder %s183, %s184
      %p196 = scmp.eq.s32.totalorder %s27, 1
      %p197 = por %p195, %p196
      %p199 = scmp.ne.s32.totalorder %s184, %s198
      %p200 = scmp.eq.s32.totalorder %s27, 0
      %p201 = por %p199, %p200
      %s203 = sadd.s32 %s202, 1
      %p206 = scmp.eq.s32.totalorder %s21, 1
      %p207 = scmp.ne.s32.totalorder %s202, %s204
      %p208 = scmp.eq.s32.totalorder %s21, 0
      %p209 = por %p207, %p208
      %p210 = scmp.ne.s32.totalorder %s202, %s204
      %p211 = scmp.eq.s32.totalorder %s26, 1
      %p212 = por %p210, %p211
      %p213 = scmp.ne.s32.totalorder %s204, %s205
      %p214 = scmp.eq.s32.totalorder %s26, 0
      %p215 = por %p213, %p214
      %p216 = scmp.ne.s32.totalorder %s204, %s205
      %p217 = scmp.eq.s32.totalorder %s27, 1
      %p218 = por %p216, %p217
      %p220 = scmp.ne.s32.totalorder %s205, %s219
      %p221 = scmp.eq.s32.totalorder %s27, 0
      %p222 = por %p220, %p221
      %s223 = ssub.s32 %s21, %s28
      %p224 = scmp.eq.s32.totalorder %s223, 0
      %s226 = sadd.s32 %s225, 1
      %s227 = scalar_select %p224, %s225, %s226
      %p230 = pneg %p224
      %p231 = scmp.eq.s32.totalorder %s21, 1
      %p232 = por %p230, %p231
      %p233 = scmp.ne.s32.totalorder %s225, %s228
      %p234 = scmp.eq.s32.totalorder %s21, 0
      %p235 = por %p233, %p234
      %p236 = scmp.ne.s32.totalorder %s225, %s228
      %p237 = scmp.eq.s32.totalorder %s26, 1
      %p238 = por %p236, %p237
      %p239 = scmp.ne.s32.totalorder %s228, %s229
      %p240 = scmp.eq.s32.totalorder %s26, 0
      %p241 = por %p239, %p240
      %p242 = scmp.ne.s32.totalorder %s228, %s229
      %p243 = scmp.eq.s32.totalorder %s27, 1
      %p244 = por %p242, %p243
      %p246 = scmp.ne.s32.totalorder %s229, %s245
      %p247 = scmp.eq.s32.totalorder %s27, 0
      %p248 = por %p246, %p247
      %s249 = ssub.s32 %s21, %s28
      %p250 = scmp.eq.s32.totalorder %s249, 0
      %s252 = sadd.s32 %s251, 1
      %s253 = scalar_select %p250, %s251, %s252
      %p256 = pneg %p250
      %p257 = scmp.eq.s32.totalorder %s21, 1
      %p258 = por %p256, %p257
      %p259 = scmp.ne.s32.totalorder %s251, %s254
      %p260 = scmp.eq.s32.totalorder %s21, 0
      %p261 = por %p259, %p260
      %p262 = scmp.ne.s32.totalorder %s251, %s254
      %p263 = scmp.eq.s32.totalorder %s26, 1
      %p264 = por %p262, %p263
      %p265 = scmp.ne.s32.totalorder %s254, %s255
      %p266 = scmp.eq.s32.totalorder %s26, 0
      %p267 = por %p265, %p266
      %p268 = scmp.ne.s32.totalorder %s254, %s255
      %p269 = scmp.eq.s32.totalorder %s27, 1
      %p270 = por %p268, %p269
      %p272 = scmp.ne.s32.totalorder %s255, %s271
      %p273 = scmp.eq.s32.totalorder %s27, 0
      %p274 = por %p272, %p273
      %s275 = ssub.s32 %s21, %s28
      %p276 = scmp.eq.s32.totalorder %s275, 0
      %s278 = sadd.s32 %s277, 1
      %s279 = scalar_select %p276, %s277, %s278
      %p282 = pneg %p276
      %p283 = scmp.eq.s32.totalorder %s21, 1
      %p284 = por %p282, %p283
      %p285 = scmp.ne.s32.totalorder %s277, %s280
      %p286 = scmp.eq.s32.totalorder %s21, 0
      %p287 = por %p285, %p286
      %p288 = scmp.ne.s32.totalorder %s277, %s280
      %p289 = scmp.eq.s32.totalorder %s26, 1
      %p290 = por %p288, %p289
      %p291 = scmp.ne.s32.totalorder %s280, %s281
      %p292 = scmp.eq.s32.totalorder %s26, 0
      %p293 = por %p291, %p292
      %p294 = scmp.ne.s32.totalorder %s280, %s281
      %p295 = scmp.eq.s32.totalorder %s27, 1
      %p296 = por %p294, %p295
      %p298 = scmp.ne.s32.totalorder %s281, %s297
      %p299 = scmp.eq.s32.totalorder %s27, 0
      %p300 = por %p298, %p299
      %p301 = scmp.le.s32.totalorder 1, %s21
      %p302 = scmp.lt.s32.totalorder %s21, 3
      %p303 = pnand %p301, %p302
      %p304 = pneg %p303
      // Predicated region
      $region9: #{tpu_custom_call.1} parent=5 // pred_check
        _
      $region10: #{tpu_custom_call.1} parent=5 // pred_check_branch
        %306 = sbr.rel (%p303) target = $region12
      $region11: #{tpu_custom_call.1} parent=5 // pred_region
        %s307 = ssub.s32 %s21, 1
        // Predicated region
        $region13: #{tpu_custom_call.1} parent=11 // pred_check
          %p308 = pneg %p68
        $region14: #{tpu_custom_call.1} parent=11 // pred_check_branch
          %310 = sbr.rel (%p308) target = $region16
        $region15: #{tpu_custom_call.1} parent=11 // pred_region
          _
        $region16: #{tpu_custom_call.1} parent=11 // pred_fallthru
          _
        // Predicated region
        $region17: #{tpu_custom_call.1} parent=11 // pred_check
          %p311 = pneg %p89
        $region18: #{tpu_custom_call.1} parent=11 // pred_check_branch
          %313 = sbr.rel (%p311) target = $region20
        $region19: #{tpu_custom_call.1} parent=11 // pred_region
          _
        $region20: #{tpu_custom_call.1} parent=11 // pred_fallthru
          _
        // Predicated region
        $region21: #{tpu_custom_call.1} parent=11 // pred_check
          %p314 = pneg %p110
        $region22: #{tpu_custom_call.1} parent=11 // pred_check_branch
          %316 = sbr.rel (%p314) target = $region24
        $region23: #{tpu_custom_call.1} parent=11 // pred_region
          _
        $region24: #{tpu_custom_call.1} parent=11 // pred_fallthru
          _
        // Predicated region
        $region25: #{tpu_custom_call.1} parent=11 // pred_check
          %p317 = pneg %p131
        $region26: #{tpu_custom_call.1} parent=11 // pred_check_branch
          %319 = sbr.rel (%p317) target = $region28
        $region27: #{tpu_custom_call.1} parent=11 // pred_region
          _
        $region28: #{tpu_custom_call.1} parent=11 // pred_fallthru
          _
        // Predicated region
        $region29: #{tpu_custom_call.1} parent=11 // pred_check
          %p320 = pneg %p152
        $region30: #{tpu_custom_call.1} parent=11 // pred_check_branch
          %322 = sbr.rel (%p320) target = $region32
        $region31: #{tpu_custom_call.1} parent=11 // pred_region
          _
        $region32: #{tpu_custom_call.1} parent=11 // pred_fallthru
          _
        // Predicated region
        $region33: #{tpu_custom_call.1} parent=11 // pred_check
          %p323 = pneg %p173
        $region34: #{tpu_custom_call.1} parent=11 // pred_check_branch
          %325 = sbr.rel (%p323) target = $region36
        $region35: #{tpu_custom_call.1} parent=11 // pred_region
          _
        $region36: #{tpu_custom_call.1} parent=11 // pred_fallthru
          _
        // Predicated region
        $region37: #{tpu_custom_call.1} parent=11 // pred_check
          %p326 = pneg %p194
        $region38: #{tpu_custom_call.1} parent=11 // pred_check_branch
          %328 = sbr.rel (%p326) target = $region40
        $region39: #{tpu_custom_call.1} parent=11 // pred_region
          _
        $region40: #{tpu_custom_call.1} parent=11 // pred_fallthru
          _
        // Predicated region
        $region41: #{tpu_custom_call.1} parent=11 // pred_check
          %p329 = pneg %p215
        $region42: #{tpu_custom_call.1} parent=11 // pred_check_branch
          %331 = sbr.rel (%p329) target = $region44
        $region43: #{tpu_custom_call.1} parent=11 // pred_region
          _
        $region44: #{tpu_custom_call.1} parent=11 // pred_fallthru
          _
      $region12: #{tpu_custom_call.1} parent=5 // pred_fallthru
        _
      %p332 = scmp.lt.s32.totalorder %s21, 2
      // Predicated region
      $region45: #{tpu_custom_call.1} parent=5 // pred_check
        %p333 = pneg %p332
      $region46: #{tpu_custom_call.1} parent=5 // pred_check_branch
        %335 = sbr.rel (%p333) target = $region48
      $region47: #{tpu_custom_call.1} parent=5 // pred_region
        // Predicated region
        $region49: #{tpu_custom_call.1} parent=47 // pred_check
          %p336 = pneg %p41
        $region50: #{tpu_custom_call.1} parent=47 // pred_check_branch
          %338 = sbr.rel (%p336) target = $region52
        $region51: #{tpu_custom_call.1} parent=47 // pred_region
          %p339 = scmp.lt.s32.totalorder %s21, 1
          %s340 = scalar_select %p339, %s21, 1
          %s341 = smul.addr %s340, 32
          %s342 = smul.addr %s341, 4
          %s343 = scalar_lea.vmem %s0, %s342
        $region52: #{tpu_custom_call.1} parent=47 // pred_fallthru
          _
      $region48: #{tpu_custom_call.1} parent=5 // pred_fallthru
        _
      %p344 = scmp.le.s32.totalorder 1, %s21
      %p345 = scmp.lt.s32.totalorder %s21, 3
      %p346 = pnand %p344, %p345
      %p347 = pneg %p346
      // Predicated region
      $region53: #{tpu_custom_call.1} parent=5 // pred_check
        _
      $region54: #{tpu_custom_call.1} parent=5 // pred_check_branch
        %349 = sbr.rel (%p346) target = $region56
      $region55: #{tpu_custom_call.1} parent=5 // pred_region
        %s350 = ssub.s32 %s21, 1
        %p351 = scmp.lt.s32.totalorder %s26, 1
        %s352 = scalar_select %p351, %s26, 1
        %s353 = smul.addr %s352, 32
        %s354 = smul.addr %s353, 4
        %s355 = scalar_lea.vmem %s0, %s354
        %p356 = pneg %p47
        %p357 = pneg %p44
        %p358 = pneg %p68
        %p359 = pneg %p65
        %p360 = pneg %p89
        %p361 = pneg %p86
        %p362 = pneg %p110
        %p363 = pneg %p107
        %p364 = pneg %p131
        %p365 = pneg %p128
        %p366 = pneg %p152
        %p367 = pneg %p149
        %p368 = pneg %p173
        %p369 = pneg %p170
        %p370 = pneg %p194
        %p371 = pneg %p191
        %p372 = pneg %p215
        %p373 = pneg %p212
        %p374 = pneg %p241
        %p375 = pneg %p238
        %p376 = scmp.lt.s32.totalorder %s26, 1
        %s377 = scalar_select %p376, %s26, 1
        %s378 = smul.addr %s377, 32
        %s379 = smul.addr %s378, 8
        %s380 = scalar_lea.vmem %s9, %s379
        %p381 = pneg %p267
        %p382 = pneg %p264
        %p383 = scmp.lt.s32.totalorder %s26, 1
        %s384 = scalar_select %p383, %s26, 1
        %s385 = smul.addr %s384, 32
        %s386 = smul.addr %s385, 8
        %s387 = scalar_lea.vmem %s10, %s386
        %p388 = pneg %p293
        %p389 = pneg %p290
        %s390 = sand.u32 %s280, 1
        %s391 = scalar_lea.sflag [#allocation3], %s390
        %s392 = sand.u32 %s280, 1
        %s393 = scalar_lea.vmem [#allocation2], %s392
        %p394 = scmp.lt.s32.totalorder %s26, 1
        %s395 = scalar_select %p394, %s26, 1
        %s396 = smul.addr %s395, 32
        %s397 = smul.addr %s396, 4
        %s398 = scalar_lea.vmem %s0, %s397
        %p399 = scmp.lt.s32.totalorder %s26, 1
        %s400 = scalar_select %p399, %s26, 1
        %s401 = smul.addr %s400, 32
        %s402 = smul.addr %s401, 8
        %s403 = scalar_lea.vmem %s9, %s402
        %p404 = scmp.lt.s32.totalorder %s26, 1
        %s405 = scalar_select %p404, %s26, 1
        %s406 = smul.addr %s405, 32
        %s407 = smul.addr %s406, 8
        %s408 = scalar_lea.vmem %s10, %s407
        %v410 = vld [vmem:[%s398] sm:$0xf]
        %v411 = vld [vmem:[%s398 + $0x4] sm:$0xf]
        %v412 = vld [vmem:[%s398 + $0x8] sm:$0xf]
        %v413 = vld [vmem:[%s398 + $0xc] sm:$0xf]
        %v414 = vld [vmem:[%s398 + $0x10] sm:$0xf]
        %v415 = vld [vmem:[%s398 + $0x14] sm:$0xf]
        %v416 = vld [vmem:[%s398 + $0x18] sm:$0xf]
        %v417 = vld [vmem:[%s398 + $0x1c] sm:$0xf]
        %v418 = vld [vmem:[%s398 + $0x20] sm:$0xf]
        %v419 = vld [vmem:[%s398 + $0x24] sm:$0xf]
        %v420 = vld [vmem:[%s398 + $0x28] sm:$0xf]
        %v421 = vld [vmem:[%s398 + $0x2c] sm:$0xf]
        %v422 = vld [vmem:[%s398 + $0x30] sm:$0xf]
        %v423 = vld [vmem:[%s398 + $0x34] sm:$0xf]
        %v424 = vld [vmem:[%s398 + $0x38] sm:$0xf]
        %v425 = vld [vmem:[%s398 + $0x3c] sm:$0xf]
        %v426 = vld [vmem:[%s398 + $0x40] sm:$0xf]
        %v427 = vld [vmem:[%s398 + $0x44] sm:$0xf]
        %v428 = vld [vmem:[%s398 + $0x48] sm:$0xf]
        %v429 = vld [vmem:[%s398 + $0x4c] sm:$0xf]
        %v430 = vld [vmem:[%s398 + $0x50] sm:$0xf]
        %v431 = vld [vmem:[%s398 + $0x54] sm:$0xf]
        %v432 = vld [vmem:[%s398 + $0x58] sm:$0xf]
        %v433 = vld [vmem:[%s398 + $0x5c] sm:$0xf]
        %v434 = vld [vmem:[%s398 + $0x60] sm:$0xf]
        %v435 = vld [vmem:[%s398 + $0x64] sm:$0xf]
        %v436 = vld [vmem:[%s398 + $0x68] sm:$0xf]
        %v437 = vld [vmem:[%s398 + $0x6c] sm:$0xf]
        %v438 = vld [vmem:[%s398 + $0x70] sm:$0xf]
        %v439 = vld [vmem:[%s398 + $0x74] sm:$0xf]
        %v440 = vld [vmem:[%s398 + $0x78] sm:$0xf]
        %v441 = vld [vmem:[%s398 + $0x7c] sm:$0xf]
        %v442 = vld [vmem:[%s1] sm:$0xf]
        %v443 = vld [vmem:[%s1 + $0x4] sm:$0xf]
        %v444 = vld [vmem:[%s1 + $0x8] sm:$0xf]
        %v445 = vld [vmem:[%s1 + $0xc] sm:$0xf]
        %v446 = vld [vmem:[%s1 + $0x10] sm:$0x3]
        %v447 = vld [vmem:[%s2] sm:$0x1]
        %v448 = vld [vmem:[%s3] sm:$0x1]
        %v481 = vunpack.c.l.b16 %v410
        %v482 = vunpack.c.l.b16 %v411
        %v483 = vunpack.c.l.b16 %v412
        %v484 = vunpack.c.l.b16 %v413
        %v485 = vunpack.c.l.b16 %v414
        %v486 = vunpack.c.l.b16 %v415
        %v487 = vunpack.c.l.b16 %v416
        %v488 = vunpack.c.l.b16 %v417
        %v489 = vunpack.c.l.b16 %v418
        %v490 = vunpack.c.l.b16 %v419
        %v491 = vunpack.c.l.b16 %v420
        %v492 = vunpack.c.l.b16 %v421
        %v493 = vunpack.c.l.b16 %v422
        %v494 = vunpack.c.l.b16 %v423
        %v495 = vunpack.c.l.b16 %v424
        %v496 = vunpack.c.l.b16 %v425
        %v497 = vunpack.c.l.b16 %v426
        %v498 = vunpack.c.l.b16 %v427
        %v499 = vunpack.c.l.b16 %v428
        %v500 = vunpack.c.l.b16 %v429
        %v501 = vunpack.c.l.b16 %v430
        %v502 = vunpack.c.l.b16 %v431
        %v503 = vunpack.c.l.b16 %v432
        %v504 = vunpack.c.l.b16 %v433
        %v505 = vunpack.c.l.b16 %v434
        %v506 = vunpack.c.l.b16 %v435
        %v507 = vunpack.c.l.b16 %v436
        %v508 = vunpack.c.l.b16 %v437
        %v509 = vunpack.c.l.b16 %v438
        %v510 = vunpack.c.l.b16 %v439
        %v511 = vunpack.c.l.b16 %v440
        %v512 = vunpack.c.l.b16 %v441
        %v513 = vpack.c.b16 %v482, %v481
        %v514 = vpack.c.b16 %v484, %v483
        %v515 = vpack.c.b16 %v486, %v485
        %v516 = vpack.c.b16 %v488, %v487
        %v517 = vpack.c.b16 %v490, %v489
        %v518 = vpack.c.b16 %v492, %v491
        %v519 = vpack.c.b16 %v494, %v493
        %v520 = vpack.c.b16 %v496, %v495
        %v521 = vpack.c.b16 %v498, %v497
        %v522 = vpack.c.b16 %v500, %v499
        %v523 = vpack.c.b16 %v502, %v501
        %v524 = vpack.c.b16 %v504, %v503
        %v525 = vpack.c.b16 %v506, %v505
        %v526 = vpack.c.b16 %v508, %v507
        %v527 = vpack.c.b16 %v510, %v509
        %v528 = vpack.c.b16 %v512, %v511
        %v530 = vrot.slane 0, 4
        %v531 = vrot.slane %v513, 4
        %v532 = vrot.slane %v514, 4
        %v533 = vrot.slane %v515, 4
        %v534 = vrot.slane %v516, 4
        %v535 = vrot.slane %v517, 4
        %v536 = vrot.slane %v518, 4
        %v537 = vrot.slane %v519, 4
        %v538 = vrot.slane %v520, 4
        %v539 = vrot.slane %v521, 4
        %v540 = vrot.slane %v522, 4
        %v541 = vrot.slane %v523, 4
        %v542 = vrot.slane %v524, 4
        %v543 = vrot.slane %v525, 4
        %v544 = vrot.slane %v526, 4
        %v545 = vrot.slane %v527, 4
        %v546 = vrot.slane %v528, 4
        %vm547 = vcmask 1043456
        %v550 = vsel %vm547, 0, %v530
        %v552 = vsel %vm547, 0, %v531
        %v554 = vsel %vm547, 0, %v532
        %v556 = vsel %vm547, 0, %v533
        %v558 = vsel %vm547, 0, %v534
        %v560 = vsel %vm547, 0, %v535
        %v562 = vsel %vm547, 0, %v536
        %v564 = vsel %vm547, 0, %v537
        %v566 = vsel %vm547, 0, %v538
        %v568 = vsel %vm547, 0, %v539
        %v570 = vsel %vm547, 0, %v540
        %v572 = vsel %vm547, 0, %v541
        %v574 = vsel %vm547, 0, %v542
        %v576 = vsel %vm547, 0, %v543
        %v578 = vsel %vm547, 0, %v544
        %v580 = vsel %vm547, 0, %v545
        %v582 = vsel %vm547, 0, %v546
        %v583 = vsel %vm547, %v530, 0
        %v584 = vsel %vm547, %v531, 0
        %v585 = vsel %vm547, %v532, 0
        %v586 = vsel %vm547, %v533, 0
        %v587 = vsel %vm547, %v534, 0
        %v588 = vsel %vm547, %v535, 0
        %v589 = vsel %vm547, %v536, 0
        %v590 = vsel %vm547, %v537, 0
        %v591 = vsel %vm547, %v538, 0
        %v592 = vsel %vm547, %v539, 0
        %v593 = vsel %vm547, %v540, 0
        %v594 = vsel %vm547, %v541, 0
        %v595 = vsel %vm547, %v542, 0
        %v596 = vsel %vm547, %v543, 0
        %v597 = vsel %vm547, %v544, 0
        %v598 = vsel %vm547, %v545, 0
        %v599 = vsel %vm547, %v546, 0
        %vm600 = vsmask.f32 7424
        %v601 = vshrl.u32 %v550, 16
        %v603 = vshll.u32 %v550, 16
        %v605 = vrot.slane %v603, 1
        %v606 = vor.u32 %v601, %v605
        %v607 = vshll.u32 %v583, 16
        %v609 = vrot.slane %v607, 1
        %v610 = vsel %vm600, %v606, %v609
        %v611 = vshrl.u32 %v583, 16
        %v613 = vor.u32 %v611, %v609
        %v614 = vshrl.u32 %v552, 16
        %v616 = vshll.u32 %v552, 16
        %v618 = vrot.slane %v616, 1
        %v619 = vor.u32 %v614, %v618
        %v620 = vshll.u32 %v584, 16
        %v622 = vrot.slane %v620, 1
        %v623 = vsel %vm600, %v619, %v622
        %v624 = vshrl.u32 %v584, 16
        %v626 = vor.u32 %v624, %v622
        %v627 = vshrl.u32 %v554, 16
        %v629 = vshll.u32 %v554, 16
        %v631 = vrot.slane %v629, 1
        %v632 = vor.u32 %v627, %v631
        %v633 = vshll.u32 %v585, 16
        %v635 = vrot.slane %v633, 1
        %v636 = vsel %vm600, %v632, %v635
        %v637 = vshrl.u32 %v585, 16
        %v639 = vor.u32 %v637, %v635
        %v640 = vshrl.u32 %v556, 16
        %v642 = vshll.u32 %v556, 16
        %v644 = vrot.slane %v642, 1
        %v645 = vor.u32 %v640, %v644
        %v646 = vshll.u32 %v586, 16
        %v648 = vrot.slane %v646, 1
        %v649 = vsel %vm600, %v645, %v648
        %v650 = vshrl.u32 %v586, 16
        %v652 = vor.u32 %v650, %v648
        %v653 = vshrl.u32 %v558, 16
        %v655 = vshll.u32 %v558, 16
        %v657 = vrot.slane %v655, 1
        %v658 = vor.u32 %v653, %v657
        %v659 = vshll.u32 %v587, 16
        %v661 = vrot.slane %v659, 1
        %v662 = vsel %vm600, %v658, %v661
        %v663 = vshrl.u32 %v587, 16
        %v665 = vor.u32 %v663, %v661
        %v666 = vshrl.u32 %v560, 16
        %v668 = vshll.u32 %v560, 16
        %v670 = vrot.slane %v668, 1
        %v671 = vor.u32 %v666, %v670
        %v672 = vshll.u32 %v588, 16
        %v674 = vrot.slane %v672, 1
        %v675 = vsel %vm600, %v671, %v674
        %v676 = vshrl.u32 %v588, 16
        %v678 = vor.u32 %v676, %v674
        %v679 = vshrl.u32 %v562, 16
        %v681 = vshll.u32 %v562, 16
        %v683 = vrot.slane %v681, 1
        %v684 = vor.u32 %v679, %v683
        %v685 = vshll.u32 %v589, 16
        %v687 = vrot.slane %v685, 1
        %v688 = vsel %vm600, %v684, %v687
        %v689 = vshrl.u32 %v589, 16
        %v691 = vor.u32 %v689, %v687
        %v692 = vshrl.u32 %v564, 16
        %v694 = vshll.u32 %v564, 16
        %v696 = vrot.slane %v694, 1
        %v697 = vor.u32 %v692, %v696
        %v698 = vshll.u32 %v590, 16
        %v700 = vrot.slane %v698, 1
        %v701 = vsel %vm600, %v697, %v700
        %v702 = vshrl.u32 %v590, 16
        %v704 = vor.u32 %v702, %v700
        %v705 = vshrl.u32 %v566, 16
        %v707 = vshll.u32 %v566, 16
        %v709 = vrot.slane %v707, 1
        %v710 = vor.u32 %v705, %v709
        %v711 = vshll.u32 %v591, 16
        %v713 = vrot.slane %v711, 1
        %v714 = vsel %vm600, %v710, %v713
        %v715 = vshrl.u32 %v591, 16
        %v717 = vor.u32 %v715, %v713
        %v718 = vshrl.u32 %v568, 16
        %v720 = vshll.u32 %v568, 16
        %v722 = vrot.slane %v720, 1
        %v723 = vor.u32 %v718, %v722
        %v724 = vshll.u32 %v592, 16
        %v726 = vrot.slane %v724, 1
        %v727 = vsel %vm600, %v723, %v726
        %v728 = vshrl.u32 %v592, 16
        %v730 = vor.u32 %v728, %v726
        %v731 = vshrl.u32 %v570, 16
        %v733 = vshll.u32 %v570, 16
        %v735 = vrot.slane %v733, 1
        %v736 = vor.u32 %v731, %v735
        %v737 = vshll.u32 %v593, 16
        %v739 = vrot.slane %v737, 1
        %v740 = vsel %vm600, %v736, %v739
        %v741 = vshrl.u32 %v593, 16
        %v743 = vor.u32 %v741, %v739
        %v744 = vshrl.u32 %v572, 16
        %v746 = vshll.u32 %v572, 16
        %v748 = vrot.slane %v746, 1
        %v749 = vor.u32 %v744, %v748
        %v750 = vshll.u32 %v594, 16
        %v752 = vrot.slane %v750, 1
        %v753 = vsel %vm600, %v749, %v752
        %v754 = vshrl.u32 %v594, 16
        %v756 = vor.u32 %v754, %v752
        %v757 = vshrl.u32 %v574, 16
        %v759 = vshll.u32 %v574, 16
        %v761 = vrot.slane %v759, 1
        %v762 = vor.u32 %v757, %v761
        %v763 = vshll.u32 %v595, 16
        %v765 = vrot.slane %v763, 1
        %v766 = vsel %vm600, %v762, %v765
        %v767 = vshrl.u32 %v595, 16
        %v769 = vor.u32 %v767, %v765
        %v770 = vshrl.u32 %v576, 16
        %v772 = vshll.u32 %v576, 16
        %v774 = vrot.slane %v772, 1
        %v775 = vor.u32 %v770, %v774
        %v776 = vshll.u32 %v596, 16
        %v778 = vrot.slane %v776, 1
        %v779 = vsel %vm600, %v775, %v778
        %v780 = vshrl.u32 %v596, 16
        %v782 = vor.u32 %v780, %v778
        %v783 = vshrl.u32 %v578, 16
        %v785 = vshll.u32 %v578, 16
        %v787 = vrot.slane %v785, 1
        %v788 = vor.u32 %v783, %v787
        %v789 = vshll.u32 %v597, 16
        %v791 = vrot.slane %v789, 1
        %v792 = vsel %vm600, %v788, %v791
        %v793 = vshrl.u32 %v597, 16
        %v795 = vor.u32 %v793, %v791
        %v796 = vshrl.u32 %v580, 16
        %v798 = vshll.u32 %v580, 16
        %v800 = vrot.slane %v798, 1
        %v801 = vor.u32 %v796, %v800
        %v802 = vshll.u32 %v598, 16
        %v804 = vrot.slane %v802, 1
        %v805 = vsel %vm600, %v801, %v804
        %v806 = vshrl.u32 %v598, 16
        %v808 = vor.u32 %v806, %v804
        %809 = vrot.lane.b32.xlu0 %v610, 4
        %v810 = vpop.permute.xlu0 %809
        %811 = vrot.lane.b32.xlu0 %v613, 4
        %v812 = vpop.permute.xlu0 %811
        %813 = vrot.lane.b32.xlu0 %v623, 4
        %v814 = vpop.permute.xlu0 %813
        %815 = vrot.lane.b32.xlu0 %v626, 4
        %v816 = vpop.permute.xlu0 %815
        %817 = vrot.lane.b32.xlu0 %v636, 4
        %v818 = vpop.permute.xlu0 %817
        %819 = vrot.lane.b32.xlu0 %v639, 4
        %v820 = vpop.permute.xlu0 %819
        %821 = vrot.lane.b32.xlu0 %v649, 4
        %v822 = vpop.permute.xlu0 %821
        %823 = vrot.lane.b32.xlu0 %v652, 4
        %v824 = vpop.permute.xlu0 %823
        %825 = vrot.lane.b32.xlu0 %v662, 4
        %v826 = vpop.permute.xlu0 %825
        %827 = vrot.lane.b32.xlu0 %v665, 4
        %v828 = vpop.permute.xlu0 %827
        %829 = vrot.lane.b32.xlu0 %v675, 4
        %v830 = vpop.permute.xlu0 %829
        %831 = vrot.lane.b32.xlu0 %v678, 4
        %v832 = vpop.permute.xlu0 %831
        %833 = vrot.lane.b32.xlu0 %v688, 4
        %v834 = vpop.permute.xlu0 %833
        %835 = vrot.lane.b32.xlu0 %v691, 4
        %v836 = vpop.permute.xlu0 %835
        %837 = vrot.lane.b32.xlu0 %v701, 4
        %v838 = vpop.permute.xlu0 %837
        %839 = vrot.lane.b32.xlu0 %v704, 4
        %v840 = vpop.permute.xlu0 %839
        %841 = vrot.lane.b32.xlu0 %v714, 4
        %v842 = vpop.permute.xlu0 %841
        %843 = vrot.lane.b32.xlu0 %v717, 4
        %v844 = vpop.permute.xlu0 %843
        %845 = vrot.lane.b32.xlu0 %v727, 4
        %v846 = vpop.permute.xlu0 %845
        %847 = vrot.lane.b32.xlu0 %v730, 4
        %v848 = vpop.permute.xlu0 %847
        %849 = vrot.lane.b32.xlu0 %v740, 4
        %v850 = vpop.permute.xlu0 %849
        %851 = vrot.lane.b32.xlu0 %v743, 4
        %v852 = vpop.permute.xlu0 %851
        %853 = vrot.lane.b32.xlu0 %v753, 4
        %v854 = vpop.permute.xlu0 %853
        %855 = vrot.lane.b32.xlu0 %v756, 4
        %v856 = vpop.permute.xlu0 %855
        %857 = vrot.lane.b32.xlu0 %v766, 4
        %v858 = vpop.permute.xlu0 %857
        %859 = vrot.lane.b32.xlu0 %v769, 4
        %v860 = vpop.permute.xlu0 %859
        %861 = vrot.lane.b32.xlu0 %v779, 4
        %v862 = vpop.permute.xlu0 %861
        %863 = vrot.lane.b32.xlu0 %v782, 4
        %v864 = vpop.permute.xlu0 %863
        %865 = vrot.lane.b32.xlu0 %v792, 4
        %v866 = vpop.permute.xlu0 %865
        %867 = vrot.lane.b32.xlu0 %v795, 4
        %v868 = vpop.permute.xlu0 %867
        %869 = vrot.lane.b32.xlu0 %v805, 4
        %v870 = vpop.permute.xlu0 %869
        %871 = vrot.lane.b32.xlu0 %v808, 4
        %v872 = vpop.permute.xlu0 %871
        %vm905 = vcmask 1046528
        %v906 = vrot.slane %v550, 1
        %v907 = vrot.slane %v583, 1
        %v908 = vsel %vm905, %v906, %v907
        %v909 = vrot.slane %v552, 1
        %v910 = vrot.slane %v584, 1
        %v911 = vsel %vm905, %v909, %v910
        %v912 = vrot.slane %v554, 1
        %v913 = vrot.slane %v585, 1
        %v914 = vsel %vm905, %v912, %v913
        %v915 = vrot.slane %v556, 1
        %v916 = vrot.slane %v586, 1
        %v917 = vsel %vm905, %v915, %v916
        %v918 = vrot.slane %v558, 1
        %v919 = vrot.slane %v587, 1
        %v920 = vsel %vm905, %v918, %v919
        %v921 = vrot.slane %v560, 1
        %v922 = vrot.slane %v588, 1
        %v923 = vsel %vm905, %v921, %v922
        %v924 = vrot.slane %v562, 1
        %v925 = vrot.slane %v589, 1
        %v926 = vsel %vm905, %v924, %v925
        %v927 = vrot.slane %v564, 1
        %v928 = vrot.slane %v590, 1
        %v929 = vsel %vm905, %v927, %v928
        %v930 = vrot.slane %v566, 1
        %v931 = vrot.slane %v591, 1
        %v932 = vsel %vm905, %v930, %v931
        %v933 = vrot.slane %v568, 1
        %v934 = vrot.slane %v592, 1
        %v935 = vsel %vm905, %v933, %v934
        %v936 = vrot.slane %v570, 1
        %v937 = vrot.slane %v593, 1
        %v938 = vsel %vm905, %v936, %v937
        %v939 = vrot.slane %v572, 1
        %v940 = vrot.slane %v594, 1
        %v941 = vsel %vm905, %v939, %v940
        %v942 = vrot.slane %v574, 1
        %v943 = vrot.slane %v595, 1
        %v944 = vsel %vm905, %v942, %v943
        %v945 = vrot.slane %v576, 1
        %v946 = vrot.slane %v596, 1
        %v947 = vsel %vm905, %v945, %v946
        %v948 = vrot.slane %v578, 1
        %v949 = vrot.slane %v597, 1
        %v950 = vsel %vm905, %v948, %v949
        %v951 = vrot.slane %v580, 1
        %v952 = vrot.slane %v598, 1
        %v953 = vsel %vm905, %v951, %v952
        %954 = vrot.lane.b32.xlu0 %v908, 8
        %v955 = vpop.permute.xlu0 %954
        %956 = vrot.lane.b32.xlu0 %v907, 8
        %v957 = vpop.permute.xlu0 %956
        %958 = vrot.lane.b32.xlu0 %v911, 8
        %v959 = vpop.permute.xlu0 %958
        %960 = vrot.lane.b32.xlu0 %v910, 8
        %v961 = vpop.permute.xlu0 %960
        %962 = vrot.lane.b32.xlu0 %v914, 8
        %v963 = vpop.permute.xlu0 %962
        %964 = vrot.lane.b32.xlu0 %v913, 8
        %v965 = vpop.permute.xlu0 %964
        %966 = vrot.lane.b32.xlu0 %v917, 8
        %v967 = vpop.permute.xlu0 %966
        %968 = vrot.lane.b32.xlu0 %v916, 8
        %v969 = vpop.permute.xlu0 %968
        %970 = vrot.lane.b32.xlu0 %v920, 8
        %v971 = vpop.permute.xlu0 %970
        %972 = vrot.lane.b32.xlu0 %v919, 8
        %v973 = vpop.permute.xlu0 %972
        %974 = vrot.lane.b32.xlu0 %v923, 8
        %v975 = vpop.permute.xlu0 %974
        %976 = vrot.lane.b32.xlu0 %v922, 8
        %v977 = vpop.permute.xlu0 %976
        %978 = vrot.lane.b32.xlu0 %v926, 8
        %v979 = vpop.permute.xlu0 %978
        %980 = vrot.lane.b32.xlu0 %v925, 8
        %v981 = vpop.permute.xlu0 %980
        %982 = vrot.lane.b32.xlu0 %v929, 8
        %v983 = vpop.permute.xlu0 %982
        %984 = vrot.lane.b32.xlu0 %v928, 8
        %v985 = vpop.permute.xlu0 %984
        %986 = vrot.lane.b32.xlu0 %v932, 8
        %v987 = vpop.permute.xlu0 %986
        %988 = vrot.lane.b32.xlu0 %v931, 8
        %v989 = vpop.permute.xlu0 %988
        %990 = vrot.lane.b32.xlu0 %v935, 8
        %v991 = vpop.permute.xlu0 %990
        %992 = vrot.lane.b32.xlu0 %v934, 8
        %v993 = vpop.permute.xlu0 %992
        %994 = vrot.lane.b32.xlu0 %v938, 8
        %v995 = vpop.permute.xlu0 %994
        %996 = vrot.lane.b32.xlu0 %v937, 8
        %v997 = vpop.permute.xlu0 %996
        %998 = vrot.lane.b32.xlu0 %v941, 8
        %v999 = vpop.permute.xlu0 %998
        %1000 = vrot.lane.b32.xlu0 %v940, 8
        %v1001 = vpop.permute.xlu0 %1000
        %1002 = vrot.lane.b32.xlu0 %v944, 8
        %v1003 = vpop.permute.xlu0 %1002
        %1004 = vrot.lane.b32.xlu0 %v943, 8
        %v1005 = vpop.permute.xlu0 %1004
        %1006 = vrot.lane.b32.xlu0 %v947, 8
        %v1007 = vpop.permute.xlu0 %1006
        %1008 = vrot.lane.b32.xlu0 %v946, 8
        %v1009 = vpop.permute.xlu0 %1008
        %1010 = vrot.lane.b32.xlu0 %v950, 8
        %v1011 = vpop.permute.xlu0 %1010
        %1012 = vrot.lane.b32.xlu0 %v949, 8
        %v1013 = vpop.permute.xlu0 %1012
        %1014 = vrot.lane.b32.xlu0 %v953, 8
        %v1015 = vpop.permute.xlu0 %1014
        %1016 = vrot.lane.b32.xlu0 %v952, 8
        %v1017 = vpop.permute.xlu0 %1016
        %1020 = vrot.lane.b32.xlu0 %v552, 12
        %v1021 = vpop.permute.xlu0 %1020
        %1022 = vrot.lane.b32.xlu0 %v584, 12
        %v1023 = vpop.permute.xlu0 %1022
        %1024 = vrot.lane.b32.xlu0 %v554, 12
        %v1025 = vpop.permute.xlu0 %1024
        %1026 = vrot.lane.b32.xlu0 %v585, 12
        %v1027 = vpop.permute.xlu0 %1026
        %1028 = vrot.lane.b32.xlu0 %v556, 12
        %v1029 = vpop.permute.xlu0 %1028
        %1030 = vrot.lane.b32.xlu0 %v586, 12
        %v1031 = vpop.permute.xlu0 %1030
        %1032 = vrot.lane.b32.xlu0 %v558, 12
        %v1033 = vpop.permute.xlu0 %1032
        %1034 = vrot.lane.b32.xlu0 %v587, 12
        %v1035 = vpop.permute.xlu0 %1034
        %1036 = vrot.lane.b32.xlu0 %v560, 12
        %v1037 = vpop.permute.xlu0 %1036
        %1038 = vrot.lane.b32.xlu0 %v588, 12
        %v1039 = vpop.permute.xlu0 %1038
        %1040 = vrot.lane.b32.xlu0 %v562, 12
        %v1041 = vpop.permute.xlu0 %1040
        %1042 = vrot.lane.b32.xlu0 %v589, 12
        %v1043 = vpop.permute.xlu0 %1042
        %1044 = vrot.lane.b32.xlu0 %v564, 12
        %v1045 = vpop.permute.xlu0 %1044
        %1046 = vrot.lane.b32.xlu0 %v590, 12
        %v1047 = vpop.permute.xlu0 %1046
        %1048 = vrot.lane.b32.xlu0 %v566, 12
        %v1049 = vpop.permute.xlu0 %1048
        %1050 = vrot.lane.b32.xlu0 %v591, 12
        %v1051 = vpop.permute.xlu0 %1050
        %1052 = vrot.lane.b32.xlu0 %v568, 12
        %v1053 = vpop.permute.xlu0 %1052
        %1054 = vrot.lane.b32.xlu0 %v592, 12
        %v1055 = vpop.permute.xlu0 %1054
        %1056 = vrot.lane.b32.xlu0 %v570, 12
        %v1057 = vpop.permute.xlu0 %1056
        %1058 = vrot.lane.b32.xlu0 %v593, 12
        %v1059 = vpop.permute.xlu0 %1058
        %1060 = vrot.lane.b32.xlu0 %v572, 12
        %v1061 = vpop.permute.xlu0 %1060
        %1062 = vrot.lane.b32.xlu0 %v594, 12
        %v1063 = vpop.permute.xlu0 %1062
        %1064 = vrot.lane.b32.xlu0 %v574, 12
        %v1065 = vpop.permute.xlu0 %1064
        %1066 = vrot.lane.b32.xlu0 %v595, 12
        %v1067 = vpop.permute.xlu0 %1066
        %1068 = vrot.lane.b32.xlu0 %v576, 12
        %v1069 = vpop.permute.xlu0 %1068
        %1070 = vrot.lane.b32.xlu0 %v596, 12
        %v1071 = vpop.permute.xlu0 %1070
        %1072 = vrot.lane.b32.xlu0 %v578, 12
        %v1073 = vpop.permute.xlu0 %1072
        %1074 = vrot.lane.b32.xlu0 %v597, 12
        %v1075 = vpop.permute.xlu0 %1074
        %1076 = vrot.lane.b32.xlu0 %v580, 12
        %v1077 = vpop.permute.xlu0 %1076
        %1078 = vrot.lane.b32.xlu0 %v598, 12
        %v1079 = vpop.permute.xlu0 %1078
        %1080 = vrot.lane.b32.xlu0 %v582, 12
        %v1081 = vpop.permute.xlu0 %1080
        %1082 = vrot.lane.b32.xlu0 %v599, 12
        %v1083 = vpop.permute.xlu0 %1082
        %v1084 = vshrl.u32 %v582, 16
        %v1086 = vshll.u32 %v582, 16
        %v1088 = vrot.slane %v1086, 1
        %v1089 = vor.u32 %v1084, %v1088
        %v1090 = vshll.u32 %v599, 16
        %v1092 = vrot.slane %v1090, 1
        %v1093 = vsel %vm600, %v1089, %v1092
        %v1094 = vshrl.u32 %v599, 16
        %v1096 = vor.u32 %v1094, %v1092
        %1097 = vrot.lane.b32.xlu0 %v623, 16
        %v1098 = vpop.permute.xlu0 %1097
        %1099 = vrot.lane.b32.xlu0 %v626, 16
        %v1100 = vpop.permute.xlu0 %1099
        %1101 = vrot.lane.b32.xlu0 %v636, 16
        %v1102 = vpop.permute.xlu0 %1101
        %1103 = vrot.lane.b32.xlu0 %v639, 16
        %v1104 = vpop.permute.xlu0 %1103
        %1105 = vrot.lane.b32.xlu0 %v649, 16
        %v1106 = vpop.permute.xlu0 %1105
        %1107 = vrot.lane.b32.xlu0 %v652, 16
        %v1108 = vpop.permute.xlu0 %1107
        %1109 = vrot.lane.b32.xlu0 %v662, 16
        %v1110 = vpop.permute.xlu0 %1109
        %1111 = vrot.lane.b32.xlu0 %v665, 16
        %v1112 = vpop.permute.xlu0 %1111
        %1113 = vrot.lane.b32.xlu0 %v675, 16
        %v1114 = vpop.permute.xlu0 %1113
        %1115 = vrot.lane.b32.xlu0 %v678, 16
        %v1116 = vpop.permute.xlu0 %1115
        %1117 = vrot.lane.b32.xlu0 %v688, 16
        %v1118 = vpop.permute.xlu0 %1117
        %1119 = vrot.lane.b32.xlu0 %v691, 16
        %v1120 = vpop.permute.xlu0 %1119
        %1121 = vrot.lane.b32.xlu0 %v701, 16
        %v1122 = vpop.permute.xlu0 %1121
        %1123 = vrot.lane.b32.xlu0 %v704, 16
        %v1124 = vpop.permute.xlu0 %1123
        %1125 = vrot.lane.b32.xlu0 %v714, 16
        %v1126 = vpop.permute.xlu0 %1125
        %1127 = vrot.lane.b32.xlu0 %v717, 16
        %v1128 = vpop.permute.xlu0 %1127
        %1129 = vrot.lane.b32.xlu0 %v727, 16
        %v1130 = vpop.permute.xlu0 %1129
        %1131 = vrot.lane.b32.xlu0 %v730, 16
        %v1132 = vpop.permute.xlu0 %1131
        %1133 = vrot.lane.b32.xlu0 %v740, 16
        %v1134 = vpop.permute.xlu0 %1133
        %1135 = vrot.lane.b32.xlu0 %v743, 16
        %v1136 = vpop.permute.xlu0 %1135
        %1137 = vrot.lane.b32.xlu0 %v753, 16
        %v1138 = vpop.permute.xlu0 %1137
        %1139 = vrot.lane.b32.xlu0 %v756, 16
        %v1140 = vpop.permute.xlu0 %1139
        %1141 = vrot.lane.b32.xlu0 %v766, 16
        %v1142 = vpop.permute.xlu0 %1141
        %1143 = vrot.lane.b32.xlu0 %v769, 16
        %v1144 = vpop.permute.xlu0 %1143
        %1145 = vrot.lane.b32.xlu0 %v779, 16
        %v1146 = vpop.permute.xlu0 %1145
        %1147 = vrot.lane.b32.xlu0 %v782, 16
        %v1148 = vpop.permute.xlu0 %1147
        %1149 = vrot.lane.b32.xlu0 %v792, 16
        %v1150 = vpop.permute.xlu0 %1149
        %1151 = vrot.lane.b32.xlu0 %v795, 16
        %v1152 = vpop.permute.xlu0 %1151
        %1153 = vrot.lane.b32.xlu0 %v805, 16
        %v1154 = vpop.permute.xlu0 %1153
        %1155 = vrot.lane.b32.xlu0 %v808, 16
        %v1156 = vpop.permute.xlu0 %1155
        %1157 = vrot.lane.b32.xlu0 %v1093, 16
        %v1158 = vpop.permute.xlu0 %1157
        %1159 = vrot.lane.b32.xlu0 %v1096, 16
        %v1160 = vpop.permute.xlu0 %1159
        %v1161 = vrot.slane %v582, 1
        %v1162 = vrot.slane %v599, 1
        %v1163 = vsel %vm905, %v1161, %v1162
        %1164 = vrot.lane.b32.xlu0 %v911, 20
        %v1165 = vpop.permute.xlu0 %1164
        %1166 = vrot.lane.b32.xlu0 %v910, 20
        %v1167 = vpop.permute.xlu0 %1166
        %1168 = vrot.lane.b32.xlu0 %v914, 20
        %v1169 = vpop.permute.xlu0 %1168
        %1170 = vrot.lane.b32.xlu0 %v913, 20
        %v1171 = vpop.permute.xlu0 %1170
        %1172 = vrot.lane.b32.xlu0 %v917, 20
        %v1173 = vpop.permute.xlu0 %1172
        %1174 = vrot.lane.b32.xlu0 %v916, 20
        %v1175 = vpop.permute.xlu0 %1174
        %1176 = vrot.lane.b32.xlu0 %v920, 20
        %v1177 = vpop.permute.xlu0 %1176
        %1178 = vrot.lane.b32.xlu0 %v919, 20
        %v1179 = vpop.permute.xlu0 %1178
        %1180 = vrot.lane.b32.xlu0 %v923, 20
        %v1181 = vpop.permute.xlu0 %1180
        %1182 = vrot.lane.b32.xlu0 %v922, 20
        %v1183 = vpop.permute.xlu0 %1182
        %1184 = vrot.lane.b32.xlu0 %v926, 20
        %v1185 = vpop.permute.xlu0 %1184
        %1186 = vrot.lane.b32.xlu0 %v925, 20
        %v1187 = vpop.permute.xlu0 %1186
        %1188 = vrot.lane.b32.xlu0 %v929, 20
        %v1189 = vpop.permute.xlu0 %1188
        %1190 = vrot.lane.b32.xlu0 %v928, 20
        %v1191 = vpop.permute.xlu0 %1190
        %1192 = vrot.lane.b32.xlu0 %v932, 20
        %v1193 = vpop.permute.xlu0 %1192
        %1194 = vrot.lane.b32.xlu0 %v931, 20
        %v1195 = vpop.permute.xlu0 %1194
        %1196 = vrot.lane.b32.xlu0 %v935, 20
        %v1197 = vpop.permute.xlu0 %1196
        %1198 = vrot.lane.b32.xlu0 %v934, 20
        %v1199 = vpop.permute.xlu0 %1198
        %1200 = vrot.lane.b32.xlu0 %v938, 20
        %v1201 = vpop.permute.xlu0 %1200
        %1202 = vrot.lane.b32.xlu0 %v937, 20
        %v1203 = vpop.permute.xlu0 %1202
        %1204 = vrot.lane.b32.xlu0 %v941, 20
        %v1205 = vpop.permute.xlu0 %1204
        %1206 = vrot.lane.b32.xlu0 %v940, 20
        %v1207 = vpop.permute.xlu0 %1206
        %1208 = vrot.lane.b32.xlu0 %v944, 20
        %v1209 = vpop.permute.xlu0 %1208
        %1210 = vrot.lane.b32.xlu0 %v943, 20
        %v1211 = vpop.permute.xlu0 %1210
        %1212 = vrot.lane.b32.xlu0 %v947, 20
        %v1213 = vpop.permute.xlu0 %1212
        %1214 = vrot.lane.b32.xlu0 %v946, 20
        %v1215 = vpop.permute.xlu0 %1214
        %1216 = vrot.lane.b32.xlu0 %v950, 20
        %v1217 = vpop.permute.xlu0 %1216
        %1218 = vrot.lane.b32.xlu0 %v949, 20
        %v1219 = vpop.permute.xlu0 %1218
        %1220 = vrot.lane.b32.xlu0 %v953, 20
        %v1221 = vpop.permute.xlu0 %1220
        %1222 = vrot.lane.b32.xlu0 %v952, 20
        %v1223 = vpop.permute.xlu0 %1222
        %1224 = vrot.lane.b32.xlu0 %v1163, 20
        %v1225 = vpop.permute.xlu0 %1224
        %1226 = vrot.lane.b32.xlu0 %v1162, 20
        %v1227 = vpop.permute.xlu0 %1226
        %1228 = vrot.lane.b32.xlu0 %v554, 24
        %v1229 = vpop.permute.xlu0 %1228
        %1230 = vrot.lane.b32.xlu0 %v585, 24
        %v1231 = vpop.permute.xlu0 %1230
        %1232 = vrot.lane.b32.xlu0 %v556, 24
        %v1233 = vpop.permute.xlu0 %1232
        %1234 = vrot.lane.b32.xlu0 %v586, 24
        %v1235 = vpop.permute.xlu0 %1234
        %1236 = vrot.lane.b32.xlu0 %v558, 24
        %v1237 = vpop.permute.xlu0 %1236
        %1238 = vrot.lane.b32.xlu0 %v587, 24
        %v1239 = vpop.permute.xlu0 %1238
        %1240 = vrot.lane.b32.xlu0 %v560, 24
        %v1241 = vpop.permute.xlu0 %1240
        %1242 = vrot.lane.b32.xlu0 %v588, 24
        %v1243 = vpop.permute.xlu0 %1242
        %1244 = vrot.lane.b32.xlu0 %v562, 24
        %v1245 = vpop.permute.xlu0 %1244
        %1246 = vrot.lane.b32.xlu0 %v589, 24
        %v1247 = vpop.permute.xlu0 %1246
        %1248 = vrot.lane.b32.xlu0 %v564, 24
        %v1249 = vpop.permute.xlu0 %1248
        %1250 = vrot.lane.b32.xlu0 %v590, 24
        %v1251 = vpop.permute.xlu0 %1250
        %1252 = vrot.lane.b32.xlu0 %v566, 24
        %v1253 = vpop.permute.xlu0 %1252
        %1254 = vrot.lane.b32.xlu0 %v591, 24
        %v1255 = vpop.permute.xlu0 %1254
        %1256 = vrot.lane.b32.xlu0 %v568, 24
        %v1257 = vpop.permute.xlu0 %1256
        %1258 = vrot.lane.b32.xlu0 %v592, 24
        %v1259 = vpop.permute.xlu0 %1258
        %1260 = vrot.lane.b32.xlu0 %v570, 24
        %v1261 = vpop.permute.xlu0 %1260
        %1262 = vrot.lane.b32.xlu0 %v593, 24
        %v1263 = vpop.permute.xlu0 %1262
        %1264 = vrot.lane.b32.xlu0 %v572, 24
        %v1265 = vpop.permute.xlu0 %1264
        %1266 = vrot.lane.b32.xlu0 %v594, 24
        %v1267 = vpop.permute.xlu0 %1266
        %1268 = vrot.lane.b32.xlu0 %v574, 24
        %v1269 = vpop.permute.xlu0 %1268
        %1270 = vrot.lane.b32.xlu0 %v595, 24
        %v1271 = vpop.permute.xlu0 %1270
        %1272 = vrot.lane.b32.xlu0 %v576, 24
        %v1273 = vpop.permute.xlu0 %1272
        %1274 = vrot.lane.b32.xlu0 %v596, 24
        %v1275 = vpop.permute.xlu0 %1274
        %1276 = vrot.lane.b32.xlu0 %v578, 24
        %v1277 = vpop.permute.xlu0 %1276
        %1278 = vrot.lane.b32.xlu0 %v597, 24
        %v1279 = vpop.permute.xlu0 %1278
        %1280 = vrot.lane.b32.xlu0 %v580, 24
        %v1281 = vpop.permute.xlu0 %1280
        %1282 = vrot.lane.b32.xlu0 %v598, 24
        %v1283 = vpop.permute.xlu0 %1282
        %1284 = vrot.lane.b32.xlu0 %v582, 24
        %v1285 = vpop.permute.xlu0 %1284
        %1286 = vrot.lane.b32.xlu0 %v599, 24
        %v1287 = vpop.permute.xlu0 %1286
        %1288 = vrot.lane.b32.xlu0 %v550, 24
        %v1289 = vpop.permute.xlu0 %1288
        %1290 = vrot.lane.b32.xlu0 %v583, 24
        %v1291 = vpop.permute.xlu0 %1290
        %1292 = vrot.lane.b32.xlu0 %v636, 28
        %v1293 = vpop.permute.xlu0 %1292
        %1294 = vrot.lane.b32.xlu0 %v639, 28
        %v1295 = vpop.permute.xlu0 %1294
        %1296 = vrot.lane.b32.xlu0 %v649, 28
        %v1297 = vpop.permute.xlu0 %1296
        %1298 = vrot.lane.b32.xlu0 %v652, 28
        %v1299 = vpop.permute.xlu0 %1298
        %1300 = vrot.lane.b32.xlu0 %v662, 28
        %v1301 = vpop.permute.xlu0 %1300
        %1302 = vrot.lane.b32.xlu0 %v665, 28
        %v1303 = vpop.permute.xlu0 %1302
        %1304 = vrot.lane.b32.xlu0 %v675, 28
        %v1305 = vpop.permute.xlu0 %1304
        %1306 = vrot.lane.b32.xlu0 %v678, 28
        %v1307 = vpop.permute.xlu0 %1306
        %1308 = vrot.lane.b32.xlu0 %v688, 28
        %v1309 = vpop.permute.xlu0 %1308
        %1310 = vrot.lane.b32.xlu0 %v691, 28
        %v1311 = vpop.permute.xlu0 %1310
        %1312 = vrot.lane.b32.xlu0 %v701, 28
        %v1313 = vpop.permute.xlu0 %1312
        %1314 = vrot.lane.b32.xlu0 %v704, 28
        %v1315 = vpop.permute.xlu0 %1314
        %1316 = vrot.lane.b32.xlu0 %v714, 28
        %v1317 = vpop.permute.xlu0 %1316
        %1318 = vrot.lane.b32.xlu0 %v717, 28
        %v1319 = vpop.permute.xlu0 %1318
        %1320 = vrot.lane.b32.xlu0 %v727, 28
        %v1321 = vpop.permute.xlu0 %1320
        %1322 = vrot.lane.b32.xlu0 %v730, 28
        %v1323 = vpop.permute.xlu0 %1322
        %1324 = vrot.lane.b32.xlu0 %v740, 28
        %v1325 = vpop.permute.xlu0 %1324
        %1326 = vrot.lane.b32.xlu0 %v743, 28
        %v1327 = vpop.permute.xlu0 %1326
        %1328 = vrot.lane.b32.xlu0 %v753, 28
        %v1329 = vpop.permute.xlu0 %1328
        %1330 = vrot.lane.b32.xlu0 %v756, 28
        %v1331 = vpop.permute.xlu0 %1330
        %1332 = vrot.lane.b32.xlu0 %v766, 28
        %v1333 = vpop.permute.xlu0 %1332
        %1334 = vrot.lane.b32.xlu0 %v769, 28
        %v1335 = vpop.permute.xlu0 %1334
        %1336 = vrot.lane.b32.xlu0 %v779, 28
        %v1337 = vpop.permute.xlu0 %1336
        %1338 = vrot.lane.b32.xlu0 %v782, 28
        %v1339 = vpop.permute.xlu0 %1338
        %1340 = vrot.lane.b32.xlu0 %v792, 28
        %v1341 = vpop.permute.xlu0 %1340
        %1342 = vrot.lane.b32.xlu0 %v795, 28
        %v1343 = vpop.permute.xlu0 %1342
        %1344 = vrot.lane.b32.xlu0 %v805, 28
        %v1345 = vpop.permute.xlu0 %1344
        %1346 = vrot.lane.b32.xlu0 %v808, 28
        %v1347 = vpop.permute.xlu0 %1346
        %1348 = vrot.lane.b32.xlu0 %v1093, 28
        %v1349 = vpop.permute.xlu0 %1348
        %1350 = vrot.lane.b32.xlu0 %v1096, 28
        %v1351 = vpop.permute.xlu0 %1350
        %1352 = vrot.lane.b32.xlu0 %v610, 28
        %v1353 = vpop.permute.xlu0 %1352
        %1354 = vrot.lane.b32.xlu0 %v613, 28
        %v1355 = vpop.permute.xlu0 %1354
        %1356 = vrot.lane.b32.xlu0 %v914, 32
        %v1357 = vpop.permute.xlu0 %1356
        %1358 = vrot.lane.b32.xlu0 %v913, 32
        %v1359 = vpop.permute.xlu0 %1358
        %1360 = vrot.lane.b32.xlu0 %v917, 32
        %v1361 = vpop.permute.xlu0 %1360
        %1362 = vrot.lane.b32.xlu0 %v916, 32
        %v1363 = vpop.permute.xlu0 %1362
        %1364 = vrot.lane.b32.xlu0 %v920, 32
        %v1365 = vpop.permute.xlu0 %1364
        %1366 = vrot.lane.b32.xlu0 %v919, 32
        %v1367 = vpop.permute.xlu0 %1366
        %1368 = vrot.lane.b32.xlu0 %v923, 32
        %v1369 = vpop.permute.xlu0 %1368
        %1370 = vrot.lane.b32.xlu0 %v922, 32
        %v1371 = vpop.permute.xlu0 %1370
        %1372 = vrot.lane.b32.xlu0 %v926, 32
        %v1373 = vpop.permute.xlu0 %1372
        %1374 = vrot.lane.b32.xlu0 %v925, 32
        %v1375 = vpop.permute.xlu0 %1374
        %1376 = vrot.lane.b32.xlu0 %v929, 32
        %v1377 = vpop.permute.xlu0 %1376
        %1378 = vrot.lane.b32.xlu0 %v928, 32
        %v1379 = vpop.permute.xlu0 %1378
        %1380 = vrot.lane.b32.xlu0 %v932, 32
        %v1381 = vpop.permute.xlu0 %1380
        %1382 = vrot.lane.b32.xlu0 %v931, 32
        %v1383 = vpop.permute.xlu0 %1382
        %1384 = vrot.lane.b32.xlu0 %v935, 32
        %v1385 = vpop.permute.xlu0 %1384
        %1386 = vrot.lane.b32.xlu0 %v934, 32
        %v1387 = vpop.permute.xlu0 %1386
        %1388 = vrot.lane.b32.xlu0 %v938, 32
        %v1389 = vpop.permute.xlu0 %1388
        %1390 = vrot.lane.b32.xlu0 %v937, 32
        %v1391 = vpop.permute.xlu0 %1390
        %1392 = vrot.lane.b32.xlu0 %v941, 32
        %v1393 = vpop.permute.xlu0 %1392
        %1394 = vrot.lane.b32.xlu0 %v940, 32
        %v1395 = vpop.permute.xlu0 %1394
        %1396 = vrot.lane.b32.xlu0 %v944, 32
        %v1397 = vpop.permute.xlu0 %1396
        %1398 = vrot.lane.b32.xlu0 %v943, 32
        %v1399 = vpop.permute.xlu0 %1398
        %1400 = vrot.lane.b32.xlu0 %v947, 32
        %v1401 = vpop.permute.xlu0 %1400
        %1402 = vrot.lane.b32.xlu0 %v946, 32
        %v1403 = vpop.permute.xlu0 %1402
        %1404 = vrot.lane.b32.xlu0 %v950, 32
        %v1405 = vpop.permute.xlu0 %1404
        %1406 = vrot.lane.b32.xlu0 %v949, 32
        %v1407 = vpop.permute.xlu0 %1406
        %1408 = vrot.lane.b32.xlu0 %v953, 32
        %v1409 = vpop.permute.xlu0 %1408
        %1410 = vrot.lane.b32.xlu0 %v952, 32
        %v1411 = vpop.permute.xlu0 %1410
        %1412 = vrot.lane.b32.xlu0 %v1163, 32
        %v1413 = vpop.permute.xlu0 %1412
        %1414 = vrot.lane.b32.xlu0 %v1162, 32
        %v1415 = vpop.permute.xlu0 %1414
        %1416 = vrot.lane.b32.xlu0 %v908, 32
        %v1417 = vpop.permute.xlu0 %1416
        %1418 = vrot.lane.b32.xlu0 %v907, 32
        %v1419 = vpop.permute.xlu0 %1418
        %vm1420 = vcmask 31744
        %v1422 = vsel %vm1420, %v550, %v810
        %v1424 = vsel %vm1420, %v583, %v812
        %v1426 = vsel %vm1420, %v552, %v814
        %v1428 = vsel %vm1420, %v584, %v816
        %v1430 = vsel %vm1420, %v554, %v818
        %v1432 = vsel %vm1420, %v585, %v820
        %v1434 = vsel %vm1420, %v556, %v822
        %v1436 = vsel %vm1420, %v586, %v824
        %v1438 = vsel %vm1420, %v558, %v826
        %v1440 = vsel %vm1420, %v587, %v828
        %v1442 = vsel %vm1420, %v560, %v830
        %v1444 = vsel %vm1420, %v588, %v832
        %v1446 = vsel %vm1420, %v562, %v834
        %v1448 = vsel %vm1420, %v589, %v836
        %v1450 = vsel %vm1420, %v564, %v838
        %v1452 = vsel %vm1420, %v590, %v840
        %v1454 = vsel %vm1420, %v566, %v842
        %v1456 = vsel %vm1420, %v591, %v844
        %v1458 = vsel %vm1420, %v568, %v846
        %v1460 = vsel %vm1420, %v592, %v848
        %v1462 = vsel %vm1420, %v570, %v850
        %v1464 = vsel %vm1420, %v593, %v852
        %v1466 = vsel %vm1420, %v572, %v854
        %v1468 = vsel %vm1420, %v594, %v856
        %v1470 = vsel %vm1420, %v574, %v858
        %v1472 = vsel %vm1420, %v595, %v860
        %v1474 = vsel %vm1420, %v576, %v862
        %v1476 = vsel %vm1420, %v596, %v864
        %v1478 = vsel %vm1420, %v578, %v866
        %v1480 = vsel %vm1420, %v597, %v868
        %v1482 = vsel %vm1420, %v580, %v870
        %v1484 = vsel %vm1420, %v598, %v872
        %vm1485 = vcmask 64512
        %v1487 = vsel %vm1485, %v1422, %v955
        %v1489 = vsel %vm1485, %v1424, %v957
        %v1491 = vsel %vm1485, %v1426, %v959
        %v1493 = vsel %vm1485, %v1428, %v961
        %v1495 = vsel %vm1485, %v1430, %v963
        %v1497 = vsel %vm1485, %v1432, %v965
        %v1499 = vsel %vm1485, %v1434, %v967
        %v1501 = vsel %vm1485, %v1436, %v969
        %v1503 = vsel %vm1485, %v1438, %v971
        %v1505 = vsel %vm1485, %v1440, %v973
        %v1507 = vsel %vm1485, %v1442, %v975
        %v1509 = vsel %vm1485, %v1444, %v977
        %v1511 = vsel %vm1485, %v1446, %v979
        %v1513 = vsel %vm1485, %v1448, %v981
        %v1515 = vsel %vm1485, %v1450, %v983
        %v1517 = vsel %vm1485, %v1452, %v985
        %v1519 = vsel %vm1485, %v1454, %v987
        %v1521 = vsel %vm1485, %v1456, %v989
        %v1523 = vsel %vm1485, %v1458, %v991
        %v1525 = vsel %vm1485, %v1460, %v993
        %v1527 = vsel %vm1485, %v1462, %v995
        %v1529 = vsel %vm1485, %v1464, %v997
        %v1531 = vsel %vm1485, %v1466, %v999
        %v1533 = vsel %vm1485, %v1468, %v1001
        %v1535 = vsel %vm1485, %v1470, %v1003
        %v1537 = vsel %vm1485, %v1472, %v1005
        %v1539 = vsel %vm1485, %v1474, %v1007
        %v1541 = vsel %vm1485, %v1476, %v1009
        %v1543 = vsel %vm1485, %v1478, %v1011
        %v1545 = vsel %vm1485, %v1480, %v1013
        %v1547 = vsel %vm1485, %v1482, %v1015
        %v1549 = vsel %vm1485, %v1484, %v1017
        %vm1550 = vcmask 97280
        %v1552 = vsel %vm1550, %v1487, %v1021
        %v1554 = vsel %vm1550, %v1489, %v1023
        %v1556 = vsel %vm1550, %v1491, %v1025
        %v1558 = vsel %vm1550, %v1493, %v1027
        %v1560 = vsel %vm1550, %v1495, %v1029
        %v1562 = vsel %vm1550, %v1497, %v1031
        %v1564 = vsel %vm1550, %v1499, %v1033
        %v1566 = vsel %vm1550, %v1501, %v1035
        %v1568 = vsel %vm1550, %v1503, %v1037
        %v1570 = vsel %vm1550, %v1505, %v1039
        %v1572 = vsel %vm1550, %v1507, %v1041
        %v1574 = vsel %vm1550, %v1509, %v1043
        %v1576 = vsel %vm1550, %v1511, %v1045
        %v1578 = vsel %vm1550, %v1513, %v1047
        %v1580 = vsel %vm1550, %v1515, %v1049
        %v1582 = vsel %vm1550, %v1517, %v1051
        %v1584 = vsel %vm1550, %v1519, %v1053
        %v1586 = vsel %vm1550, %v1521, %v1055
        %v1588 = vsel %vm1550, %v1523, %v1057
        %v1590 = vsel %vm1550, %v1525, %v1059
        %v1592 = vsel %vm1550, %v1527, %v1061
        %v1594 = vsel %vm1550, %v1529, %v1063
        %v1596 = vsel %vm1550, %v1531, %v1065
        %v1598 = vsel %vm1550, %v1533, %v1067
        %v1600 = vsel %vm1550, %v1535, %v1069
        %v1602 = vsel %vm1550, %v1537, %v1071
        %v1604 = vsel %vm1550, %v1539, %v1073
        %v1606 = vsel %vm1550, %v1541, %v1075
        %v1608 = vsel %vm1550, %v1543, %v1077
        %v1610 = vsel %vm1550, %v1545, %v1079
        %v1612 = vsel %vm1550, %v1547, %v1081
        %v1614 = vsel %vm1550, %v1549, %v1083
        %vm1615 = vcmask 130048
        %v1617 = vsel %vm1615, %v1552, %v1098
        %v1619 = vsel %vm1615, %v1554, %v1100
        %v1621 = vsel %vm1615, %v1556, %v1102
        %v1623 = vsel %vm1615, %v1558, %v1104
        %v1625 = vsel %vm1615, %v1560, %v1106
        %v1627 = vsel %vm1615, %v1562, %v1108
        %v1629 = vsel %vm1615, %v1564, %v1110
        %v1631 = vsel %vm1615, %v1566, %v1112
        %v1633 = vsel %vm1615, %v1568, %v1114
        %v1635 = vsel %vm1615, %v1570, %v1116
        %v1637 = vsel %vm1615, %v1572, %v1118
        %v1639 = vsel %vm1615, %v1574, %v1120
        %v1641 = vsel %vm1615, %v1576, %v1122
        %v1643 = vsel %vm1615, %v1578, %v1124
        %v1645 = vsel %vm1615, %v1580, %v1126
        %v1647 = vsel %vm1615, %v1582, %v1128
        %v1649 = vsel %vm1615, %v1584, %v1130
        %v1651 = vsel %vm1615, %v1586, %v1132
        %v1653 = vsel %vm1615, %v1588, %v1134
        %v1655 = vsel %vm1615, %v1590, %v1136
        %v1657 = vsel %vm1615, %v1592, %v1138
        %v1659 = vsel %vm1615, %v1594, %v1140
        %v1661 = vsel %vm1615, %v1596, %v1142
        %v1663 = vsel %vm1615, %v1598, %v1144
        %v1665 = vsel %vm1615, %v1600, %v1146
        %v1667 = vsel %vm1615, %v1602, %v1148
        %v1669 = vsel %vm1615, %v1604, %v1150
        %v1671 = vsel %vm1615, %v1606, %v1152
        %v1673 = vsel %vm1615, %v1608, %v1154
        %v1675 = vsel %vm1615, %v1610, %v1156
        %v1677 = vsel %vm1615, %v1612, %v1158
        %v1679 = vsel %vm1615, %v1614, %v1160
        %vm1680 = vcmask 162816
        %v1682 = vsel %vm1680, %v1617, %v1165
        %v1684 = vsel %vm1680, %v1619, %v1167
        %v1686 = vsel %vm1680, %v1621, %v1169
        %v1688 = vsel %vm1680, %v1623, %v1171
        %v1690 = vsel %vm1680, %v1625, %v1173
        %v1692 = vsel %vm1680, %v1627, %v1175
        %v1694 = vsel %vm1680, %v1629, %v1177
        %v1696 = vsel %vm1680, %v1631, %v1179
        %v1698 = vsel %vm1680, %v1633, %v1181
        %v1700 = vsel %vm1680, %v1635, %v1183
        %v1702 = vsel %vm1680, %v1637, %v1185
        %v1704 = vsel %vm1680, %v1639, %v1187
        %v1706 = vsel %vm1680, %v1641, %v1189
        %v1708 = vsel %vm1680, %v1643, %v1191
        %v1710 = vsel %vm1680, %v1645, %v1193
        %v1712 = vsel %vm1680, %v1647, %v1195
        %v1714 = vsel %vm1680, %v1649, %v1197
        %v1716 = vsel %vm1680, %v1651, %v1199
        %v1718 = vsel %vm1680, %v1653, %v1201
        %v1720 = vsel %vm1680, %v1655, %v1203
        %v1722 = vsel %vm1680, %v1657, %v1205
        %v1724 = vsel %vm1680, %v1659, %v1207
        %v1726 = vsel %vm1680, %v1661, %v1209
        %v1728 = vsel %vm1680, %v1663, %v1211
        %v1730 = vsel %vm1680, %v1665, %v1213
        %v1732 = vsel %vm1680, %v1667, %v1215
        %v1734 = vsel %vm1680, %v1669, %v1217
        %v1736 = vsel %vm1680, %v1671, %v1219
        %v1738 = vsel %vm1680, %v1673, %v1221
        %v1740 = vsel %vm1680, %v1675, %v1223
        %v1742 = vsel %vm1680, %v1677, %v1225
        %v1744 = vsel %vm1680, %v1679, %v1227
        %vm1745 = vcmask 195584
        %v1747 = vsel %vm1745, %v1682, %v1229
        %v1749 = vsel %vm1745, %v1684, %v1231
        %v1751 = vsel %vm1745, %v1686, %v1233
        %v1753 = vsel %vm1745, %v1688, %v1235
        %v1755 = vsel %vm1745, %v1690, %v1237
        %v1757 = vsel %vm1745, %v1692, %v1239
        %v1759 = vsel %vm1745, %v1694, %v1241
        %v1761 = vsel %vm1745, %v1696, %v1243
        %v1763 = vsel %vm1745, %v1698, %v1245
        %v1765 = vsel %vm1745, %v1700, %v1247
        %v1767 = vsel %vm1745, %v1702, %v1249
        %v1769 = vsel %vm1745, %v1704, %v1251
        %v1771 = vsel %vm1745, %v1706, %v1253
        %v1773 = vsel %vm1745, %v1708, %v1255
        %v1775 = vsel %vm1745, %v1710, %v1257
        %v1777 = vsel %vm1745, %v1712, %v1259
        %v1779 = vsel %vm1745, %v1714, %v1261
        %v1781 = vsel %vm1745, %v1716, %v1263
        %v1783 = vsel %vm1745, %v1718, %v1265
        %v1785 = vsel %vm1745, %v1720, %v1267
        %v1787 = vsel %vm1745, %v1722, %v1269
        %v1789 = vsel %vm1745, %v1724, %v1271
        %v1791 = vsel %vm1745, %v1726, %v1273
        %v1793 = vsel %vm1745, %v1728, %v1275
        %v1795 = vsel %vm1745, %v1730, %v1277
        %v1797 = vsel %vm1745, %v1732, %v1279
        %v1799 = vsel %vm1745, %v1734, %v1281
        %v1801 = vsel %vm1745, %v1736, %v1283
        %v1803 = vsel %vm1745, %v1738, %v1285
        %v1805 = vsel %vm1745, %v1740, %v1287
        %v1807 = vsel %vm1745, %v1742, %v1289
        %v1809 = vsel %vm1745, %v1744, %v1291
        %vm1810 = vcmask 228352
        %v1812 = vsel %vm1810, %v1747, %v1293
        %v1814 = vsel %vm1810, %v1749, %v1295
        %v1816 = vsel %vm1810, %v1751, %v1297
        %v1818 = vsel %vm1810, %v1753, %v1299
        %v1820 = vsel %vm1810, %v1755, %v1301
        %v1822 = vsel %vm1810, %v1757, %v1303
        %v1824 = vsel %vm1810, %v1759, %v1305
        %v1826 = vsel %vm1810, %v1761, %v1307
        %v1828 = vsel %vm1810, %v1763, %v1309
        %v1830 = vsel %vm1810, %v1765, %v1311
        %v1832 = vsel %vm1810, %v1767, %v1313
        %v1834 = vsel %vm1810, %v1769, %v1315
        %v1836 = vsel %vm1810, %v1771, %v1317
        %v1838 = vsel %vm1810, %v1773, %v1319
        %v1840 = vsel %vm1810, %v1775, %v1321
        %v1842 = vsel %vm1810, %v1777, %v1323
        %v1844 = vsel %vm1810, %v1779, %v1325
        %v1846 = vsel %vm1810, %v1781, %v1327
        %v1848 = vsel %vm1810, %v1783, %v1329
        %v1850 = vsel %vm1810, %v1785, %v1331
        %v1852 = vsel %vm1810, %v1787, %v1333
        %v1854 = vsel %vm1810, %v1789, %v1335
        %v1856 = vsel %vm1810, %v1791, %v1337
        %v1858 = vsel %vm1810, %v1793, %v1339
        %v1860 = vsel %vm1810, %v1795, %v1341
        %v1862 = vsel %vm1810, %v1797, %v1343
        %v1864 = vsel %vm1810, %v1799, %v1345
        %v1866 = vsel %vm1810, %v1801, %v1347
        %v1868 = vsel %vm1810, %v1803, %v1349
        %v1870 = vsel %vm1810, %v1805, %v1351
        %v1872 = vsel %vm1810, %v1807, %v1353
        %v1874 = vsel %vm1810, %v1809, %v1355
        %vm1875 = vcmask 261120
        %v1877 = vsel %vm1875, %v1812, %v1357
        %v1879 = vsel %vm1875, %v1814, %v1359
        %v1881 = vsel %vm1875, %v1816, %v1361
        %v1883 = vsel %vm1875, %v1818, %v1363
        %v1885 = vsel %vm1875, %v1820, %v1365
        %v1887 = vsel %vm1875, %v1822, %v1367
        %v1889 = vsel %vm1875, %v1824, %v1369
        %v1891 = vsel %vm1875, %v1826, %v1371
        %v1893 = vsel %vm1875, %v1828, %v1373
        %v1895 = vsel %vm1875, %v1830, %v1375
        %v1897 = vsel %vm1875, %v1832, %v1377
        %v1899 = vsel %vm1875, %v1834, %v1379
        %v1901 = vsel %vm1875, %v1836, %v1381
        %v1903 = vsel %vm1875, %v1838, %v1383
        %v1905 = vsel %vm1875, %v1840, %v1385
        %v1907 = vsel %vm1875, %v1842, %v1387
        %v1909 = vsel %vm1875, %v1844, %v1389
        %v1911 = vsel %vm1875, %v1846, %v1391
        %v1913 = vsel %vm1875, %v1848, %v1393
        %v1915 = vsel %vm1875, %v1850, %v1395
        %v1917 = vsel %vm1875, %v1852, %v1397
        %v1919 = vsel %vm1875, %v1854, %v1399
        %v1921 = vsel %vm1875, %v1856, %v1401
        %v1923 = vsel %vm1875, %v1858, %v1403
        %v1925 = vsel %vm1875, %v1860, %v1405
        %v1927 = vsel %vm1875, %v1862, %v1407
        %v1929 = vsel %vm1875, %v1864, %v1409
        %v1931 = vsel %vm1875, %v1866, %v1411
        %v1933 = vsel %vm1875, %v1868, %v1413
        %v1935 = vsel %vm1875, %v1870, %v1415
        %v1937 = vsel %vm1875, %v1872, %v1417
        %v1939 = vsel %vm1875, %v1874, %v1419
        %vm1940 = vsmask.f32 4352
        %v1941 = vshrl.u32 %v1877, 16
        %v1943 = vrot.slane %v1941, 3
        %v1944 = vshll.u32 %v1877, 16
        %v1946 = vrot.slane %v1944, 4
        %v1947 = vor.u32 %v1943, %v1946
        %v1948 = vshrl.u32 %v1879, 16
        %v1950 = vrot.slane %v1948, 3
        %v1951 = vshll.u32 %v1879, 16
        %v1953 = vrot.slane %v1951, 4
        %v1954 = vor.u32 %v1950, %v1953
        %v1955 = vsel %vm1940, %v1947, %v1954
        %v1956 = vshrl.u32 %v1881, 16
        %v1958 = vrot.slane %v1956, 3
        %v1959 = vshll.u32 %v1881, 16
        %v1961 = vrot.slane %v1959, 4
        %v1962 = vor.u32 %v1958, %v1961
        %v1963 = vshrl.u32 %v1883, 16
        %v1965 = vrot.slane %v1963, 3
        %v1966 = vshll.u32 %v1883, 16
        %v1968 = vrot.slane %v1966, 4
        %v1969 = vor.u32 %v1965, %v1968
        %v1970 = vsel %vm1940, %v1962, %v1969
        %v1971 = vshrl.u32 %v1885, 16
        %v1973 = vrot.slane %v1971, 3
        %v1974 = vshll.u32 %v1885, 16
        %v1976 = vrot.slane %v1974, 4
        %v1977 = vor.u32 %v1973, %v1976
        %v1978 = vshrl.u32 %v1887, 16
        %v1980 = vrot.slane %v1978, 3
        %v1981 = vshll.u32 %v1887, 16
        %v1983 = vrot.slane %v1981, 4
        %v1984 = vor.u32 %v1980, %v1983
        %v1985 = vsel %vm1940, %v1977, %v1984
        %v1986 = vshrl.u32 %v1889, 16
        %v1988 = vrot.slane %v1986, 3
        %v1989 = vshll.u32 %v1889, 16
        %v1991 = vrot.slane %v1989, 4
        %v1992 = vor.u32 %v1988, %v1991
        %v1993 = vshrl.u32 %v1891, 16
        %v1995 = vrot.slane %v1993, 3
        %v1996 = vshll.u32 %v1891, 16
        %v1998 = vrot.slane %v1996, 4
        %v1999 = vor.u32 %v1995, %v1998
        %v2000 = vsel %vm1940, %v1992, %v1999
        %v2001 = vshrl.u32 %v1893, 16
        %v2003 = vrot.slane %v2001, 3
        %v2004 = vshll.u32 %v1893, 16
        %v2006 = vrot.slane %v2004, 4
        %v2007 = vor.u32 %v2003, %v2006
        %v2008 = vshrl.u32 %v1895, 16
        %v2010 = vrot.slane %v2008, 3
        %v2011 = vshll.u32 %v1895, 16
        %v2013 = vrot.slane %v2011, 4
        %v2014 = vor.u32 %v2010, %v2013
        %v2015 = vsel %vm1940, %v2007, %v2014
        %v2016 = vshrl.u32 %v1897, 16
        %v2018 = vrot.slane %v2016, 3
        %v2019 = vshll.u32 %v1897, 16
        %v2021 = vrot.slane %v2019, 4
        %v2022 = vor.u32 %v2018, %v2021
        %v2023 = vshrl.u32 %v1899, 16
        %v2025 = vrot.slane %v2023, 3
        %v2026 = vshll.u32 %v1899, 16
        %v2028 = vrot.slane %v2026, 4
        %v2029 = vor.u32 %v2025, %v2028
        %v2030 = vsel %vm1940, %v2022, %v2029
        %v2031 = vshrl.u32 %v1901, 16
        %v2033 = vrot.slane %v2031, 3
        %v2034 = vshll.u32 %v1901, 16
        %v2036 = vrot.slane %v2034, 4
        %v2037 = vor.u32 %v2033, %v2036
        %v2038 = vshrl.u32 %v1903, 16
        %v2040 = vrot.slane %v2038, 3
        %v2041 = vshll.u32 %v1903, 16
        %v2043 = vrot.slane %v2041, 4
        %v2044 = vor.u32 %v2040, %v2043
        %v2045 = vsel %vm1940, %v2037, %v2044
        %v2046 = vshrl.u32 %v1905, 16
        %v2048 = vrot.slane %v2046, 3
        %v2049 = vshll.u32 %v1905, 16
        %v2051 = vrot.slane %v2049, 4
        %v2052 = vor.u32 %v2048, %v2051
        %v2053 = vshrl.u32 %v1907, 16
        %v2055 = vrot.slane %v2053, 3
        %v2056 = vshll.u32 %v1907, 16
        %v2058 = vrot.slane %v2056, 4
        %v2059 = vor.u32 %v2055, %v2058
        %v2060 = vsel %vm1940, %v2052, %v2059
        %v2061 = vshrl.u32 %v1909, 16
        %v2063 = vrot.slane %v2061, 3
        %v2064 = vshll.u32 %v1909, 16
        %v2066 = vrot.slane %v2064, 4
        %v2067 = vor.u32 %v2063, %v2066
        %v2068 = vshrl.u32 %v1911, 16
        %v2070 = vrot.slane %v2068, 3
        %v2071 = vshll.u32 %v1911, 16
        %v2073 = vrot.slane %v2071, 4
        %v2074 = vor.u32 %v2070, %v2073
        %v2075 = vsel %vm1940, %v2067, %v2074
        %v2076 = vshrl.u32 %v1913, 16
        %v2078 = vrot.slane %v2076, 3
        %v2079 = vshll.u32 %v1913, 16
        %v2081 = vrot.slane %v2079, 4
        %v2082 = vor.u32 %v2078, %v2081
        %v2083 = vshrl.u32 %v1915, 16
        %v2085 = vrot.slane %v2083, 3
        %v2086 = vshll.u32 %v1915, 16
        %v2088 = vrot.slane %v2086, 4
        %v2089 = vor.u32 %v2085, %v2088
        %v2090 = vsel %vm1940, %v2082, %v2089
        %v2091 = vshrl.u32 %v1917, 16
        %v2093 = vrot.slane %v2091, 3
        %v2094 = vshll.u32 %v1917, 16
        %v2096 = vrot.slane %v2094, 4
        %v2097 = vor.u32 %v2093, %v2096
        %v2098 = vshrl.u32 %v1919, 16
        %v2100 = vrot.slane %v2098, 3
        %v2101 = vshll.u32 %v1919, 16
        %v2103 = vrot.slane %v2101, 4
        %v2104 = vor.u32 %v2100, %v2103
        %v2105 = vsel %vm1940, %v2097, %v2104
        %v2106 = vshrl.u32 %v1921, 16
        %v2108 = vrot.slane %v2106, 3
        %v2109 = vshll.u32 %v1921, 16
        %v2111 = vrot.slane %v2109, 4
        %v2112 = vor.u32 %v2108, %v2111
        %v2113 = vshrl.u32 %v1923, 16
        %v2115 = vrot.slane %v2113, 3
        %v2116 = vshll.u32 %v1923, 16
        %v2118 = vrot.slane %v2116, 4
        %v2119 = vor.u32 %v2115, %v2118
        %v2120 = vsel %vm1940, %v2112, %v2119
        %v2121 = vshrl.u32 %v1925, 16
        %v2123 = vrot.slane %v2121, 3
        %v2124 = vshll.u32 %v1925, 16
        %v2126 = vrot.slane %v2124, 4
        %v2127 = vor.u32 %v2123, %v2126
        %v2128 = vshrl.u32 %v1927, 16
        %v2130 = vrot.slane %v2128, 3
        %v2131 = vshll.u32 %v1927, 16
        %v2133 = vrot.slane %v2131, 4
        %v2134 = vor.u32 %v2130, %v2133
        %v2135 = vsel %vm1940, %v2127, %v2134
        %v2136 = vshrl.u32 %v1929, 16
        %v2138 = vrot.slane %v2136, 3
        %v2139 = vshll.u32 %v1929, 16
        %v2141 = vrot.slane %v2139, 4
        %v2142 = vor.u32 %v2138, %v2141
        %v2143 = vshrl.u32 %v1931, 16
        %v2145 = vrot.slane %v2143, 3
        %v2146 = vshll.u32 %v1931, 16
        %v2148 = vrot.slane %v2146, 4
        %v2149 = vor.u32 %v2145, %v2148
        %v2150 = vsel %vm1940, %v2142, %v2149
        %v2151 = vshrl.u32 %v1933, 16
        %v2153 = vrot.slane %v2151, 3
        %v2154 = vshll.u32 %v1933, 16
        %v2156 = vrot.slane %v2154, 4
        %v2157 = vor.u32 %v2153, %v2156
        %v2158 = vshrl.u32 %v1935, 16
        %v2160 = vrot.slane %v2158, 3
        %v2161 = vshll.u32 %v1935, 16
        %v2163 = vrot.slane %v2161, 4
        %v2164 = vor.u32 %v2160, %v2163
        %v2165 = vsel %vm1940, %v2157, %v2164
        %v2166 = vshrl.u32 %v1937, 16
        %v2168 = vrot.slane %v2166, 3
        %v2169 = vshll.u32 %v1937, 16
        %v2171 = vrot.slane %v2169, 4
        %v2172 = vor.u32 %v2168, %v2171
        %v2173 = vshrl.u32 %v1939, 16
        %v2175 = vrot.slane %v2173, 3
        %v2176 = vshll.u32 %v1939, 16
        %v2178 = vrot.slane %v2176, 4
        %v2179 = vor.u32 %v2175, %v2178
        %v2180 = vsel %vm1940, %v2172, %v2179
        %v2186 = vunpack.c.l.b16 %v442
        %v2187 = vunpack.c.l.b16 %v443
        %v2188 = vunpack.c.l.b16 %v444
        %v2189 = vunpack.c.l.b16 %v445
        %v2190 = vunpack.c.l.b16 %v446
        %v2191 = vpack.c.b16 %v2187, %v2186
        %v2192 = vpack.c.b16 %v2189, %v2188
        %v2193 = vpack.c.b16 %v2190, %v2190
        %vm2196 = vcmask 293888
        %v2198 = vsel %vm2196, %v1955, 0
        %v2201 = vsel %vm2196, %v1970, 0
        %v2204 = vsel %vm2196, %v1985, 0
        %v2207 = vsel %vm2196, %v2000, 0
        %v2210 = vsel %vm2196, %v2015, 0
        %v2213 = vsel %vm2196, %v2030, 0
        %v2216 = vsel %vm2196, %v2045, 0
        %v2219 = vsel %vm2196, %v2060, 0
        %v2222 = vsel %vm2196, %v2075, 0
        %v2225 = vsel %vm2196, %v2090, 0
        %v2228 = vsel %vm2196, %v2105, 0
        %v2231 = vsel %vm2196, %v2120, 0
        %v2234 = vsel %vm2196, %v2135, 0
        %v2237 = vsel %vm2196, %v2150, 0
        %v2240 = vsel %vm2196, %v2165, 0
        %v2243 = vsel %vm2196, %v2180, 0
        %vm2245 = vcmask 1041408
        %v2247 = vsel %vm2245, %v2193, 0
        %2249 = vmatprep.subr.bf16.mxu0 0
        %2250 = vmatpush1.bf16.msra.mxu0 %v2191
        %2251 = vmatprep.subr.bf16.mxu0 0
        %2252 = vmatpush1.bf16.msra.mxu0 %v2192
        %2253 = vmatprep.subr.bf16.mxu0 0
        %2254 = vmatpush1.bf16.msra.mxu0 %v2247
        %2255 = vmatprep.subr.bf16.mxu0 0
        %2256 = vmatpush1.bf16.msra.mxu0 0
        %2257 = vmatprep.subr.bf16.mxu0 0
        %2258 = vmatpush1.bf16.msra.mxu0 0
        %2259 = vmatprep.subr.bf16.mxu0 0
        %2260 = vmatpush1.bf16.msra.mxu0 0
        %2261 = vmatprep.subr.bf16.mxu0 0
        %2262 = vmatpush1.bf16.msra.mxu0 0
        %2263 = vmatprep.subr.bf16.mxu0 0
        %2264 = vmatpush1.bf16.msra.mxu0 0
        %2265 = vmatprep.subr.bf16.mxu0 0
        %2266 = vmatpush1.bf16.msra.mxu0 0
        %2267 = vmatprep.subr.bf16.mxu0 0
        %2268 = vmatpush1.bf16.msra.mxu0 0
        %2269 = vmatprep.subr.bf16.mxu0 0
        %2270 = vmatpush1.bf16.msra.mxu0 0
        %2271 = vmatprep.subr.bf16.mxu0 0
        %2272 = vmatpush1.bf16.msra.mxu0 0
        %2273 = vmatprep.subr.bf16.mxu0 0
        %2274 = vmatpush1.bf16.msra.mxu0 0
        %2275 = vmatprep.subr.bf16.mxu0 0
        %2276 = vmatpush1.bf16.msra.mxu0 0
        %2277 = vmatprep.subr.bf16.mxu0 0
        %2278 = vmatpush1.bf16.msra.mxu0 0
        %2279 = vmatprep.subr.bf16.mxu0 0
        %2280 = vmatpush1.bf16.msra.mxu0 0
        %2281 = vmatprep.mubr.bf16.mxu0 0
        %2282 = vmatmul.mubr.bf16.gmra.mrb[0].mxu0 %v2198
        %v2283 = vpop.f32.mrb[0].mxu0
        %v2284 = vadd.f32 0.0, %v2283
        %v2285 = vpop.f32.mrb[0].mxu0
        %v2286 = vpop.f32.mrb[0].mxu0
        %v2287 = vadd.f32 0.0, %v2286
        %v2288 = vpop.f32.mrb[0].mxu0
        %2289 = vmatprep.mubr.bf16.mxu0 0
        %2290 = vmatmul.mubr.bf16.gmra.mrb[0].mxu0 %v2201
        %v2291 = vpop.f32.mrb[0].mxu0
        %v2292 = vadd.f32 0.0, %v2291
        %v2293 = vpop.f32.mrb[0].mxu0
        %v2294 = vpop.f32.mrb[0].mxu0
        %v2295 = vadd.f32 0.0, %v2294
        %v2296 = vpop.f32.mrb[0].mxu0
        %2297 = vmatprep.mubr.bf16.mxu0 0
        %2298 = vmatmul.mubr.bf16.gmra.mrb[0].mxu0 %v2204
        %v2299 = vpop.f32.mrb[0].mxu0
        %v2300 = vadd.f32 0.0, %v2299
        %v2301 = vpop.f32.mrb[0].mxu0
        %v2302 = vpop.f32.mrb[0].mxu0
        %v2303 = vadd.f32 0.0, %v2302
        %v2304 = vpop.f32.mrb[0].mxu0
        %2305 = vmatprep.mubr.bf16.mxu0 0
        %2306 = vmatmul.mubr.bf16.gmra.mrb[0].mxu0 %v2207
        %v2307 = vpop.f32.mrb[0].mxu0
        %v2308 = vadd.f32 0.0, %v2307
        %v2309 = vpop.f32.mrb[0].mxu0
        %v2310 = vpop.f32.mrb[0].mxu0
        %v2311 = vadd.f32 0.0, %v2310
        %v2312 = vpop.f32.mrb[0].mxu0
        %2313 = vmatprep.mubr.bf16.mxu0 0
        %2314 = vmatmul.mubr.bf16.gmra.mrb[0].mxu0 %v2210
        %v2315 = vpop.f32.mrb[0].mxu0
        %v2316 = vadd.f32 0.0, %v2315
        %v2317 = vpop.f32.mrb[0].mxu0
        %v2318 = vpop.f32.mrb[0].mxu0
        %v2319 = vadd.f32 0.0, %v2318
        %v2320 = vpop.f32.mrb[0].mxu0
        %2321 = vmatprep.mubr.bf16.mxu0 0
        %2322 = vmatmul.mubr.bf16.gmra.mrb[0].mxu0 %v2213
        %v2323 = vpop.f32.mrb[0].mxu0
        %v2324 = vadd.f32 0.0, %v2323
        %v2325 = vpop.f32.mrb[0].mxu0
        %v2326 = vpop.f32.mrb[0].mxu0
        %v2327 = vadd.f32 0.0, %v2326
        %v2328 = vpop.f32.mrb[0].mxu0
        %2329 = vmatprep.mubr.bf16.mxu0 0
        %2330 = vmatmul.mubr.bf16.gmra.mrb[0].mxu0 %v2216
        %v2331 = vpop.f32.mrb[0].mxu0
        %v2332 = vadd.f32 0.0, %v2331
        %v2333 = vpop.f32.mrb[0].mxu0
        %v2334 = vpop.f32.mrb[0].mxu0
        %v2335 = vadd.f32 0.0, %v2334
        %v2336 = vpop.f32.mrb[0].mxu0
        %2337 = vmatprep.mubr.bf16.mxu0 0
        %2338 = vmatmul.mubr.bf16.gmra.mrb[0].mxu0 %v2219
        %v2339 = vpop.f32.mrb[0].mxu0
        %v2340 = vadd.f32 0.0, %v2339
        %v2341 = vpop.f32.mrb[0].mxu0
        %v2342 = vpop.f32.mrb[0].mxu0
        %v2343 = vadd.f32 0.0, %v2342
        %v2344 = vpop.f32.mrb[0].mxu0
        %2345 = vmatprep.mubr.bf16.mxu0 0
        %2346 = vmatmul.mubr.bf16.gmra.mrb[0].mxu0 %v2222
        %v2347 = vpop.f32.mrb[0].mxu0
        %v2348 = vadd.f32 0.0, %v2347
        %v2349 = vpop.f32.mrb[0].mxu0
        %v2350 = vpop.f32.mrb[0].mxu0
        %v2351 = vadd.f32 0.0, %v2350
        %v2352 = vpop.f32.mrb[0].mxu0
        %2353 = vmatprep.mubr.bf16.mxu0 0
        %2354 = vmatmul.mubr.bf16.gmra.mrb[0].mxu0 %v2225
        %v2355 = vpop.f32.mrb[0].mxu0
        %v2356 = vadd.f32 0.0, %v2355
        %v2357 = vpop.f32.mrb[0].mxu0
        %v2358 = vpop.f32.mrb[0].mxu0
        %v2359 = vadd.f32 0.0, %v2358
        %v2360 = vpop.f32.mrb[0].mxu0
        %2361 = vmatprep.mubr.bf16.mxu0 0
        %2362 = vmatmul.mubr.bf16.gmra.mrb[0].mxu0 %v2228
        %v2363 = vpop.f32.mrb[0].mxu0
        %v2364 = vadd.f32 0.0, %v2363
        %v2365 = vpop.f32.mrb[0].mxu0
        %v2366 = vpop.f32.mrb[0].mxu0
        %v2367 = vadd.f32 0.0, %v2366
        %v2368 = vpop.f32.mrb[0].mxu0
        %2369 = vmatprep.mubr.bf16.mxu0 0
        %2370 = vmatmul.mubr.bf16.gmra.mrb[0].mxu0 %v2231
        %v2371 = vpop.f32.mrb[0].mxu0
        %v2372 = vadd.f32 0.0, %v2371
        %v2373 = vpop.f32.mrb[0].mxu0
        %v2374 = vpop.f32.mrb[0].mxu0
        %v2375 = vadd.f32 0.0, %v2374
        %v2376 = vpop.f32.mrb[0].mxu0
        %2377 = vmatprep.mubr.bf16.mxu0 0
        %2378 = vmatmul.mubr.bf16.gmra.mrb[0].mxu0 %v2234
        %v2379 = vpop.f32.mrb[0].mxu0
        %v2380 = vadd.f32 0.0, %v2379
        %v2381 = vpop.f32.mrb[0].mxu0
        %v2382 = vpop.f32.mrb[0].mxu0
        %v2383 = vadd.f32 0.0, %v2382
        %v2384 = vpop.f32.mrb[0].mxu0
        %2385 = vmatprep.mubr.bf16.mxu0 0
        %2386 = vmatmul.mubr.bf16.gmra.mrb[0].mxu0 %v2237
        %v2387 = vpop.f32.mrb[0].mxu0
        %v2388 = vadd.f32 0.0, %v2387
        %v2389 = vpop.f32.mrb[0].mxu0
        %v2390 = vpop.f32.mrb[0].mxu0
        %v2391 = vadd.f32 0.0, %v2390
        %v2392 = vpop.f32.mrb[0].mxu0
        %2393 = vmatprep.mubr.bf16.mxu0 0
        %2394 = vmatmul.mubr.bf16.gmra.mrb[0].mxu0 %v2240
        %v2395 = vpop.f32.mrb[0].mxu0
        %v2396 = vadd.f32 0.0, %v2395
        %v2397 = vpop.f32.mrb[0].mxu0
        %v2398 = vpop.f32.mrb[0].mxu0
        %v2399 = vadd.f32 0.0, %v2398
        %v2400 = vpop.f32.mrb[0].mxu0
        %2401 = vmatprep.mubr.bf16.mxu0 0
        %2402 = vmatmul.mubr.bf16.gmra.mrb[0].mxu0 %v2243
        %v2403 = vpop.f32.mrb[0].mxu0
        %v2404 = vadd.f32 0.0, %v2403
        %v2405 = vpop.f32.mrb[0].mxu0
        %v2406 = vpop.f32.mrb[0].mxu0
        %v2407 = vadd.f32 0.0, %v2406
        %v2408 = vpop.f32.mrb[0].mxu0
        %2409 = vdwg.mxu0
        %v2411 = vlaneseq
        %v2412 = vshrl.u32 %v2411, 7
        %v2413 = vsub.s32 0, %v2412
        %v2414 = vrot.slane %v447, %v2413
        %v2416 = vmul.f32 %v2284, %v2414
        %v2417 = vmul.f32 %v2287, %v2414
        %v2418 = vmul.f32 %v2292, %v2414
        %v2419 = vmul.f32 %v2295, %v2414
        %v2420 = vmul.f32 %v2300, %v2414
        %v2421 = vmul.f32 %v2303, %v2414
        %v2422 = vmul.f32 %v2308, %v2414
        %v2423 = vmul.f32 %v2311, %v2414
        %v2424 = vmul.f32 %v2316, %v2414
        %v2425 = vmul.f32 %v2319, %v2414
        %v2426 = vmul.f32 %v2324, %v2414
        %v2427 = vmul.f32 %v2327, %v2414
        %v2428 = vmul.f32 %v2332, %v2414
        %v2429 = vmul.f32 %v2335, %v2414
        %v2430 = vmul.f32 %v2340, %v2414
        %v2431 = vmul.f32 %v2343, %v2414
        %v2432 = vmul.f32 %v2348, %v2414
        %v2433 = vmul.f32 %v2351, %v2414
        %v2434 = vmul.f32 %v2356, %v2414
        %v2435 = vmul.f32 %v2359, %v2414
        %v2436 = vmul.f32 %v2364, %v2414
        %v2437 = vmul.f32 %v2367, %v2414
        %v2438 = vmul.f32 %v2372, %v2414
        %v2439 = vmul.f32 %v2375, %v2414
        %v2440 = vmul.f32 %v2380, %v2414
        %v2441 = vmul.f32 %v2383, %v2414
        %v2442 = vmul.f32 %v2388, %v2414
        %v2443 = vmul.f32 %v2391, %v2414
        %v2444 = vmul.f32 %v2396, %v2414
        %v2445 = vmul.f32 %v2399, %v2414
        %v2446 = vmul.f32 %v2404, %v2414
        %v2447 = vmul.f32 %v2407, %v2414
        %v2449 = vlaneseq
        %v2450 = vshrl.u32 %v2449, 7
        %v2451 = vsub.s32 0, %v2450
        %v2452 = vrot.slane %v448, %v2451
        %v2454 = vadd.f32 %v2416, %v2452
        %v2455 = vadd.f32 %v2417, %v2452
        %v2456 = vadd.f32 %v2418, %v2452
        %v2457 = vadd.f32 %v2419, %v2452
        %v2458 = vadd.f32 %v2420, %v2452
        %v2459 = vadd.f32 %v2421, %v2452
        %v2460 = vadd.f32 %v2422, %v2452
        %v2461 = vadd.f32 %v2423, %v2452
        %v2462 = vadd.f32 %v2424, %v2452
        %v2463 = vadd.f32 %v2425, %v2452
        %v2464 = vadd.f32 %v2426, %v2452
        %v2465 = vadd.f32 %v2427, %v2452
        %v2466 = vadd.f32 %v2428, %v2452
        %v2467 = vadd.f32 %v2429, %v2452
        %v2468 = vadd.f32 %v2430, %v2452
        %v2469 = vadd.f32 %v2431, %v2452
        %v2470 = vadd.f32 %v2432, %v2452
        %v2471 = vadd.f32 %v2433, %v2452
        %v2472 = vadd.f32 %v2434, %v2452
        %v2473 = vadd.f32 %v2435, %v2452
        %v2474 = vadd.f32 %v2436, %v2452
        %v2475 = vadd.f32 %v2437, %v2452
        %v2476 = vadd.f32 %v2438, %v2452
        %v2477 = vadd.f32 %v2439, %v2452
        %v2478 = vadd.f32 %v2440, %v2452
        %v2479 = vadd.f32 %v2441, %v2452
        %v2480 = vadd.f32 %v2442, %v2452
        %v2481 = vadd.f32 %v2443, %v2452
        %v2482 = vadd.f32 %v2444, %v2452
        %v2483 = vadd.f32 %v2445, %v2452
        %v2484 = vadd.f32 %v2446, %v2452
        %v2485 = vadd.f32 %v2447, %v2452
        %v2486 = vmax.f32 %v2454, 0.0
        %v2487 = vmax.f32 %v2455, 0.0
        %v2488 = vmax.f32 %v2456, 0.0
        %v2489 = vmax.f32 %v2457, 0.0
        %v2490 = vmax.f32 %v2458, 0.0
        %v2491 = vmax.f32 %v2459, 0.0
        %v2492 = vmax.f32 %v2460, 0.0
        %v2493 = vmax.f32 %v2461, 0.0
        %v2494 = vmax.f32 %v2462, 0.0
        %v2495 = vmax.f32 %v2463, 0.0
        %v2496 = vmax.f32 %v2464, 0.0
        %v2497 = vmax.f32 %v2465, 0.0
        %v2498 = vmax.f32 %v2466, 0.0
        %v2499 = vmax.f32 %v2467, 0.0
        %v2500 = vmax.f32 %v2468, 0.0
        %v2501 = vmax.f32 %v2469, 0.0
        %v2502 = vmax.f32 %v2470, 0.0
        %v2503 = vmax.f32 %v2471, 0.0
        %v2504 = vmax.f32 %v2472, 0.0
        %v2505 = vmax.f32 %v2473, 0.0
        %v2506 = vmax.f32 %v2474, 0.0
        %v2507 = vmax.f32 %v2475, 0.0
        %v2508 = vmax.f32 %v2476, 0.0
        %v2509 = vmax.f32 %v2477, 0.0
        %v2510 = vmax.f32 %v2478, 0.0
        %v2511 = vmax.f32 %v2479, 0.0
        %v2512 = vmax.f32 %v2480, 0.0
        %v2513 = vmax.f32 %v2481, 0.0
        %v2514 = vmax.f32 %v2482, 0.0
        %v2515 = vmax.f32 %v2483, 0.0
        %v2516 = vmax.f32 %v2484, 0.0
        %v2517 = vmax.f32 %v2485, 0.0
        %2518 = vst.msk [vmem:[%s403] sm:$0xff] %vm1485, %v2486
        %2519 = vst.msk [vmem:[%s403 + $0x8] sm:$0xff] %vm1485, %v2487
        %2520 = vst.msk [vmem:[%s403 + $0x10] sm:$0xff] %vm1485, %v2488
        %2521 = vst.msk [vmem:[%s403 + $0x18] sm:$0xff] %vm1485, %v2489
        %2522 = vst.msk [vmem:[%s403 + $0x20] sm:$0xff] %vm1485, %v2490
        %2523 = vst.msk [vmem:[%s403 + $0x28] sm:$0xff] %vm1485, %v2491
        %2524 = vst.msk [vmem:[%s403 + $0x30] sm:$0xff] %vm1485, %v2492
        %2525 = vst.msk [vmem:[%s403 + $0x38] sm:$0xff] %vm1485, %v2493
        %2526 = vst.msk [vmem:[%s403 + $0x40] sm:$0xff] %vm1485, %v2494
        %2527 = vst.msk [vmem:[%s403 + $0x48] sm:$0xff] %vm1485, %v2495
        %2528 = vst.msk [vmem:[%s403 + $0x50] sm:$0xff] %vm1485, %v2496
        %2529 = vst.msk [vmem:[%s403 + $0x58] sm:$0xff] %vm1485, %v2497
        %2530 = vst.msk [vmem:[%s403 + $0x60] sm:$0xff] %vm1485, %v2498
        %2531 = vst.msk [vmem:[%s403 + $0x68] sm:$0xff] %vm1485, %v2499
        %2532 = vst.msk [vmem:[%s403 + $0x70] sm:$0xff] %vm1485, %v2500
        %2533 = vst.msk [vmem:[%s403 + $0x78] sm:$0xff] %vm1485, %v2501
        %2534 = vst.msk [vmem:[%s403 + $0x80] sm:$0xff] %vm1485, %v2502
        %2535 = vst.msk [vmem:[%s403 + $0x88] sm:$0xff] %vm1485, %v2503
        %2536 = vst.msk [vmem:[%s403 + $0x90] sm:$0xff] %vm1485, %v2504
        %2537 = vst.msk [vmem:[%s403 + $0x98] sm:$0xff] %vm1485, %v2505
        %2538 = vst.msk [vmem:[%s403 + $0xa0] sm:$0xff] %vm1485, %v2506
        %2539 = vst.msk [vmem:[%s403 + $0xa8] sm:$0xff] %vm1485, %v2507
        %2540 = vst.msk [vmem:[%s403 + $0xb0] sm:$0xff] %vm1485, %v2508
        %2541 = vst.msk [vmem:[%s403 + $0xb8] sm:$0xff] %vm1485, %v2509
        %2542 = vst.msk [vmem:[%s403 + $0xc0] sm:$0xff] %vm1485, %v2510
        %2543 = vst.msk [vmem:[%s403 + $0xc8] sm:$0xff] %vm1485, %v2511
        %2544 = vst.msk [vmem:[%s403 + $0xd0] sm:$0xff] %vm1485, %v2512
        %2545 = vst.msk [vmem:[%s403 + $0xd8] sm:$0xff] %vm1485, %v2513
        %2546 = vst.msk [vmem:[%s403 + $0xe0] sm:$0xff] %vm1485, %v2514
        %2547 = vst.msk [vmem:[%s403 + $0xe8] sm:$0xff] %vm1485, %v2515
        %2548 = vst.msk [vmem:[%s403 + $0xf0] sm:$0xff] %vm1485, %v2516
        %2549 = vst.msk [vmem:[%s403 + $0xf8] sm:$0xff] %vm1485, %v2517
        %v2550 = vpack.c.bf16 %v2487, %v2486
        %v2551 = vpack.c.bf16 %v2489, %v2488
        %v2552 = vpack.c.bf16 %v2491, %v2490
        %v2553 = vpack.c.bf16 %v2493, %v2492
        %v2554 = vpack.c.bf16 %v2495, %v2494
        %v2555 = vpack.c.bf16 %v2497, %v2496
        %v2556 = vpack.c.bf16 %v2499, %v2498
        %v2557 = vpack.c.bf16 %v2501, %v2500
        %v2558 = vpack.c.bf16 %v2503, %v2502
        %v2559 = vpack.c.bf16 %v2505, %v2504
        %v2560 = vpack.c.bf16 %v2507, %v2506
        %v2561 = vpack.c.bf16 %v2509, %v2508
        %v2562 = vpack.c.bf16 %v2511, %v2510
        %v2563 = vpack.c.bf16 %v2513, %v2512
        %v2564 = vpack.c.bf16 %v2515, %v2514
        %v2565 = vpack.c.bf16 %v2517, %v2516
        %v2566 = vld [vmem:[%s4] sm:$0xf]
        %v2567 = vld [vmem:[%s4 + $0x4] sm:$0xf]
        %v2568 = vld [vmem:[%s4 + $0x8] sm:$0xf]
        %v2569 = vld [vmem:[%s4 + $0xc] sm:$0xf]
        %v2570 = vld [vmem:[%s4 + $0x10] sm:$0xf]
        %v2571 = vld [vmem:[%s4 + $0x14] sm:$0xf]
        %v2572 = vld [vmem:[%s4 + $0x18] sm:$0xf]
        %v2573 = vld [vmem:[%s4 + $0x1c] sm:$0xf]
        %v2574 = vld [vmem:[%s4 + $0x20] sm:$0xf]
        %v2575 = vld [vmem:[%s5] sm:$0x1]
        %v2576 = vld [vmem:[%s6] sm:$0x1]
        %v2593 = vrot.slane %v2550, 4
        %v2594 = vrot.slane %v2551, 4
        %v2595 = vrot.slane %v2552, 4
        %v2596 = vrot.slane %v2553, 4
        %v2597 = vrot.slane %v2554, 4
        %v2598 = vrot.slane %v2555, 4
        %v2599 = vrot.slane %v2556, 4
        %v2600 = vrot.slane %v2557, 4
        %v2601 = vrot.slane %v2558, 4
        %v2602 = vrot.slane %v2559, 4
        %v2603 = vrot.slane %v2560, 4
        %v2604 = vrot.slane %v2561, 4
        %v2605 = vrot.slane %v2562, 4
        %v2606 = vrot.slane %v2563, 4
        %v2607 = vrot.slane %v2564, 4
        %v2608 = vrot.slane %v2565, 4
        %v2610 = vsel %vm547, 0, %v2593
        %v2612 = vsel %vm547, 0, %v2594
        %v2614 = vsel %vm547, 0, %v2595
        %v2616 = vsel %vm547, 0, %v2596
        %v2618 = vsel %vm547, 0, %v2597
        %v2620 = vsel %vm547, 0, %v2598
        %v2622 = vsel %vm547, 0, %v2599
        %v2624 = vsel %vm547, 0, %v2600
        %v2626 = vsel %vm547, 0, %v2601
        %v2628 = vsel %vm547, 0, %v2602
        %v2630 = vsel %vm547, 0, %v2603
        %v2632 = vsel %vm547, 0, %v2604
        %v2634 = vsel %vm547, 0, %v2605
        %v2636 = vsel %vm547, 0, %v2606
        %v2638 = vsel %vm547, 0, %v2607
        %v2640 = vsel %vm547, 0, %v2608
        %v2641 = vsel %vm547, %v2593, 0
        %v2642 = vsel %vm547, %v2594, 0
        %v2643 = vsel %vm547, %v2595, 0
        %v2644 = vsel %vm547, %v2596, 0
        %v2645 = vsel %vm547, %v2597, 0
        %v2646 = vsel %vm547, %v2598, 0
        %v2647 = vsel %vm547, %v2599, 0
        %v2648 = vsel %vm547, %v2600, 0
        %v2649 = vsel %vm547, %v2601, 0
        %v2650 = vsel %vm547, %v2602, 0
        %v2651 = vsel %vm547, %v2603, 0
        %v2652 = vsel %vm547, %v2604, 0
        %v2653 = vsel %vm547, %v2605, 0
        %v2654 = vsel %vm547, %v2606, 0
        %v2655 = vsel %vm547, %v2607, 0
        %v2656 = vsel %vm547, %v2608, 0
        %v2657 = vshrl.u32 %v2610, 16
        %v2659 = vshll.u32 %v2610, 16
        %v2661 = vrot.slane %v2659, 1
        %v2662 = vor.u32 %v2657, %v2661
        %v2663 = vshll.u32 %v2641, 16
        %v2665 = vrot.slane %v2663, 1
        %v2666 = vsel %vm600, %v2662, %v2665
        %v2667 = vshrl.u32 %v2641, 16
        %v2669 = vor.u32 %v2667, %v2665
        %v2670 = vshrl.u32 %v2612, 16
        %v2672 = vshll.u32 %v2612, 16
        %v2674 = vrot.slane %v2672, 1
        %v2675 = vor.u32 %v2670, %v2674
        %v2676 = vshll.u32 %v2642, 16
        %v2678 = vrot.slane %v2676, 1
        %v2679 = vsel %vm600, %v2675, %v2678
        %v2680 = vshrl.u32 %v2642, 16
        %v2682 = vor.u32 %v2680, %v2678
        %v2683 = vshrl.u32 %v2614, 16
        %v2685 = vshll.u32 %v2614, 16
        %v2687 = vrot.slane %v2685, 1
        %v2688 = vor.u32 %v2683, %v2687
        %v2689 = vshll.u32 %v2643, 16
        %v2691 = vrot.slane %v2689, 1
        %v2692 = vsel %vm600, %v2688, %v2691
        %v2693 = vshrl.u32 %v2643, 16
        %v2695 = vor.u32 %v2693, %v2691
        %v2696 = vshrl.u32 %v2616, 16
        %v2698 = vshll.u32 %v2616, 16
        %v2700 = vrot.slane %v2698, 1
        %v2701 = vor.u32 %v2696, %v2700
        %v2702 = vshll.u32 %v2644, 16
        %v2704 = vrot.slane %v2702, 1
        %v2705 = vsel %vm600, %v2701, %v2704
        %v2706 = vshrl.u32 %v2644, 16
        %v2708 = vor.u32 %v2706, %v2704
        %v2709 = vshrl.u32 %v2618, 16
        %v2711 = vshll.u32 %v2618, 16
        %v2713 = vrot.slane %v2711, 1
        %v2714 = vor.u32 %v2709, %v2713
        %v2715 = vshll.u32 %v2645, 16
        %v2717 = vrot.slane %v2715, 1
        %v2718 = vsel %vm600, %v2714, %v2717
        %v2719 = vshrl.u32 %v2645, 16
        %v2721 = vor.u32 %v2719, %v2717
        %v2722 = vshrl.u32 %v2620, 16
        %v2724 = vshll.u32 %v2620, 16
        %v2726 = vrot.slane %v2724, 1
        %v2727 = vor.u32 %v2722, %v2726
        %v2728 = vshll.u32 %v2646, 16
        %v2730 = vrot.slane %v2728, 1
        %v2731 = vsel %vm600, %v2727, %v2730
        %v2732 = vshrl.u32 %v2646, 16
        %v2734 = vor.u32 %v2732, %v2730
        %v2735 = vshrl.u32 %v2622, 16
        %v2737 = vshll.u32 %v2622, 16
        %v2739 = vrot.slane %v2737, 1
        %v2740 = vor.u32 %v2735, %v2739
        %v2741 = vshll.u32 %v2647, 16
        %v2743 = vrot.slane %v2741, 1
        %v2744 = vsel %vm600, %v2740, %v2743
        %v2745 = vshrl.u32 %v2647, 16
        %v2747 = vor.u32 %v2745, %v2743
        %v2748 = vshrl.u32 %v2624, 16
        %v2750 = vshll.u32 %v2624, 16
        %v2752 = vrot.slane %v2750, 1
        %v2753 = vor.u32 %v2748, %v2752
        %v2754 = vshll.u32 %v2648, 16
        %v2756 = vrot.slane %v2754, 1
        %v2757 = vsel %vm600, %v2753, %v2756
        %v2758 = vshrl.u32 %v2648, 16
        %v2760 = vor.u32 %v2758, %v2756
        %v2761 = vshrl.u32 %v2626, 16
        %v2763 = vshll.u32 %v2626, 16
        %v2765 = vrot.slane %v2763, 1
        %v2766 = vor.u32 %v2761, %v2765
        %v2767 = vshll.u32 %v2649, 16
        %v2769 = vrot.slane %v2767, 1
        %v2770 = vsel %vm600, %v2766, %v2769
        %v2771 = vshrl.u32 %v2649, 16
        %v2773 = vor.u32 %v2771, %v2769
        %v2774 = vshrl.u32 %v2628, 16
        %v2776 = vshll.u32 %v2628, 16
        %v2778 = vrot.slane %v2776, 1
        %v2779 = vor.u32 %v2774, %v2778
        %v2780 = vshll.u32 %v2650, 16
        %v2782 = vrot.slane %v2780, 1
        %v2783 = vsel %vm600, %v2779, %v2782
        %v2784 = vshrl.u32 %v2650, 16
        %v2786 = vor.u32 %v2784, %v2782
        %v2787 = vshrl.u32 %v2630, 16
        %v2789 = vshll.u32 %v2630, 16
        %v2791 = vrot.slane %v2789, 1
        %v2792 = vor.u32 %v2787, %v2791
        %v2793 = vshll.u32 %v2651, 16
        %v2795 = vrot.slane %v2793, 1
        %v2796 = vsel %vm600, %v2792, %v2795
        %v2797 = vshrl.u32 %v2651, 16
        %v2799 = vor.u32 %v2797, %v2795
        %v2800 = vshrl.u32 %v2632, 16
        %v2802 = vshll.u32 %v2632, 16
        %v2804 = vrot.slane %v2802, 1
        %v2805 = vor.u32 %v2800, %v2804
        %v2806 = vshll.u32 %v2652, 16
        %v2808 = vrot.slane %v2806, 1
        %v2809 = vsel %vm600, %v2805, %v2808
        %v2810 = vshrl.u32 %v2652, 16
        %v2812 = vor.u32 %v2810, %v2808
        %v2813 = vshrl.u32 %v2634, 16
        %v2815 = vshll.u32 %v2634, 16
        %v2817 = vrot.slane %v2815, 1
        %v2818 = vor.u32 %v2813, %v2817
        %v2819 = vshll.u32 %v2653, 16
        %v2821 = vrot.slane %v2819, 1
        %v2822 = vsel %vm600, %v2818, %v2821
        %v2823 = vshrl.u32 %v2653, 16
        %v2825 = vor.u32 %v2823, %v2821
        %v2826 = vshrl.u32 %v2636, 16
        %v2828 = vshll.u32 %v2636, 16
        %v2830 = vrot.slane %v2828, 1
        %v2831 = vor.u32 %v2826, %v2830
        %v2832 = vshll.u32 %v2654, 16
        %v2834 = vrot.slane %v2832, 1
        %v2835 = vsel %vm600, %v2831, %v2834
        %v2836 = vshrl.u32 %v2654, 16
        %v2838 = vor.u32 %v2836, %v2834
        %v2839 = vshrl.u32 %v2638, 16
        %v2841 = vshll.u32 %v2638, 16
        %v2843 = vrot.slane %v2841, 1
        %v2844 = vor.u32 %v2839, %v2843
        %v2845 = vshll.u32 %v2655, 16
        %v2847 = vrot.slane %v2845, 1
        %v2848 = vsel %vm600, %v2844, %v2847
        %v2849 = vshrl.u32 %v2655, 16
        %v2851 = vor.u32 %v2849, %v2847
        %2852 = vrot.lane.b32.xlu0 %v610, 8
        %v2853 = vpop.permute.xlu0 %2852
        %2854 = vrot.lane.b32.xlu0 %v613, 8
        %v2855 = vpop.permute.xlu0 %2854
        %2856 = vrot.lane.b32.xlu0 %v2666, 8
        %v2857 = vpop.permute.xlu0 %2856
        %2858 = vrot.lane.b32.xlu0 %v2669, 8
        %v2859 = vpop.permute.xlu0 %2858
        %2860 = vrot.lane.b32.xlu0 %v2679, 8
        %v2861 = vpop.permute.xlu0 %2860
        %2862 = vrot.lane.b32.xlu0 %v2682, 8
        %v2863 = vpop.permute.xlu0 %2862
        %2864 = vrot.lane.b32.xlu0 %v2692, 8
        %v2865 = vpop.permute.xlu0 %2864
        %2866 = vrot.lane.b32.xlu0 %v2695, 8
        %v2867 = vpop.permute.xlu0 %2866
        %2868 = vrot.lane.b32.xlu0 %v2705, 8
        %v2869 = vpop.permute.xlu0 %2868
        %2870 = vrot.lane.b32.xlu0 %v2708, 8
        %v2871 = vpop.permute.xlu0 %2870
        %2872 = vrot.lane.b32.xlu0 %v2718, 8
        %v2873 = vpop.permute.xlu0 %2872
        %2874 = vrot.lane.b32.xlu0 %v2721, 8
        %v2875 = vpop.permute.xlu0 %2874
        %2876 = vrot.lane.b32.xlu0 %v2731, 8
        %v2877 = vpop.permute.xlu0 %2876
        %2878 = vrot.lane.b32.xlu0 %v2734, 8
        %v2879 = vpop.permute.xlu0 %2878
        %2880 = vrot.lane.b32.xlu0 %v2744, 8
        %v2881 = vpop.permute.xlu0 %2880
        %2882 = vrot.lane.b32.xlu0 %v2747, 8
        %v2883 = vpop.permute.xlu0 %2882
        %2884 = vrot.lane.b32.xlu0 %v2757, 8
        %v2885 = vpop.permute.xlu0 %2884
        %2886 = vrot.lane.b32.xlu0 %v2760, 8
        %v2887 = vpop.permute.xlu0 %2886
        %2888 = vrot.lane.b32.xlu0 %v2770, 8
        %v2889 = vpop.permute.xlu0 %2888
        %2890 = vrot.lane.b32.xlu0 %v2773, 8
        %v2891 = vpop.permute.xlu0 %2890
        %2892 = vrot.lane.b32.xlu0 %v2783, 8
        %v2893 = vpop.permute.xlu0 %2892
        %2894 = vrot.lane.b32.xlu0 %v2786, 8
        %v2895 = vpop.permute.xlu0 %2894
        %2896 = vrot.lane.b32.xlu0 %v2796, 8
        %v2897 = vpop.permute.xlu0 %2896
        %2898 = vrot.lane.b32.xlu0 %v2799, 8
        %v2899 = vpop.permute.xlu0 %2898
        %2900 = vrot.lane.b32.xlu0 %v2809, 8
        %v2901 = vpop.permute.xlu0 %2900
        %2902 = vrot.lane.b32.xlu0 %v2812, 8
        %v2903 = vpop.permute.xlu0 %2902
        %2904 = vrot.lane.b32.xlu0 %v2822, 8
        %v2905 = vpop.permute.xlu0 %2904
        %2906 = vrot.lane.b32.xlu0 %v2825, 8
        %v2907 = vpop.permute.xlu0 %2906
        %2908 = vrot.lane.b32.xlu0 %v2835, 8
        %v2909 = vpop.permute.xlu0 %2908
        %2910 = vrot.lane.b32.xlu0 %v2838, 8
        %v2911 = vpop.permute.xlu0 %2910
        %2912 = vrot.lane.b32.xlu0 %v2848, 8
        %v2913 = vpop.permute.xlu0 %2912
        %2914 = vrot.lane.b32.xlu0 %v2851, 8
        %v2915 = vpop.permute.xlu0 %2914
        %v2946 = vrot.slane %v2610, 1
        %v2947 = vrot.slane %v2641, 1
        %v2948 = vsel %vm905, %v2946, %v2947
        %v2949 = vrot.slane %v2612, 1
        %v2950 = vrot.slane %v2642, 1
        %v2951 = vsel %vm905, %v2949, %v2950
        %v2952 = vrot.slane %v2614, 1
        %v2953 = vrot.slane %v2643, 1
        %v2954 = vsel %vm905, %v2952, %v2953
        %v2955 = vrot.slane %v2616, 1
        %v2956 = vrot.slane %v2644, 1
        %v2957 = vsel %vm905, %v2955, %v2956
        %v2958 = vrot.slane %v2618, 1
        %v2959 = vrot.slane %v2645, 1
        %v2960 = vsel %vm905, %v2958, %v2959
        %v2961 = vrot.slane %v2620, 1
        %v2962 = vrot.slane %v2646, 1
        %v2963 = vsel %vm905, %v2961, %v2962
        %v2964 = vrot.slane %v2622, 1
        %v2965 = vrot.slane %v2647, 1
        %v2966 = vsel %vm905, %v2964, %v2965
        %v2967 = vrot.slane %v2624, 1
        %v2968 = vrot.slane %v2648, 1
        %v2969 = vsel %vm905, %v2967, %v2968
        %v2970 = vrot.slane %v2626, 1
        %v2971 = vrot.slane %v2649, 1
        %v2972 = vsel %vm905, %v2970, %v2971
        %v2973 = vrot.slane %v2628, 1
        %v2974 = vrot.slane %v2650, 1
        %v2975 = vsel %vm905, %v2973, %v2974
        %v2976 = vrot.slane %v2630, 1
        %v2977 = vrot.slane %v2651, 1
        %v2978 = vsel %vm905, %v2976, %v2977
        %v2979 = vrot.slane %v2632, 1
        %v2980 = vrot.slane %v2652, 1
        %v2981 = vsel %vm905, %v2979, %v2980
        %v2982 = vrot.slane %v2634, 1
        %v2983 = vrot.slane %v2653, 1
        %v2984 = vsel %vm905, %v2982, %v2983
        %v2985 = vrot.slane %v2636, 1
        %v2986 = vrot.slane %v2654, 1
        %v2987 = vsel %vm905, %v2985, %v2986
        %v2988 = vrot.slane %v2638, 1
        %v2989 = vrot.slane %v2655, 1
        %v2990 = vsel %vm905, %v2988, %v2989
        %2991 = vrot.lane.b32.xlu0 %v908, 16
        %v2992 = vpop.permute.xlu0 %2991
        %2993 = vrot.lane.b32.xlu0 %v907, 16
        %v2994 = vpop.permute.xlu0 %2993
        %2995 = vrot.lane.b32.xlu0 %v2948, 16
        %v2996 = vpop.permute.xlu0 %2995
        %2997 = vrot.lane.b32.xlu0 %v2947, 16
        %v2998 = vpop.permute.xlu0 %2997
        %2999 = vrot.lane.b32.xlu0 %v2951, 16
        %v3000 = vpop.permute.xlu0 %2999
        %3001 = vrot.lane.b32.xlu0 %v2950, 16
        %v3002 = vpop.permute.xlu0 %3001
        %3003 = vrot.lane.b32.xlu0 %v2954, 16
        %v3004 = vpop.permute.xlu0 %3003
        %3005 = vrot.lane.b32.xlu0 %v2953, 16
        %v3006 = vpop.permute.xlu0 %3005
        %3007 = vrot.lane.b32.xlu0 %v2957, 16
        %v3008 = vpop.permute.xlu0 %3007
        %3009 = vrot.lane.b32.xlu0 %v2956, 16
        %v3010 = vpop.permute.xlu0 %3009
        %3011 = vrot.lane.b32.xlu0 %v2960, 16
        %v3012 = vpop.permute.xlu0 %3011
        %3013 = vrot.lane.b32.xlu0 %v2959, 16
        %v3014 = vpop.permute.xlu0 %3013
        %3015 = vrot.lane.b32.xlu0 %v2963, 16
        %v3016 = vpop.permute.xlu0 %3015
        %3017 = vrot.lane.b32.xlu0 %v2962, 16
        %v3018 = vpop.permute.xlu0 %3017
        %3019 = vrot.lane.b32.xlu0 %v2966, 16
        %v3020 = vpop.permute.xlu0 %3019
        %3021 = vrot.lane.b32.xlu0 %v2965, 16
        %v3022 = vpop.permute.xlu0 %3021
        %3023 = vrot.lane.b32.xlu0 %v2969, 16
        %v3024 = vpop.permute.xlu0 %3023
        %3025 = vrot.lane.b32.xlu0 %v2968, 16
        %v3026 = vpop.permute.xlu0 %3025
        %3027 = vrot.lane.b32.xlu0 %v2972, 16
        %v3028 = vpop.permute.xlu0 %3027
        %3029 = vrot.lane.b32.xlu0 %v2971, 16
        %v3030 = vpop.permute.xlu0 %3029
        %3031 = vrot.lane.b32.xlu0 %v2975, 16
        %v3032 = vpop.permute.xlu0 %3031
        %3033 = vrot.lane.b32.xlu0 %v2974, 16
        %v3034 = vpop.permute.xlu0 %3033
        %3035 = vrot.lane.b32.xlu0 %v2978, 16
        %v3036 = vpop.permute.xlu0 %3035
        %3037 = vrot.lane.b32.xlu0 %v2977, 16
        %v3038 = vpop.permute.xlu0 %3037
        %3039 = vrot.lane.b32.xlu0 %v2981, 16
        %v3040 = vpop.permute.xlu0 %3039
        %3041 = vrot.lane.b32.xlu0 %v2980, 16
        %v3042 = vpop.permute.xlu0 %3041
        %3043 = vrot.lane.b32.xlu0 %v2984, 16
        %v3044 = vpop.permute.xlu0 %3043
        %3045 = vrot.lane.b32.xlu0 %v2983, 16
        %v3046 = vpop.permute.xlu0 %3045
        %3047 = vrot.lane.b32.xlu0 %v2987, 16
        %v3048 = vpop.permute.xlu0 %3047
        %3049 = vrot.lane.b32.xlu0 %v2986, 16
        %v3050 = vpop.permute.xlu0 %3049
        %3051 = vrot.lane.b32.xlu0 %v2990, 16
        %v3052 = vpop.permute.xlu0 %3051
        %3053 = vrot.lane.b32.xlu0 %v2989, 16
        %v3054 = vpop.permute.xlu0 %3053
        %3057 = vrot.lane.b32.xlu0 %v2610, 24
        %v3058 = vpop.permute.xlu0 %3057
        %3059 = vrot.lane.b32.xlu0 %v2641, 24
        %v3060 = vpop.permute.xlu0 %3059
        %3061 = vrot.lane.b32.xlu0 %v2612, 24
        %v3062 = vpop.permute.xlu0 %3061
        %3063 = vrot.lane.b32.xlu0 %v2642, 24
        %v3064 = vpop.permute.xlu0 %3063
        %3065 = vrot.lane.b32.xlu0 %v2614, 24
        %v3066 = vpop.permute.xlu0 %3065
        %3067 = vrot.lane.b32.xlu0 %v2643, 24
        %v3068 = vpop.permute.xlu0 %3067
        %3069 = vrot.lane.b32.xlu0 %v2616, 24
        %v3070 = vpop.permute.xlu0 %3069
        %3071 = vrot.lane.b32.xlu0 %v2644, 24
        %v3072 = vpop.permute.xlu0 %3071
        %3073 = vrot.lane.b32.xlu0 %v2618, 24
        %v3074 = vpop.permute.xlu0 %3073
        %3075 = vrot.lane.b32.xlu0 %v2645, 24
        %v3076 = vpop.permute.xlu0 %3075
        %3077 = vrot.lane.b32.xlu0 %v2620, 24
        %v3078 = vpop.permute.xlu0 %3077
        %3079 = vrot.lane.b32.xlu0 %v2646, 24
        %v3080 = vpop.permute.xlu0 %3079
        %3081 = vrot.lane.b32.xlu0 %v2622, 24
        %v3082 = vpop.permute.xlu0 %3081
        %3083 = vrot.lane.b32.xlu0 %v2647, 24
        %v3084 = vpop.permute.xlu0 %3083
        %3085 = vrot.lane.b32.xlu0 %v2624, 24
        %v3086 = vpop.permute.xlu0 %3085
        %3087 = vrot.lane.b32.xlu0 %v2648, 24
        %v3088 = vpop.permute.xlu0 %3087
        %3089 = vrot.lane.b32.xlu0 %v2626, 24
        %v3090 = vpop.permute.xlu0 %3089
        %3091 = vrot.lane.b32.xlu0 %v2649, 24
        %v3092 = vpop.permute.xlu0 %3091
        %3093 = vrot.lane.b32.xlu0 %v2628, 24
        %v3094 = vpop.permute.xlu0 %3093
        %3095 = vrot.lane.b32.xlu0 %v2650, 24
        %v3096 = vpop.permute.xlu0 %3095
        %3097 = vrot.lane.b32.xlu0 %v2630, 24
        %v3098 = vpop.permute.xlu0 %3097
        %3099 = vrot.lane.b32.xlu0 %v2651, 24
        %v3100 = vpop.permute.xlu0 %3099
        %3101 = vrot.lane.b32.xlu0 %v2632, 24
        %v3102 = vpop.permute.xlu0 %3101
        %3103 = vrot.lane.b32.xlu0 %v2652, 24
        %v3104 = vpop.permute.xlu0 %3103
        %3105 = vrot.lane.b32.xlu0 %v2634, 24
        %v3106 = vpop.permute.xlu0 %3105
        %3107 = vrot.lane.b32.xlu0 %v2653, 24
        %v3108 = vpop.permute.xlu0 %3107
        %3109 = vrot.lane.b32.xlu0 %v2636, 24
        %v3110 = vpop.permute.xlu0 %3109
        %3111 = vrot.lane.b32.xlu0 %v2654, 24
        %v3112 = vpop.permute.xlu0 %3111
        %3113 = vrot.lane.b32.xlu0 %v2638, 24
        %v3114 = vpop.permute.xlu0 %3113
        %3115 = vrot.lane.b32.xlu0 %v2655, 24
        %v3116 = vpop.permute.xlu0 %3115
        %3117 = vrot.lane.b32.xlu0 %v2640, 24
        %v3118 = vpop.permute.xlu0 %3117
        %3119 = vrot.lane.b32.xlu0 %v2656, 24
        %v3120 = vpop.permute.xlu0 %3119
        %v3121 = vshrl.u32 %v2640, 16
        %v3123 = vshll.u32 %v2640, 16
        %v3125 = vrot.slane %v3123, 1
        %v3126 = vor.u32 %v3121, %v3125
        %v3127 = vshll.u32 %v2656, 16
        %v3129 = vrot.slane %v3127, 1
        %v3130 = vsel %vm600, %v3126, %v3129
        %v3131 = vshrl.u32 %v2656, 16
        %v3133 = vor.u32 %v3131, %v3129
        %3134 = vrot.lane.b32.xlu0 %v2666, 32
        %v3135 = vpop.permute.xlu0 %3134
        %3136 = vrot.lane.b32.xlu0 %v2669, 32
        %v3137 = vpop.permute.xlu0 %3136
        %3138 = vrot.lane.b32.xlu0 %v2679, 32
        %v3139 = vpop.permute.xlu0 %3138
        %3140 = vrot.lane.b32.xlu0 %v2682, 32
        %v3141 = vpop.permute.xlu0 %3140
        %3142 = vrot.lane.b32.xlu0 %v2692, 32
        %v3143 = vpop.permute.xlu0 %3142
        %3144 = vrot.lane.b32.xlu0 %v2695, 32
        %v3145 = vpop.permute.xlu0 %3144
        %3146 = vrot.lane.b32.xlu0 %v2705, 32
        %v3147 = vpop.permute.xlu0 %3146
        %3148 = vrot.lane.b32.xlu0 %v2708, 32
        %v3149 = vpop.permute.xlu0 %3148
        %3150 = vrot.lane.b32.xlu0 %v2718, 32
        %v3151 = vpop.permute.xlu0 %3150
        %3152 = vrot.lane.b32.xlu0 %v2721, 32
        %v3153 = vpop.permute.xlu0 %3152
        %3154 = vrot.lane.b32.xlu0 %v2731, 32
        %v3155 = vpop.permute.xlu0 %3154
        %3156 = vrot.lane.b32.xlu0 %v2734, 32
        %v3157 = vpop.permute.xlu0 %3156
        %3158 = vrot.lane.b32.xlu0 %v2744, 32
        %v3159 = vpop.permute.xlu0 %3158
        %3160 = vrot.lane.b32.xlu0 %v2747, 32
        %v3161 = vpop.permute.xlu0 %3160
        %3162 = vrot.lane.b32.xlu0 %v2757, 32
        %v3163 = vpop.permute.xlu0 %3162
        %3164 = vrot.lane.b32.xlu0 %v2760, 32
        %v3165 = vpop.permute.xlu0 %3164
        %3166 = vrot.lane.b32.xlu0 %v2770, 32
        %v3167 = vpop.permute.xlu0 %3166
        %3168 = vrot.lane.b32.xlu0 %v2773, 32
        %v3169 = vpop.permute.xlu0 %3168
        %3170 = vrot.lane.b32.xlu0 %v2783, 32
        %v3171 = vpop.permute.xlu0 %3170
        %3172 = vrot.lane.b32.xlu0 %v2786, 32
        %v3173 = vpop.permute.xlu0 %3172
        %3174 = vrot.lane.b32.xlu0 %v2796, 32
        %v3175 = vpop.permute.xlu0 %3174
        %3176 = vrot.lane.b32.xlu0 %v2799, 32
        %v3177 = vpop.permute.xlu0 %3176
        %3178 = vrot.lane.b32.xlu0 %v2809, 32
        %v3179 = vpop.permute.xlu0 %3178
        %3180 = vrot.lane.b32.xlu0 %v2812, 32
        %v3181 = vpop.permute.xlu0 %3180
        %3182 = vrot.lane.b32.xlu0 %v2822, 32
        %v3183 = vpop.permute.xlu0 %3182
        %3184 = vrot.lane.b32.xlu0 %v2825, 32
        %v3185 = vpop.permute.xlu0 %3184
        %3186 = vrot.lane.b32.xlu0 %v2835, 32
        %v3187 = vpop.permute.xlu0 %3186
        %3188 = vrot.lane.b32.xlu0 %v2838, 32
        %v3189 = vpop.permute.xlu0 %3188
        %3190 = vrot.lane.b32.xlu0 %v2848, 32
        %v3191 = vpop.permute.xlu0 %3190
        %3192 = vrot.lane.b32.xlu0 %v2851, 32
        %v3193 = vpop.permute.xlu0 %3192
        %3194 = vrot.lane.b32.xlu0 %v3130, 32
        %v3195 = vpop.permute.xlu0 %3194
        %3196 = vrot.lane.b32.xlu0 %v3133, 32
        %v3197 = vpop.permute.xlu0 %3196
        %v3198 = vrot.slane %v2640, 1
        %v3199 = vrot.slane %v2656, 1
        %v3200 = vsel %vm905, %v3198, %v3199
        %3201 = vrot.lane.b32.xlu0 %v2948, 40
        %v3202 = vpop.permute.xlu0 %3201
        %3203 = vrot.lane.b32.xlu0 %v2947, 40
        %v3204 = vpop.permute.xlu0 %3203
        %3205 = vrot.lane.b32.xlu0 %v2951, 40
        %v3206 = vpop.permute.xlu0 %3205
        %3207 = vrot.lane.b32.xlu0 %v2950, 40
        %v3208 = vpop.permute.xlu0 %3207
        %3209 = vrot.lane.b32.xlu0 %v2954, 40
        %v3210 = vpop.permute.xlu0 %3209
        %3211 = vrot.lane.b32.xlu0 %v2953, 40
        %v3212 = vpop.permute.xlu0 %3211
        %3213 = vrot.lane.b32.xlu0 %v2957, 40
        %v3214 = vpop.permute.xlu0 %3213
        %3215 = vrot.lane.b32.xlu0 %v2956, 40
        %v3216 = vpop.permute.xlu0 %3215
        %3217 = vrot.lane.b32.xlu0 %v2960, 40
        %v3218 = vpop.permute.xlu0 %3217
        %3219 = vrot.lane.b32.xlu0 %v2959, 40
        %v3220 = vpop.permute.xlu0 %3219
        %3221 = vrot.lane.b32.xlu0 %v2963, 40
        %v3222 = vpop.permute.xlu0 %3221
        %3223 = vrot.lane.b32.xlu0 %v2962, 40
        %v3224 = vpop.permute.xlu0 %3223
        %3225 = vrot.lane.b32.xlu0 %v2966, 40
        %v3226 = vpop.permute.xlu0 %3225
        %3227 = vrot.lane.b32.xlu0 %v2965, 40
        %v3228 = vpop.permute.xlu0 %3227
        %3229 = vrot.lane.b32.xlu0 %v2969, 40
        %v3230 = vpop.permute.xlu0 %3229
        %3231 = vrot.lane.b32.xlu0 %v2968, 40
        %v3232 = vpop.permute.xlu0 %3231
        %3233 = vrot.lane.b32.xlu0 %v2972, 40
        %v3234 = vpop.permute.xlu0 %3233
        %3235 = vrot.lane.b32.xlu0 %v2971, 40
        %v3236 = vpop.permute.xlu0 %3235
        %3237 = vrot.lane.b32.xlu0 %v2975, 40
        %v3238 = vpop.permute.xlu0 %3237
        %3239 = vrot.lane.b32.xlu0 %v2974, 40
        %v3240 = vpop.permute.xlu0 %3239
        %3241 = vrot.lane.b32.xlu0 %v2978, 40
        %v3242 = vpop.permute.xlu0 %3241
        %3243 = vrot.lane.b32.xlu0 %v2977, 40
        %v3244 = vpop.permute.xlu0 %3243
        %3245 = vrot.lane.b32.xlu0 %v2981, 40
        %v3246 = vpop.permute.xlu0 %3245
        %3247 = vrot.lane.b32.xlu0 %v2980, 40
        %v3248 = vpop.permute.xlu0 %3247
        %3249 = vrot.lane.b32.xlu0 %v2984, 40
        %v3250 = vpop.permute.xlu0 %3249
        %3251 = vrot.lane.b32.xlu0 %v2983, 40
        %v3252 = vpop.permute.xlu0 %3251
        %3253 = vrot.lane.b32.xlu0 %v2987, 40
        %v3254 = vpop.permute.xlu0 %3253
        %3255 = vrot.lane.b32.xlu0 %v2986, 40
        %v3256 = vpop.permute.xlu0 %3255
        %3257 = vrot.lane.b32.xlu0 %v2990, 40
        %v3258 = vpop.permute.xlu0 %3257
        %3259 = vrot.lane.b32.xlu0 %v2989, 40
        %v3260 = vpop.permute.xlu0 %3259
        %3261 = vrot.lane.b32.xlu0 %v3200, 40
        %v3262 = vpop.permute.xlu0 %3261
        %3263 = vrot.lane.b32.xlu0 %v3199, 40
        %v3264 = vpop.permute.xlu0 %3263
        %3265 = vrot.lane.b32.xlu0 %v2612, 48
        %v3266 = vpop.permute.xlu0 %3265
        %3267 = vrot.lane.b32.xlu0 %v2642, 48
        %v3268 = vpop.permute.xlu0 %3267
        %3269 = vrot.lane.b32.xlu0 %v2614, 48
        %v3270 = vpop.permute.xlu0 %3269
        %3271 = vrot.lane.b32.xlu0 %v2643, 48
        %v3272 = vpop.permute.xlu0 %3271
        %3273 = vrot.lane.b32.xlu0 %v2616, 48
        %v3274 = vpop.permute.xlu0 %3273
        %3275 = vrot.lane.b32.xlu0 %v2644, 48
        %v3276 = vpop.permute.xlu0 %3275
        %3277 = vrot.lane.b32.xlu0 %v2618, 48
        %v3278 = vpop.permute.xlu0 %3277
        %3279 = vrot.lane.b32.xlu0 %v2645, 48
        %v3280 = vpop.permute.xlu0 %3279
        %3281 = vrot.lane.b32.xlu0 %v2620, 48
        %v3282 = vpop.permute.xlu0 %3281
        %3283 = vrot.lane.b32.xlu0 %v2646, 48
        %v3284 = vpop.permute.xlu0 %3283
        %3285 = vrot.lane.b32.xlu0 %v2622, 48
        %v3286 = vpop.permute.xlu0 %3285
        %3287 = vrot.lane.b32.xlu0 %v2647, 48
        %v3288 = vpop.permute.xlu0 %3287
        %3289 = vrot.lane.b32.xlu0 %v2624, 48
        %v3290 = vpop.permute.xlu0 %3289
        %3291 = vrot.lane.b32.xlu0 %v2648, 48
        %v3292 = vpop.permute.xlu0 %3291
        %3293 = vrot.lane.b32.xlu0 %v2626, 48
        %v3294 = vpop.permute.xlu0 %3293
        %3295 = vrot.lane.b32.xlu0 %v2649, 48
        %v3296 = vpop.permute.xlu0 %3295
        %3297 = vrot.lane.b32.xlu0 %v2628, 48
        %v3298 = vpop.permute.xlu0 %3297
        %3299 = vrot.lane.b32.xlu0 %v2650, 48
        %v3300 = vpop.permute.xlu0 %3299
        %3301 = vrot.lane.b32.xlu0 %v2630, 48
        %v3302 = vpop.permute.xlu0 %3301
        %3303 = vrot.lane.b32.xlu0 %v2651, 48
        %v3304 = vpop.permute.xlu0 %3303
        %3305 = vrot.lane.b32.xlu0 %v2632, 48
        %v3306 = vpop.permute.xlu0 %3305
        %3307 = vrot.lane.b32.xlu0 %v2652, 48
        %v3308 = vpop.permute.xlu0 %3307
        %3309 = vrot.lane.b32.xlu0 %v2634, 48
        %v3310 = vpop.permute.xlu0 %3309
        %3311 = vrot.lane.b32.xlu0 %v2653, 48
        %v3312 = vpop.permute.xlu0 %3311
        %3313 = vrot.lane.b32.xlu0 %v2636, 48
        %v3314 = vpop.permute.xlu0 %3313
        %3315 = vrot.lane.b32.xlu0 %v2654, 48
        %v3316 = vpop.permute.xlu0 %3315
        %3317 = vrot.lane.b32.xlu0 %v2638, 48
        %v3318 = vpop.permute.xlu0 %3317
        %3319 = vrot.lane.b32.xlu0 %v2655, 48
        %v3320 = vpop.permute.xlu0 %3319
        %3321 = vrot.lane.b32.xlu0 %v2640, 48
        %v3322 = vpop.permute.xlu0 %3321
        %3323 = vrot.lane.b32.xlu0 %v2656, 48
        %v3324 = vpop.permute.xlu0 %3323
        %3325 = vrot.lane.b32.xlu0 %v550, 48
        %v3326 = vpop.permute.xlu0 %3325
        %3327 = vrot.lane.b32.xlu0 %v583, 48
        %v3328 = vpop.permute.xlu0 %3327
        %3329 = vrot.lane.b32.xlu0 %v2679, 56
        %v3330 = vpop.permute.xlu0 %3329
        %3331 = vrot.lane.b32.xlu0 %v2682, 56
        %v3332 = vpop.permute.xlu0 %3331
        %3333 = vrot.lane.b32.xlu0 %v2692, 56
        %v3334 = vpop.permute.xlu0 %3333
        %3335 = vrot.lane.b32.xlu0 %v2695, 56
        %v3336 = vpop.permute.xlu0 %3335
        %3337 = vrot.lane.b32.xlu0 %v2705, 56
        %v3338 = vpop.permute.xlu0 %3337
        %3339 = vrot.lane.b32.xlu0 %v2708, 56
        %v3340 = vpop.permute.xlu0 %3339
        %3341 = vrot.lane.b32.xlu0 %v2718, 56
        %v3342 = vpop.permute.xlu0 %3341
        %3343 = vrot.lane.b32.xlu0 %v2721, 56
        %v3344 = vpop.permute.xlu0 %3343
        %3345 = vrot.lane.b32.xlu0 %v2731, 56
        %v3346 = vpop.permute.xlu0 %3345
        %3347 = vrot.lane.b32.xlu0 %v2734, 56
        %v3348 = vpop.permute.xlu0 %3347
        %3349 = vrot.lane.b32.xlu0 %v2744, 56
        %v3350 = vpop.permute.xlu0 %3349
        %3351 = vrot.lane.b32.xlu0 %v2747, 56
        %v3352 = vpop.permute.xlu0 %3351
        %3353 = vrot.lane.b32.xlu0 %v2757, 56
        %v3354 = vpop.permute.xlu0 %3353
        %3355 = vrot.lane.b32.xlu0 %v2760, 56
        %v3356 = vpop.permute.xlu0 %3355
        %3357 = vrot.lane.b32.xlu0 %v2770, 56
        %v3358 = vpop.permute.xlu0 %3357
        %3359 = vrot.lane.b32.xlu0 %v2773, 56
        %v3360 = vpop.permute.xlu0 %3359
        %3361 = vrot.lane.b32.xlu0 %v2783, 56
        %v3362 = vpop.permute.xlu0 %3361
        %3363 = vrot.lane.b32.xlu0 %v2786, 56
        %v3364 = vpop.permute.xlu0 %3363
        %3365 = vrot.lane.b32.xlu0 %v2796, 56
        %v3366 = vpop.permute.xlu0 %3365
        %3367 = vrot.lane.b32.xlu0 %v2799, 56
        %v3368 = vpop.permute.xlu0 %3367
        %3369 = vrot.lane.b32.xlu0 %v2809, 56
        %v3370 = vpop.permute.xlu0 %3369
        %3371 = vrot.lane.b32.xlu0 %v2812, 56
        %v3372 = vpop.permute.xlu0 %3371
        %3373 = vrot.lane.b32.xlu0 %v2822, 56
        %v3374 = vpop.permute.xlu0 %3373
        %3375 = vrot.lane.b32.xlu0 %v2825, 56
        %v3376 = vpop.permute.xlu0 %3375
        %3377 = vrot.lane.b32.xlu0 %v2835, 56
        %v3378 = vpop.permute.xlu0 %3377
        %3379 = vrot.lane.b32.xlu0 %v2838, 56
        %v3380 = vpop.permute.xlu0 %3379
        %3381 = vrot.lane.b32.xlu0 %v2848, 56
        %v3382 = vpop.permute.xlu0 %3381
        %3383 = vrot.lane.b32.xlu0 %v2851, 56
        %v3384 = vpop.permute.xlu0 %3383
        %3385 = vrot.lane.b32.xlu0 %v3130, 56
        %v3386 = vpop.permute.xlu0 %3385
        %3387 = vrot.lane.b32.xlu0 %v3133, 56
        %v3388 = vpop.permute.xlu0 %3387
        %3389 = vrot.lane.b32.xlu0 %v610, 56
        %v3390 = vpop.permute.xlu0 %3389
        %3391 = vrot.lane.b32.xlu0 %v613, 56
        %v3392 = vpop.permute.xlu0 %3391
        %3393 = vrot.lane.b32.xlu0 %v2951, 64
        %v3394 = vpop.permute.xlu0 %3393
        %3395 = vrot.lane.b32.xlu0 %v2950, 64
        %v3396 = vpop.permute.xlu0 %3395
        %3397 = vrot.lane.b32.xlu0 %v2954, 64
        %v3398 = vpop.permute.xlu0 %3397
        %3399 = vrot.lane.b32.xlu0 %v2953, 64
        %v3400 = vpop.permute.xlu0 %3399
        %3401 = vrot.lane.b32.xlu0 %v2957, 64
        %v3402 = vpop.permute.xlu0 %3401
        %3403 = vrot.lane.b32.xlu0 %v2956, 64
        %v3404 = vpop.permute.xlu0 %3403
        %3405 = vrot.lane.b32.xlu0 %v2960, 64
        %v3406 = vpop.permute.xlu0 %3405
        %3407 = vrot.lane.b32.xlu0 %v2959, 64
        %v3408 = vpop.permute.xlu0 %3407
        %3409 = vrot.lane.b32.xlu0 %v2963, 64
        %v3410 = vpop.permute.xlu0 %3409
        %3411 = vrot.lane.b32.xlu0 %v2962, 64
        %v3412 = vpop.permute.xlu0 %3411
        %3413 = vrot.lane.b32.xlu0 %v2966, 64
        %v3414 = vpop.permute.xlu0 %3413
        %3415 = vrot.lane.b32.xlu0 %v2965, 64
        %v3416 = vpop.permute.xlu0 %3415
        %3417 = vrot.lane.b32.xlu0 %v2969, 64
        %v3418 = vpop.permute.xlu0 %3417
        %3419 = vrot.lane.b32.xlu0 %v2968, 64
        %v3420 = vpop.permute.xlu0 %3419
        %3421 = vrot.lane.b32.xlu0 %v2972, 64
        %v3422 = vpop.permute.xlu0 %3421
        %3423 = vrot.lane.b32.xlu0 %v2971, 64
        %v3424 = vpop.permute.xlu0 %3423
        %3425 = vrot.lane.b32.xlu0 %v2975, 64
        %v3426 = vpop.permute.xlu0 %3425
        %3427 = vrot.lane.b32.xlu0 %v2974, 64
        %v3428 = vpop.permute.xlu0 %3427
        %3429 = vrot.lane.b32.xlu0 %v2978, 64
        %v3430 = vpop.permute.xlu0 %3429
        %3431 = vrot.lane.b32.xlu0 %v2977, 64
        %v3432 = vpop.permute.xlu0 %3431
        %3433 = vrot.lane.b32.xlu0 %v2981, 64
        %v3434 = vpop.permute.xlu0 %3433
        %3435 = vrot.lane.b32.xlu0 %v2980, 64
        %v3436 = vpop.permute.xlu0 %3435
        %3437 = vrot.lane.b32.xlu0 %v2984, 64
        %v3438 = vpop.permute.xlu0 %3437
        %3439 = vrot.lane.b32.xlu0 %v2983, 64
        %v3440 = vpop.permute.xlu0 %3439
        %3441 = vrot.lane.b32.xlu0 %v2987, 64
        %v3442 = vpop.permute.xlu0 %3441
        %3443 = vrot.lane.b32.xlu0 %v2986, 64
        %v3444 = vpop.permute.xlu0 %3443
        %3445 = vrot.lane.b32.xlu0 %v2990, 64
        %v3446 = vpop.permute.xlu0 %3445
        %3447 = vrot.lane.b32.xlu0 %v2989, 64
        %v3448 = vpop.permute.xlu0 %3447
        %3449 = vrot.lane.b32.xlu0 %v3200, 64
        %v3450 = vpop.permute.xlu0 %3449
        %3451 = vrot.lane.b32.xlu0 %v3199, 64
        %v3452 = vpop.permute.xlu0 %3451
        %3453 = vrot.lane.b32.xlu0 %v908, 64
        %v3454 = vpop.permute.xlu0 %3453
        %3455 = vrot.lane.b32.xlu0 %v907, 64
        %v3456 = vpop.permute.xlu0 %3455
        %v3458 = vsel %vm1485, %v550, %v2853
        %v3460 = vsel %vm1485, %v583, %v2855
        %v3462 = vsel %vm1485, %v2610, %v2857
        %v3464 = vsel %vm1485, %v2641, %v2859
        %v3466 = vsel %vm1485, %v2612, %v2861
        %v3468 = vsel %vm1485, %v2642, %v2863
        %v3470 = vsel %vm1485, %v2614, %v2865
        %v3472 = vsel %vm1485, %v2643, %v2867
        %v3474 = vsel %vm1485, %v2616, %v2869
        %v3476 = vsel %vm1485, %v2644, %v2871
        %v3478 = vsel %vm1485, %v2618, %v2873
        %v3480 = vsel %vm1485, %v2645, %v2875
        %v3482 = vsel %vm1485, %v2620, %v2877
        %v3484 = vsel %vm1485, %v2646, %v2879
        %v3486 = vsel %vm1485, %v2622, %v2881
        %v3488 = vsel %vm1485, %v2647, %v2883
        %v3490 = vsel %vm1485, %v2624, %v2885
        %v3492 = vsel %vm1485, %v2648, %v2887
        %v3494 = vsel %vm1485, %v2626, %v2889
        %v3496 = vsel %vm1485, %v2649, %v2891
        %v3498 = vsel %vm1485, %v2628, %v2893
        %v3500 = vsel %vm1485, %v2650, %v2895
        %v3502 = vsel %vm1485, %v2630, %v2897
        %v3504 = vsel %vm1485, %v2651, %v2899
        %v3506 = vsel %vm1485, %v2632, %v2901
        %v3508 = vsel %vm1485, %v2652, %v2903
        %v3510 = vsel %vm1485, %v2634, %v2905
        %v3512 = vsel %vm1485, %v2653, %v2907
        %v3514 = vsel %vm1485, %v2636, %v2909
        %v3516 = vsel %vm1485, %v2654, %v2911
        %v3518 = vsel %vm1485, %v2638, %v2913
        %v3520 = vsel %vm1485, %v2655, %v2915
        %v3522 = vsel %vm1615, %v3458, %v2992
        %v3524 = vsel %vm1615, %v3460, %v2994
        %v3526 = vsel %vm1615, %v3462, %v2996
        %v3528 = vsel %vm1615, %v3464, %v2998
        %v3530 = vsel %vm1615, %v3466, %v3000
        %v3532 = vsel %vm1615, %v3468, %v3002
        %v3534 = vsel %vm1615, %v3470, %v3004
        %v3536 = vsel %vm1615, %v3472, %v3006
        %v3538 = vsel %vm1615, %v3474, %v3008
        %v3540 = vsel %vm1615, %v3476, %v3010
        %v3542 = vsel %vm1615, %v3478, %v3012
        %v3544 = vsel %vm1615, %v3480, %v3014
        %v3546 = vsel %vm1615, %v3482, %v3016
        %v3548 = vsel %vm1615, %v3484, %v3018
        %v3550 = vsel %vm1615, %v3486, %v3020
        %v3552 = vsel %vm1615, %v3488, %v3022
        %v3554 = vsel %vm1615, %v3490, %v3024
        %v3556 = vsel %vm1615, %v3492, %v3026
        %v3558 = vsel %vm1615, %v3494, %v3028
        %v3560 = vsel %vm1615, %v3496, %v3030
        %v3562 = vsel %vm1615, %v3498, %v3032
        %v3564 = vsel %vm1615, %v3500, %v3034
        %v3566 = vsel %vm1615, %v3502, %v3036
        %v3568 = vsel %vm1615, %v3504, %v3038
        %v3570 = vsel %vm1615, %v3506, %v3040
        %v3572 = vsel %vm1615, %v3508, %v3042
        %v3574 = vsel %vm1615, %v3510, %v3044
        %v3576 = vsel %vm1615, %v3512, %v3046
        %v3578 = vsel %vm1615, %v3514, %v3048
        %v3580 = vsel %vm1615, %v3516, %v3050
        %v3582 = vsel %vm1615, %v3518, %v3052
        %v3584 = vsel %vm1615, %v3520, %v3054
        %v3586 = vsel %vm1745, %v3522, %v3058
        %v3588 = vsel %vm1745, %v3524, %v3060
        %v3590 = vsel %vm1745, %v3526, %v3062
        %v3592 = vsel %vm1745, %v3528, %v3064
        %v3594 = vsel %vm1745, %v3530, %v3066
        %v3596 = vsel %vm1745, %v3532, %v3068
        %v3598 = vsel %vm1745, %v3534, %v3070
        %v3600 = vsel %vm1745, %v3536, %v3072
        %v3602 = vsel %vm1745, %v3538, %v3074
        %v3604 = vsel %vm1745, %v3540, %v3076
        %v3606 = vsel %vm1745, %v3542, %v3078
        %v3608 = vsel %vm1745, %v3544, %v3080
        %v3610 = vsel %vm1745, %v3546, %v3082
        %v3612 = vsel %vm1745, %v3548, %v3084
        %v3614 = vsel %vm1745, %v3550, %v3086
        %v3616 = vsel %vm1745, %v3552, %v3088
        %v3618 = vsel %vm1745, %v3554, %v3090
        %v3620 = vsel %vm1745, %v3556, %v3092
        %v3622 = vsel %vm1745, %v3558, %v3094
        %v3624 = vsel %vm1745, %v3560, %v3096
        %v3626 = vsel %vm1745, %v3562, %v3098
        %v3628 = vsel %vm1745, %v3564, %v3100
        %v3630 = vsel %vm1745, %v3566, %v3102
        %v3632 = vsel %vm1745, %v3568, %v3104
        %v3634 = vsel %vm1745, %v3570, %v3106
        %v3636 = vsel %vm1745, %v3572, %v3108
        %v3638 = vsel %vm1745, %v3574, %v3110
        %v3640 = vsel %vm1745, %v3576, %v3112
        %v3642 = vsel %vm1745, %v3578, %v3114
        %v3644 = vsel %vm1745, %v3580, %v3116
        %v3646 = vsel %vm1745, %v3582, %v3118
        %v3648 = vsel %vm1745, %v3584, %v3120
        %v3650 = vsel %vm1875, %v3586, %v3135
        %v3652 = vsel %vm1875, %v3588, %v3137
        %v3654 = vsel %vm1875, %v3590, %v3139
        %v3656 = vsel %vm1875, %v3592, %v3141
        %v3658 = vsel %vm1875, %v3594, %v3143
        %v3660 = vsel %vm1875, %v3596, %v3145
        %v3662 = vsel %vm1875, %v3598, %v3147
        %v3664 = vsel %vm1875, %v3600, %v3149
        %v3666 = vsel %vm1875, %v3602, %v3151
        %v3668 = vsel %vm1875, %v3604, %v3153
        %v3670 = vsel %vm1875, %v3606, %v3155
        %v3672 = vsel %vm1875, %v3608, %v3157
        %v3674 = vsel %vm1875, %v3610, %v3159
        %v3676 = vsel %vm1875, %v3612, %v3161
        %v3678 = vsel %vm1875, %v3614, %v3163
        %v3680 = vsel %vm1875, %v3616, %v3165
        %v3682 = vsel %vm1875, %v3618, %v3167
        %v3684 = vsel %vm1875, %v3620, %v3169
        %v3686 = vsel %vm1875, %v3622, %v3171
        %v3688 = vsel %vm1875, %v3624, %v3173
        %v3690 = vsel %vm1875, %v3626, %v3175
        %v3692 = vsel %vm1875, %v3628, %v3177
        %v3694 = vsel %vm1875, %v3630, %v3179
        %v3696 = vsel %vm1875, %v3632, %v3181
        %v3698 = vsel %vm1875, %v3634, %v3183
        %v3700 = vsel %vm1875, %v3636, %v3185
        %v3702 = vsel %vm1875, %v3638, %v3187
        %v3704 = vsel %vm1875, %v3640, %v3189
        %v3706 = vsel %vm1875, %v3642, %v3191
        %v3708 = vsel %vm1875, %v3644, %v3193
        %v3710 = vsel %vm1875, %v3646, %v3195
        %v3712 = vsel %vm1875, %v3648, %v3197
        %vm3713 = vcmask 326656
        %v3715 = vsel %vm3713, %v3650, %v3202
        %v3717 = vsel %vm3713, %v3652, %v3204
        %v3719 = vsel %vm3713, %v3654, %v3206
        %v3721 = vsel %vm3713, %v3656, %v3208
        %v3723 = vsel %vm3713, %v3658, %v3210
        %v3725 = vsel %vm3713, %v3660, %v3212
        %v3727 = vsel %vm3713, %v3662, %v3214
        %v3729 = vsel %vm3713, %v3664, %v3216
        %v3731 = vsel %vm3713, %v3666, %v3218
        %v3733 = vsel %vm3713, %v3668, %v3220
        %v3735 = vsel %vm3713, %v3670, %v3222
        %v3737 = vsel %vm3713, %v3672, %v3224
        %v3739 = vsel %vm3713, %v3674, %v3226
        %v3741 = vsel %vm3713, %v3676, %v3228
        %v3743 = vsel %vm3713, %v3678, %v3230
        %v3745 = vsel %vm3713, %v3680, %v3232
        %v3747 = vsel %vm3713, %v3682, %v3234
        %v3749 = vsel %vm3713, %v3684, %v3236
        %v3751 = vsel %vm3713, %v3686, %v3238
        %v3753 = vsel %vm3713, %v3688, %v3240
        %v3755 = vsel %vm3713, %v3690, %v3242
        %v3757 = vsel %vm3713, %v3692, %v3244
        %v3759 = vsel %vm3713, %v3694, %v3246
        %v3761 = vsel %vm3713, %v3696, %v3248
        %v3763 = vsel %vm3713, %v3698, %v3250
        %v3765 = vsel %vm3713, %v3700, %v3252
        %v3767 = vsel %vm3713, %v3702, %v3254
        %v3769 = vsel %vm3713, %v3704, %v3256
        %v3771 = vsel %vm3713, %v3706, %v3258
        %v3773 = vsel %vm3713, %v3708, %v3260
        %v3775 = vsel %vm3713, %v3710, %v3262
        %v3777 = vsel %vm3713, %v3712, %v3264
        %vm3778 = vcmask 392192
        %v3780 = vsel %vm3778, %v3715, %v3266
        %v3782 = vsel %vm3778, %v3717, %v3268
        %v3784 = vsel %vm3778, %v3719, %v3270
        %v3786 = vsel %vm3778, %v3721, %v3272
        %v3788 = vsel %vm3778, %v3723, %v3274
        %v3790 = vsel %vm3778, %v3725, %v3276
        %v3792 = vsel %vm3778, %v3727, %v3278
        %v3794 = vsel %vm3778, %v3729, %v3280
        %v3796 = vsel %vm3778, %v3731, %v3282
        %v3798 = vsel %vm3778, %v3733, %v3284
        %v3800 = vsel %vm3778, %v3735, %v3286
        %v3802 = vsel %vm3778, %v3737, %v3288
        %v3804 = vsel %vm3778, %v3739, %v3290
        %v3806 = vsel %vm3778, %v3741, %v3292
        %v3808 = vsel %vm3778, %v3743, %v3294
        %v3810 = vsel %vm3778, %v3745, %v3296
        %v3812 = vsel %vm3778, %v3747, %v3298
        %v3814 = vsel %vm3778, %v3749, %v3300
        %v3816 = vsel %vm3778, %v3751, %v3302
        %v3818 = vsel %vm3778, %v3753, %v3304
        %v3820 = vsel %vm3778, %v3755, %v3306
        %v3822 = vsel %vm3778, %v3757, %v3308
        %v3824 = vsel %vm3778, %v3759, %v3310
        %v3826 = vsel %vm3778, %v3761, %v3312
        %v3828 = vsel %vm3778, %v3763, %v3314
        %v3830 = vsel %vm3778, %v3765, %v3316
        %v3832 = vsel %vm3778, %v3767, %v3318
        %v3834 = vsel %vm3778, %v3769, %v3320
        %v3836 = vsel %vm3778, %v3771, %v3322
        %v3838 = vsel %vm3778, %v3773, %v3324
        %v3840 = vsel %vm3778, %v3775, %v3326
        %v3842 = vsel %vm3778, %v3777, %v3328
        %vm3843 = vcmask 457728
        %v3845 = vsel %vm3843, %v3780, %v3330
        %v3847 = vsel %vm3843, %v3782, %v3332
        %v3849 = vsel %vm3843, %v3784, %v3334
        %v3851 = vsel %vm3843, %v3786, %v3336
        %v3853 = vsel %vm3843, %v3788, %v3338
        %v3855 = vsel %vm3843, %v3790, %v3340
        %v3857 = vsel %vm3843, %v3792, %v3342
        %v3859 = vsel %vm3843, %v3794, %v3344
        %v3861 = vsel %vm3843, %v3796, %v3346
        %v3863 = vsel %vm3843, %v3798, %v3348
        %v3865 = vsel %vm3843, %v3800, %v3350
        %v3867 = vsel %vm3843, %v3802, %v3352
        %v3869 = vsel %vm3843, %v3804, %v3354
        %v3871 = vsel %vm3843, %v3806, %v3356
        %v3873 = vsel %vm3843, %v3808, %v3358
        %v3875 = vsel %vm3843, %v3810, %v3360
        %v3877 = vsel %vm3843, %v3812, %v3362
        %v3879 = vsel %vm3843, %v3814, %v3364
        %v3881 = vsel %vm3843, %v3816, %v3366
        %v3883 = vsel %vm3843, %v3818, %v3368
        %v3885 = vsel %vm3843, %v3820, %v3370
        %v3887 = vsel %vm3843, %v3822, %v3372
        %v3889 = vsel %vm3843, %v3824, %v3374
        %v3891 = vsel %vm3843, %v3826, %v3376
        %v3893 = vsel %vm3843, %v3828, %v3378
        %v3895 = vsel %vm3843, %v3830, %v3380
        %v3897 = vsel %vm3843, %v3832, %v3382
        %v3899 = vsel %vm3843, %v3834, %v3384
        %v3901 = vsel %vm3843, %v3836, %v3386
        %v3903 = vsel %vm3843, %v3838, %v3388
        %v3905 = vsel %vm3843, %v3840, %v3390
        %v3907 = vsel %vm3843, %v3842, %v3392
        %vm3908 = vcmask 523264
        %v3910 = vsel %vm3908, %v3845, %v3394
        %v3912 = vsel %vm3908, %v3847, %v3396
        %v3914 = vsel %vm3908, %v3849, %v3398
        %v3916 = vsel %vm3908, %v3851, %v3400
        %v3918 = vsel %vm3908, %v3853, %v3402
        %v3920 = vsel %vm3908, %v3855, %v3404
        %v3922 = vsel %vm3908, %v3857, %v3406
        %v3924 = vsel %vm3908, %v3859, %v3408
        %v3926 = vsel %vm3908, %v3861, %v3410
        %v3928 = vsel %vm3908, %v3863, %v3412
        %v3930 = vsel %vm3908, %v3865, %v3414
        %v3932 = vsel %vm3908, %v3867, %v3416
        %v3934 = vsel %vm3908, %v3869, %v3418
        %v3936 = vsel %vm3908, %v3871, %v3420
        %v3938 = vsel %vm3908, %v3873, %v3422
        %v3940 = vsel %vm3908, %v3875, %v3424
        %v3942 = vsel %vm3908, %v3877, %v3426
        %v3944 = vsel %vm3908, %v3879, %v3428
        %v3946 = vsel %vm3908, %v3881, %v3430
        %v3948 = vsel %vm3908, %v3883, %v3432
        %v3950 = vsel %vm3908, %v3885, %v3434
        %v3952 = vsel %vm3908, %v3887, %v3436
        %v3954 = vsel %vm3908, %v3889, %v3438
        %v3956 = vsel %vm3908, %v3891, %v3440
        %v3958 = vsel %vm3908, %v3893, %v3442
        %v3960 = vsel %vm3908, %v3895, %v3444
        %v3962 = vsel %vm3908, %v3897, %v3446
        %v3964 = vsel %vm3908, %v3899, %v3448
        %v3966 = vsel %vm3908, %v3901, %v3450
        %v3968 = vsel %vm3908, %v3903, %v3452
        %v3970 = vsel %vm3908, %v3905, %v3454
        %v3972 = vsel %vm3908, %v3907, %v3456
        %v3973 = vshrl.u32 %v3910, 16
        %v3975 = vrot.slane %v3973, 3
        %v3976 = vshll.u32 %v3910, 16
        %v3978 = vrot.slane %v3976, 4
        %v3979 = vor.u32 %v3975, %v3978
        %v3980 = vshrl.u32 %v3912, 16
        %v3982 = vrot.slane %v3980, 3
        %v3983 = vshll.u32 %v3912, 16
        %v3985 = vrot.slane %v3983, 4
        %v3986 = vor.u32 %v3982, %v3985
        %v3987 = vsel %vm1940, %v3979, %v3986
        %v3988 = vshrl.u32 %v3914, 16
        %v3990 = vrot.slane %v3988, 3
        %v3991 = vshll.u32 %v3914, 16
        %v3993 = vrot.slane %v3991, 4
        %v3994 = vor.u32 %v3990, %v3993
        %v3995 = vshrl.u32 %v3916, 16
        %v3997 = vrot.slane %v3995, 3
        %v3998 = vshll.u32 %v3916, 16
        %v4000 = vrot.slane %v3998, 4
        %v4001 = vor.u32 %v3997, %v4000
        %v4002 = vsel %vm1940, %v3994, %v4001
        %v4003 = vshrl.u32 %v3918, 16
        %v4005 = vrot.slane %v4003, 3
        %v4006 = vshll.u32 %v3918, 16
        %v4008 = vrot.slane %v4006, 4
        %v4009 = vor.u32 %v4005, %v4008
        %v4010 = vshrl.u32 %v3920, 16
        %v4012 = vrot.slane %v4010, 3
        %v4013 = vshll.u32 %v3920, 16
        %v4015 = vrot.slane %v4013, 4
        %v4016 = vor.u32 %v4012, %v4015
        %v4017 = vsel %vm1940, %v4009, %v4016
        %v4018 = vshrl.u32 %v3922, 16
        %v4020 = vrot.slane %v4018, 3
        %v4021 = vshll.u32 %v3922, 16
        %v4023 = vrot.slane %v4021, 4
        %v4024 = vor.u32 %v4020, %v4023
        %v4025 = vshrl.u32 %v3924, 16
        %v4027 = vrot.slane %v4025, 3
        %v4028 = vshll.u32 %v3924, 16
        %v4030 = vrot.slane %v4028, 4
        %v4031 = vor.u32 %v4027, %v4030
        %v4032 = vsel %vm1940, %v4024, %v4031
        %v4033 = vshrl.u32 %v3926, 16
        %v4035 = vrot.slane %v4033, 3
        %v4036 = vshll.u32 %v3926, 16
        %v4038 = vrot.slane %v4036, 4
        %v4039 = vor.u32 %v4035, %v4038
        %v4040 = vshrl.u32 %v3928, 16
        %v4042 = vrot.slane %v4040, 3
        %v4043 = vshll.u32 %v3928, 16
        %v4045 = vrot.slane %v4043, 4
        %v4046 = vor.u32 %v4042, %v4045
        %v4047 = vsel %vm1940, %v4039, %v4046
        %v4048 = vshrl.u32 %v3930, 16
        %v4050 = vrot.slane %v4048, 3
        %v4051 = vshll.u32 %v3930, 16
        %v4053 = vrot.slane %v4051, 4
        %v4054 = vor.u32 %v4050, %v4053
        %v4055 = vshrl.u32 %v3932, 16
        %v4057 = vrot.slane %v4055, 3
        %v4058 = vshll.u32 %v3932, 16
        %v4060 = vrot.slane %v4058, 4
        %v4061 = vor.u32 %v4057, %v4060
        %v4062 = vsel %vm1940, %v4054, %v4061
        %v4063 = vshrl.u32 %v3934, 16
        %v4065 = vrot.slane %v4063, 3
        %v4066 = vshll.u32 %v3934, 16
        %v4068 = vrot.slane %v4066, 4
        %v4069 = vor.u32 %v4065, %v4068
        %v4070 = vshrl.u32 %v3936, 16
        %v4072 = vrot.slane %v4070, 3
        %v4073 = vshll.u32 %v3936, 16
        %v4075 = vrot.slane %v4073, 4
        %v4076 = vor.u32 %v4072, %v4075
        %v4077 = vsel %vm1940, %v4069, %v4076
        %v4078 = vshrl.u32 %v3938, 16
        %v4080 = vrot.slane %v4078, 3
        %v4081 = vshll.u32 %v3938, 16
        %v4083 = vrot.slane %v4081, 4
        %v4084 = vor.u32 %v4080, %v4083
        %v4085 = vshrl.u32 %v3940, 16
        %v4087 = vrot.slane %v4085, 3
        %v4088 = vshll.u32 %v3940, 16
        %v4090 = vrot.slane %v4088, 4
        %v4091 = vor.u32 %v4087, %v4090
        %v4092 = vsel %vm1940, %v4084, %v4091
        %v4093 = vshrl.u32 %v3942, 16
        %v4095 = vrot.slane %v4093, 3
        %v4096 = vshll.u32 %v3942, 16
        %v4098 = vrot.slane %v4096, 4
        %v4099 = vor.u32 %v4095, %v4098
        %v4100 = vshrl.u32 %v3944, 16
        %v4102 = vrot.slane %v4100, 3
        %v4103 = vshll.u32 %v3944, 16
        %v4105 = vrot.slane %v4103, 4
        %v4106 = vor.u32 %v4102, %v4105
        %v4107 = vsel %vm1940, %v4099, %v4106
        %v4108 = vshrl.u32 %v3946, 16
        %v4110 = vrot.slane %v4108, 3
        %v4111 = vshll.u32 %v3946, 16
        %v4113 = vrot.slane %v4111, 4
        %v4114 = vor.u32 %v4110, %v4113
        %v4115 = vshrl.u32 %v3948, 16
        %v4117 = vrot.slane %v4115, 3
        %v4118 = vshll.u32 %v3948, 16
        %v4120 = vrot.slane %v4118, 4
        %v4121 = vor.u32 %v4117, %v4120
        %v4122 = vsel %vm1940, %v4114, %v4121
        %v4123 = vshrl.u32 %v3950, 16
        %v4125 = vrot.slane %v4123, 3
        %v4126 = vshll.u32 %v3950, 16
        %v4128 = vrot.slane %v4126, 4
        %v4129 = vor.u32 %v4125, %v4128
        %v4130 = vshrl.u32 %v3952, 16
        %v4132 = vrot.slane %v4130, 3
        %v4133 = vshll.u32 %v3952, 16
        %v4135 = vrot.slane %v4133, 4
        %v4136 = vor.u32 %v4132, %v4135
        %v4137 = vsel %vm1940, %v4129, %v4136
        %v4138 = vshrl.u32 %v3954, 16
        %v4140 = vrot.slane %v4138, 3
        %v4141 = vshll.u32 %v3954, 16
        %v4143 = vrot.slane %v4141, 4
        %v4144 = vor.u32 %v4140, %v4143
        %v4145 = vshrl.u32 %v3956, 16
        %v4147 = vrot.slane %v4145, 3
        %v4148 = vshll.u32 %v3956, 16
        %v4150 = vrot.slane %v4148, 4
        %v4151 = vor.u32 %v4147, %v4150
        %v4152 = vsel %vm1940, %v4144, %v4151
        %v4153 = vshrl.u32 %v3958, 16
        %v4155 = vrot.slane %v4153, 3
        %v4156 = vshll.u32 %v3958, 16
        %v4158 = vrot.slane %v4156, 4
        %v4159 = vor.u32 %v4155, %v4158
        %v4160 = vshrl.u32 %v3960, 16
        %v4162 = vrot.slane %v4160, 3
        %v4163 = vshll.u32 %v3960, 16
        %v4165 = vrot.slane %v4163, 4
        %v4166 = vor.u32 %v4162, %v4165
        %v4167 = vsel %vm1940, %v4159, %v4166
        %v4168 = vshrl.u32 %v3962, 16
        %v4170 = vrot.slane %v4168, 3
        %v4171 = vshll.u32 %v3962, 16
        %v4173 = vrot.slane %v4171, 4
        %v4174 = vor.u32 %v4170, %v4173
        %v4175 = vshrl.u32 %v3964, 16
        %v4177 = vrot.slane %v4175, 3
        %v4178 = vshll.u32 %v3964, 16
        %v4180 = vrot.slane %v4178, 4
        %v4181 = vor.u32 %v4177, %v4180
        %v4182 = vsel %vm1940, %v4174, %v4181
        %v4183 = vshrl.u32 %v3966, 16
        %v4185 = vrot.slane %v4183, 3
        %v4186 = vshll.u32 %v3966, 16
        %v4188 = vrot.slane %v4186, 4
        %v4189 = vor.u32 %v4185, %v4188
        %v4190 = vshrl.u32 %v3968, 16
        %v4192 = vrot.slane %v4190, 3
        %v4193 = vshll.u32 %v3968, 16
        %v4195 = vrot.slane %v4193, 4
        %v4196 = vor.u32 %v4192, %v4195
        %v4197 = vsel %vm1940, %v4189, %v4196
        %v4198 = vshrl.u32 %v3970, 16
        %v4200 = vrot.slane %v4198, 3
        %v4201 = vshll.u32 %v3970, 16
        %v4203 = vrot.slane %v4201, 4
        %v4204 = vor.u32 %v4200, %v4203
        %v4205 = vshrl.u32 %v3972, 16
        %v4207 = vrot.slane %v4205, 3
        %v4208 = vshll.u32 %v3972, 16
        %v4210 = vrot.slane %v4208, 4
        %v4211 = vor.u32 %v4207, %v4210
        %v4212 = vsel %vm1940, %v4204, %v4211
        %v4222 = vunpack.c.l.b16 %v2566
        %v4223 = vunpack.c.l.b16 %v2567
        %v4224 = vunpack.c.l.b16 %v2568
        %v4225 = vunpack.c.l.b16 %v2569
        %v4226 = vunpack.c.l.b16 %v2570
        %v4227 = vunpack.c.l.b16 %v2571
        %v4228 = vunpack.c.l.b16 %v2572
        %v4229 = vunpack.c.l.b16 %v2573
        %v4230 = vunpack.c.l.b16 %v2574
        %v4231 = vpack.c.b16 %v4223, %v4222
        %v4232 = vpack.c.b16 %v4225, %v4224
        %v4233 = vpack.c.b16 %v4227, %v4226
        %v4234 = vpack.c.b16 %v4229, %v4228
        %v4235 = vpack.c.b16 %v4230, %v4230
        %vm4240 = vcmask 588800
        %v4242 = vsel %vm4240, %v3987, 0
        %v4245 = vsel %vm4240, %v4002, 0
        %v4248 = vsel %vm4240, %v4017, 0
        %v4251 = vsel %vm4240, %v4032, 0
        %v4254 = vsel %vm4240, %v4047, 0
        %v4257 = vsel %vm4240, %v4062, 0
        %v4260 = vsel %vm4240, %v4077, 0
        %v4263 = vsel %vm4240, %v4092, 0
        %v4266 = vsel %vm4240, %v4107, 0
        %v4269 = vsel %vm4240, %v4122, 0
        %v4272 = vsel %vm4240, %v4137, 0
        %v4275 = vsel %vm4240, %v4152, 0
        %v4278 = vsel %vm4240, %v4167, 0
        %v4281 = vsel %vm4240, %v4182, 0
        %v4284 = vsel %vm4240, %v4197, 0
        %v4287 = vsel %vm4240, %v4212, 0
        %v4290 = vsel %vm547, %v4235, 0
        %4292 = vmatprep.subr.bf16.mxu0 0
        %4293 = vmatpush1.bf16.msra.mxu0 %v4231
        %4294 = vmatprep.subr.bf16.mxu0 0
        %4295 = vmatpush1.bf16.msra.mxu0 %v4232
        %4296 = vmatprep.subr.bf16.mxu0 0
        %4297 = vmatpush1.bf16.msra.mxu0 %v4233
        %4298 = vmatprep.subr.bf16.mxu0 0
        %4299 = vmatpush1.bf16.msra.mxu0 %v4234
        %4300 = vmatprep.subr.bf16.mxu0 0
        %4301 = vmatpush1.bf16.msra.mxu0 %v4290
        %4302 = vmatprep.subr.bf16.mxu0 0
        %4303 = vmatpush1.bf16.msra.mxu0 0
        %4304 = vmatprep.subr.bf16.mxu0 0
        %4305 = vmatpush1.bf16.msra.mxu0 0
        %4306 = vmatprep.subr.bf16.mxu0 0
        %4307 = vmatpush1.bf16.msra.mxu0 0
        %4308 = vmatprep.subr.bf16.mxu0 0
        %4309 = vmatpush1.bf16.msra.mxu0 0
        %4310 = vmatprep.subr.bf16.mxu0 0
        %4311 = vmatpush1.bf16.msra.mxu0 0
        %4312 = vmatprep.subr.bf16.mxu0 0
        %4313 = vmatpush1.bf16.msra.mxu0 0
        %4314 = vmatprep.subr.bf16.mxu0 0
        %4315 = vmatpush1.bf16.msra.mxu0 0
        %4316 = vmatprep.subr.bf16.mxu0 0
        %4317 = vmatpush1.bf16.msra.mxu0 0
        %4318 = vmatprep.subr.bf16.mxu0 0
        %4319 = vmatpush1.bf16.msra.mxu0 0
        %4320 = vmatprep.subr.bf16.mxu0 0
        %4321 = vmatpush1.bf16.msra.mxu0 0
        %4322 = vmatprep.subr.bf16.mxu0 0
        %4323 = vmatpush1.bf16.msra.mxu0 0
        %4324 = vmatprep.mubr.bf16.mxu0 0
        %4325 = vmatmul.mubr.bf16.gmra.mrb[0].mxu0 %v4242
        %v4326 = vpop.f32.mrb[0].mxu0
        %v4327 = vadd.f32 0.0, %v4326
        %v4328 = vpop.f32.mrb[0].mxu0
        %v4329 = vpop.f32.mrb[0].mxu0
        %v4330 = vadd.f32 0.0, %v4329
        %v4331 = vpop.f32.mrb[0].mxu0
        %4332 = vmatprep.mubr.bf16.mxu0 0
        %4333 = vmatmul.mubr.bf16.gmra.mrb[0].mxu0 %v4245
        %v4334 = vpop.f32.mrb[0].mxu0
        %v4335 = vadd.f32 0.0, %v4334
        %v4336 = vpop.f32.mrb[0].mxu0
        %v4337 = vpop.f32.mrb[0].mxu0
        %v4338 = vadd.f32 0.0, %v4337
        %v4339 = vpop.f32.mrb[0].mxu0
        %4340 = vmatprep.mubr.bf16.mxu0 0
        %4341 = vmatmul.mubr.bf16.gmra.mrb[0].mxu0 %v4248
        %v4342 = vpop.f32.mrb[0].mxu0
        %v4343 = vadd.f32 0.0, %v4342
        %v4344 = vpop.f32.mrb[0].mxu0
        %v4345 = vpop.f32.mrb[0].mxu0
        %v4346 = vadd.f32 0.0, %v4345
        %v4347 = vpop.f32.mrb[0].mxu0
        %4348 = vmatprep.mubr.bf16.mxu0 0
        %4349 = vmatmul.mubr.bf16.gmra.mrb[0].mxu0 %v4251
        %v4350 = vpop.f32.mrb[0].mxu0
        %v4351 = vadd.f32 0.0, %v4350
        %v4352 = vpop.f32.mrb[0].mxu0
        %v4353 = vpop.f32.mrb[0].mxu0
        %v4354 = vadd.f32 0.0, %v4353
        %v4355 = vpop.f32.mrb[0].mxu0
        %4356 = vmatprep.mubr.bf16.mxu0 0
        %4357 = vmatmul.mubr.bf16.gmra.mrb[0].mxu0 %v4254
        %v4358 = vpop.f32.mrb[0].mxu0
        %v4359 = vadd.f32 0.0, %v4358
        %v4360 = vpop.f32.mrb[0].mxu0
        %v4361 = vpop.f32.mrb[0].mxu0
        %v4362 = vadd.f32 0.0, %v4361
        %v4363 = vpop.f32.mrb[0].mxu0
        %4364 = vmatprep.mubr.bf16.mxu0 0
        %4365 = vmatmul.mubr.bf16.gmra.mrb[0].mxu0 %v4257
        %v4366 = vpop.f32.mrb[0].mxu0
        %v4367 = vadd.f32 0.0, %v4366
        %v4368 = vpop.f32.mrb[0].mxu0
        %v4369 = vpop.f32.mrb[0].mxu0
        %v4370 = vadd.f32 0.0, %v4369
        %v4371 = vpop.f32.mrb[0].mxu0
        %4372 = vmatprep.mubr.bf16.mxu0 0
        %4373 = vmatmul.mubr.bf16.gmra.mrb[0].mxu0 %v4260
        %v4374 = vpop.f32.mrb[0].mxu0
        %v4375 = vadd.f32 0.0, %v4374
        %v4376 = vpop.f32.mrb[0].mxu0
        %v4377 = vpop.f32.mrb[0].mxu0
        %v4378 = vadd.f32 0.0, %v4377
        %v4379 = vpop.f32.mrb[0].mxu0
        %4380 = vmatprep.mubr.bf16.mxu0 0
        %4381 = vmatmul.mubr.bf16.gmra.mrb[0].mxu0 %v4263
        %v4382 = vpop.f32.mrb[0].mxu0
        %v4383 = vadd.f32 0.0, %v4382
        %v4384 = vpop.f32.mrb[0].mxu0
        %v4385 = vpop.f32.mrb[0].mxu0
        %v4386 = vadd.f32 0.0, %v4385
        %v4387 = vpop.f32.mrb[0].mxu0
        %4388 = vmatprep.mubr.bf16.mxu0 0
        %4389 = vmatmul.mubr.bf16.gmra.mrb[0].mxu0 %v4266
        %v4390 = vpop.f32.mrb[0].mxu0
        %v4391 = vadd.f32 0.0, %v4390
        %v4392 = vpop.f32.mrb[0].mxu0
        %v4393 = vpop.f32.mrb[0].mxu0
        %v4394 = vadd.f32 0.0, %v4393
        %v4395 = vpop.f32.mrb[0].mxu0
        %4396 = vmatprep.mubr.bf16.mxu0 0
        %4397 = vmatmul.mubr.bf16.gmra.mrb[0].mxu0 %v4269
        %v4398 = vpop.f32.mrb[0].mxu0
        %v4399 = vadd.f32 0.0, %v4398
        %v4400 = vpop.f32.mrb[0].mxu0
        %v4401 = vpop.f32.mrb[0].mxu0
        %v4402 = vadd.f32 0.0, %v4401
        %v4403 = vpop.f32.mrb[0].mxu0
        %4404 = vmatprep.mubr.bf16.mxu0 0
        %4405 = vmatmul.mubr.bf16.gmra.mrb[0].mxu0 %v4272
        %v4406 = vpop.f32.mrb[0].mxu0
        %v4407 = vadd.f32 0.0, %v4406
        %v4408 = vpop.f32.mrb[0].mxu0
        %v4409 = vpop.f32.mrb[0].mxu0
        %v4410 = vadd.f32 0.0, %v4409
        %v4411 = vpop.f32.mrb[0].mxu0
        %4412 = vmatprep.mubr.bf16.mxu0 0
        %4413 = vmatmul.mubr.bf16.gmra.mrb[0].mxu0 %v4275
        %v4414 = vpop.f32.mrb[0].mxu0
        %v4415 = vadd.f32 0.0, %v4414
        %v4416 = vpop.f32.mrb[0].mxu0
        %v4417 = vpop.f32.mrb[0].mxu0
        %v4418 = vadd.f32 0.0, %v4417
        %v4419 = vpop.f32.mrb[0].mxu0
        %4420 = vmatprep.mubr.bf16.mxu0 0
        %4421 = vmatmul.mubr.bf16.gmra.mrb[0].mxu0 %v4278
        %v4422 = vpop.f32.mrb[0].mxu0
        %v4423 = vadd.f32 0.0, %v4422
        %v4424 = vpop.f32.mrb[0].mxu0
        %v4425 = vpop.f32.mrb[0].mxu0
        %v4426 = vadd.f32 0.0, %v4425
        %v4427 = vpop.f32.mrb[0].mxu0
        %4428 = vmatprep.mubr.bf16.mxu0 0
        %4429 = vmatmul.mubr.bf16.gmra.mrb[0].mxu0 %v4281
        %v4430 = vpop.f32.mrb[0].mxu0
        %v4431 = vadd.f32 0.0, %v4430
        %v4432 = vpop.f32.mrb[0].mxu0
        %v4433 = vpop.f32.mrb[0].mxu0
        %v4434 = vadd.f32 0.0, %v4433
        %v4435 = vpop.f32.mrb[0].mxu0
        %4436 = vmatprep.mubr.bf16.mxu0 0
        %4437 = vmatmul.mubr.bf16.gmra.mrb[0].mxu0 %v4284
        %v4438 = vpop.f32.mrb[0].mxu0
        %v4439 = vadd.f32 0.0, %v4438
        %v4440 = vpop.f32.mrb[0].mxu0
        %v4441 = vpop.f32.mrb[0].mxu0
        %v4442 = vadd.f32 0.0, %v4441
        %v4443 = vpop.f32.mrb[0].mxu0
        %4444 = vmatprep.mubr.bf16.mxu0 0
        %4445 = vmatmul.mubr.bf16.gmra.mrb[0].mxu0 %v4287
        %v4446 = vpop.f32.mrb[0].mxu0
        %v4447 = vadd.f32 0.0, %v4446
        %v4448 = vpop.f32.mrb[0].mxu0
        %v4449 = vpop.f32.mrb[0].mxu0
        %v4450 = vadd.f32 0.0, %v4449
        %v4451 = vpop.f32.mrb[0].mxu0
        %4452 = vdwg.mxu0
        %v4454 = vlaneseq
        %v4455 = vshrl.u32 %v4454, 7
        %v4456 = vsub.s32 0, %v4455
        %v4457 = vrot.slane %v2575, %v4456
        %v4459 = vmul.f32 %v4327, %v4457
        %v4460 = vmul.f32 %v4330, %v4457
        %v4461 = vmul.f32 %v4335, %v4457
        %v4462 = vmul.f32 %v4338, %v4457
        %v4463 = vmul.f32 %v4343, %v4457
        %v4464 = vmul.f32 %v4346, %v4457
        %v4465 = vmul.f32 %v4351, %v4457
        %v4466 = vmul.f32 %v4354, %v4457
        %v4467 = vmul.f32 %v4359, %v4457
        %v4468 = vmul.f32 %v4362, %v4457
        %v4469 = vmul.f32 %v4367, %v4457
        %v4470 = vmul.f32 %v4370, %v4457
        %v4471 = vmul.f32 %v4375, %v4457
        %v4472 = vmul.f32 %v4378, %v4457
        %v4473 = vmul.f32 %v4383, %v4457
        %v4474 = vmul.f32 %v4386, %v4457
        %v4475 = vmul.f32 %v4391, %v4457
        %v4476 = vmul.f32 %v4394, %v4457
        %v4477 = vmul.f32 %v4399, %v4457
        %v4478 = vmul.f32 %v4402, %v4457
        %v4479 = vmul.f32 %v4407, %v4457
        %v4480 = vmul.f32 %v4410, %v4457
        %v4481 = vmul.f32 %v4415, %v4457
        %v4482 = vmul.f32 %v4418, %v4457
        %v4483 = vmul.f32 %v4423, %v4457
        %v4484 = vmul.f32 %v4426, %v4457
        %v4485 = vmul.f32 %v4431, %v4457
        %v4486 = vmul.f32 %v4434, %v4457
        %v4487 = vmul.f32 %v4439, %v4457
        %v4488 = vmul.f32 %v4442, %v4457
        %v4489 = vmul.f32 %v4447, %v4457
        %v4490 = vmul.f32 %v4450, %v4457
        %v4492 = vlaneseq
        %v4493 = vshrl.u32 %v4492, 7
        %v4494 = vsub.s32 0, %v4493
        %v4495 = vrot.slane %v2576, %v4494
        %v4497 = vadd.f32 %v4459, %v4495
        %v4498 = vadd.f32 %v4460, %v4495
        %v4499 = vadd.f32 %v4461, %v4495
        %v4500 = vadd.f32 %v4462, %v4495
        %v4501 = vadd.f32 %v4463, %v4495
        %v4502 = vadd.f32 %v4464, %v4495
        %v4503 = vadd.f32 %v4465, %v4495
        %v4504 = vadd.f32 %v4466, %v4495
        %v4505 = vadd.f32 %v4467, %v4495
        %v4506 = vadd.f32 %v4468, %v4495
        %v4507 = vadd.f32 %v4469, %v4495
        %v4508 = vadd.f32 %v4470, %v4495
        %v4509 = vadd.f32 %v4471, %v4495
        %v4510 = vadd.f32 %v4472, %v4495
        %v4511 = vadd.f32 %v4473, %v4495
        %v4512 = vadd.f32 %v4474, %v4495
        %v4513 = vadd.f32 %v4475, %v4495
        %v4514 = vadd.f32 %v4476, %v4495
        %v4515 = vadd.f32 %v4477, %v4495
        %v4516 = vadd.f32 %v4478, %v4495
        %v4517 = vadd.f32 %v4479, %v4495
        %v4518 = vadd.f32 %v4480, %v4495
        %v4519 = vadd.f32 %v4481, %v4495
        %v4520 = vadd.f32 %v4482, %v4495
        %v4521 = vadd.f32 %v4483, %v4495
        %v4522 = vadd.f32 %v4484, %v4495
        %v4523 = vadd.f32 %v4485, %v4495
        %v4524 = vadd.f32 %v4486, %v4495
        %v4525 = vadd.f32 %v4487, %v4495
        %v4526 = vadd.f32 %v4488, %v4495
        %v4527 = vadd.f32 %v4489, %v4495
        %v4528 = vadd.f32 %v4490, %v4495
        %v4529 = vmax.f32 %v4497, 0.0
        %v4530 = vmax.f32 %v4498, 0.0
        %v4531 = vmax.f32 %v4499, 0.0
        %v4532 = vmax.f32 %v4500, 0.0
        %v4533 = vmax.f32 %v4501, 0.0
        %v4534 = vmax.f32 %v4502, 0.0
        %v4535 = vmax.f32 %v4503, 0.0
        %v4536 = vmax.f32 %v4504, 0.0
        %v4537 = vmax.f32 %v4505, 0.0
        %v4538 = vmax.f32 %v4506, 0.0
        %v4539 = vmax.f32 %v4507, 0.0
        %v4540 = vmax.f32 %v4508, 0.0
        %v4541 = vmax.f32 %v4509, 0.0
        %v4542 = vmax.f32 %v4510, 0.0
        %v4543 = vmax.f32 %v4511, 0.0
        %v4544 = vmax.f32 %v4512, 0.0
        %v4545 = vmax.f32 %v4513, 0.0
        %v4546 = vmax.f32 %v4514, 0.0
        %v4547 = vmax.f32 %v4515, 0.0
        %v4548 = vmax.f32 %v4516, 0.0
        %v4549 = vmax.f32 %v4517, 0.0
        %v4550 = vmax.f32 %v4518, 0.0
        %v4551 = vmax.f32 %v4519, 0.0
        %v4552 = vmax.f32 %v4520, 0.0
        %v4553 = vmax.f32 %v4521, 0.0
        %v4554 = vmax.f32 %v4522, 0.0
        %v4555 = vmax.f32 %v4523, 0.0
        %v4556 = vmax.f32 %v4524, 0.0
        %v4557 = vmax.f32 %v4525, 0.0
        %v4558 = vmax.f32 %v4526, 0.0
        %v4559 = vmax.f32 %v4527, 0.0
        %v4560 = vmax.f32 %v4528, 0.0
        %4561 = vst.msk [vmem:[%s408] sm:$0xff] %vm1485, %v4529
        %4562 = vst.msk [vmem:[%s408 + $0x8] sm:$0xff] %vm1485, %v4530
        %4563 = vst.msk [vmem:[%s408 + $0x10] sm:$0xff] %vm1485, %v4531
        %4564 = vst.msk [vmem:[%s408 + $0x18] sm:$0xff] %vm1485, %v4532
        %4565 = vst.msk [vmem:[%s408 + $0x20] sm:$0xff] %vm1485, %v4533
        %4566 = vst.msk [vmem:[%s408 + $0x28] sm:$0xff] %vm1485, %v4534
        %4567 = vst.msk [vmem:[%s408 + $0x30] sm:$0xff] %vm1485, %v4535
        %4568 = vst.msk [vmem:[%s408 + $0x38] sm:$0xff] %vm1485, %v4536
        %4569 = vst.msk [vmem:[%s408 + $0x40] sm:$0xff] %vm1485, %v4537
        %4570 = vst.msk [vmem:[%s408 + $0x48] sm:$0xff] %vm1485, %v4538
        %4571 = vst.msk [vmem:[%s408 + $0x50] sm:$0xff] %vm1485, %v4539
        %4572 = vst.msk [vmem:[%s408 + $0x58] sm:$0xff] %vm1485, %v4540
        %4573 = vst.msk [vmem:[%s408 + $0x60] sm:$0xff] %vm1485, %v4541
        %4574 = vst.msk [vmem:[%s408 + $0x68] sm:$0xff] %vm1485, %v4542
        %4575 = vst.msk [vmem:[%s408 + $0x70] sm:$0xff] %vm1485, %v4543
        %4576 = vst.msk [vmem:[%s408 + $0x78] sm:$0xff] %vm1485, %v4544
        %4577 = vst.msk [vmem:[%s408 + $0x80] sm:$0xff] %vm1485, %v4545
        %4578 = vst.msk [vmem:[%s408 + $0x88] sm:$0xff] %vm1485, %v4546
        %4579 = vst.msk [vmem:[%s408 + $0x90] sm:$0xff] %vm1485, %v4547
        %4580 = vst.msk [vmem:[%s408 + $0x98] sm:$0xff] %vm1485, %v4548
        %4581 = vst.msk [vmem:[%s408 + $0xa0] sm:$0xff] %vm1485, %v4549
        %4582 = vst.msk [vmem:[%s408 + $0xa8] sm:$0xff] %vm1485, %v4550
        %4583 = vst.msk [vmem:[%s408 + $0xb0] sm:$0xff] %vm1485, %v4551
        %4584 = vst.msk [vmem:[%s408 + $0xb8] sm:$0xff] %vm1485, %v4552
        %4585 = vst.msk [vmem:[%s408 + $0xc0] sm:$0xff] %vm1485, %v4553
        %4586 = vst.msk [vmem:[%s408 + $0xc8] sm:$0xff] %vm1485, %v4554
        %4587 = vst.msk [vmem:[%s408 + $0xd0] sm:$0xff] %vm1485, %v4555
        %4588 = vst.msk [vmem:[%s408 + $0xd8] sm:$0xff] %vm1485, %v4556
        %4589 = vst.msk [vmem:[%s408 + $0xe0] sm:$0xff] %vm1485, %v4557
        %4590 = vst.msk [vmem:[%s408 + $0xe8] sm:$0xff] %vm1485, %v4558
        %4591 = vst.msk [vmem:[%s408 + $0xf0] sm:$0xff] %vm1485, %v4559
        %4592 = vst.msk [vmem:[%s408 + $0xf8] sm:$0xff] %vm1485, %v4560
        %v4593 = vsel %vm1485, %v4529, 0.0
        %v4594 = vsel %vm1485, %v4530, 0.0
        %v4595 = vadd.f32 %v4593, %v4594
        %v4596 = vsel %vm1485, %v4531, 0.0
        %v4597 = vadd.f32 %v4595, %v4596
        %v4598 = vsel %vm1485, %v4532, 0.0
        %v4599 = vadd.f32 %v4597, %v4598
        %v4600 = vsel %vm1485, %v4533, 0.0
        %v4601 = vadd.f32 %v4599, %v4600
        %v4602 = vsel %vm1485, %v4534, 0.0
        %v4603 = vadd.f32 %v4601, %v4602
        %v4604 = vsel %vm1485, %v4535, 0.0
        %v4605 = vadd.f32 %v4603, %v4604
        %v4606 = vsel %vm1485, %v4536, 0.0
        %v4607 = vadd.f32 %v4605, %v4606
        %v4608 = vsel %vm1485, %v4537, 0.0
        %v4609 = vadd.f32 %v4607, %v4608
        %v4610 = vsel %vm1485, %v4538, 0.0
        %v4611 = vadd.f32 %v4609, %v4610
        %v4612 = vsel %vm1485, %v4539, 0.0
        %v4613 = vadd.f32 %v4611, %v4612
        %v4614 = vsel %vm1485, %v4540, 0.0
        %v4615 = vadd.f32 %v4613, %v4614
        %v4616 = vsel %vm1485, %v4541, 0.0
        %v4617 = vadd.f32 %v4615, %v4616
        %v4618 = vsel %vm1485, %v4542, 0.0
        %v4619 = vadd.f32 %v4617, %v4618
        %v4620 = vsel %vm1485, %v4543, 0.0
        %v4621 = vadd.f32 %v4619, %v4620
        %v4622 = vsel %vm1485, %v4544, 0.0
        %v4623 = vadd.f32 %v4621, %v4622
        %v4624 = vsel %vm1485, %v4545, 0.0
        %v4625 = vadd.f32 %v4623, %v4624
        %v4626 = vsel %vm1485, %v4546, 0.0
        %v4627 = vadd.f32 %v4625, %v4626
        %v4628 = vsel %vm1485, %v4547, 0.0
        %v4629 = vadd.f32 %v4627, %v4628
        %v4630 = vsel %vm1485, %v4548, 0.0
        %v4631 = vadd.f32 %v4629, %v4630
        %v4632 = vsel %vm1485, %v4549, 0.0
        %v4633 = vadd.f32 %v4631, %v4632
        %v4634 = vsel %vm1485, %v4550, 0.0
        %v4635 = vadd.f32 %v4633, %v4634
        %v4636 = vsel %vm1485, %v4551, 0.0
        %v4637 = vadd.f32 %v4635, %v4636
        %v4638 = vsel %vm1485, %v4552, 0.0
        %v4639 = vadd.f32 %v4637, %v4638
        %v4640 = vsel %vm1485, %v4553, 0.0
        %v4641 = vadd.f32 %v4639, %v4640
        %v4642 = vsel %vm1485, %v4554, 0.0
        %v4643 = vadd.f32 %v4641, %v4642
        %v4644 = vsel %vm1485, %v4555, 0.0
        %v4645 = vadd.f32 %v4643, %v4644
        %v4646 = vsel %vm1485, %v4556, 0.0
        %v4647 = vadd.f32 %v4645, %v4646
        %v4648 = vsel %vm1485, %v4557, 0.0
        %v4649 = vadd.f32 %v4647, %v4648
        %v4650 = vsel %vm1485, %v4558, 0.0
        %v4651 = vadd.f32 %v4649, %v4650
        %v4652 = vsel %vm1485, %v4559, 0.0
        %v4653 = vadd.f32 %v4651, %v4652
        %v4654 = vsel %vm1485, %v4560, 0.0
        %v4655 = vadd.f32 %v4653, %v4654
        %v4656 = vrot.slane %v4655, 4
        %v4657 = vadd.f32 %v4655, %v4656
        %v4658 = vrot.slane %v4657, 2
        %v4659 = vadd.f32 %v4657, %v4658
        %v4660 = vrot.slane %v4659, 1
        %v4661 = vadd.f32 %v4659, %v4660
        %v4662 = vpack.c.bf16 %v4661, %v4661
        %v4663 = vld [vmem:[%s7] sm:$0xf]
        %v4664 = vld [vmem:[%s8] sm:$0x1]
        %v4666 = vsel %vm1485, %v4662, 0
        %v4669 = vsel %vm547, %v4663, 0
        %4671 = vmatprep.subr.bf16.mxu0 0
        %4672 = vmatpush1.bf16.msra.mxu0 %v4669
        %4673 = vmatprep.subr.bf16.mxu0 0
        %4674 = vmatpush1.bf16.msra.mxu0 0
        %4675 = vmatprep.subr.bf16.mxu0 0
        %4676 = vmatpush1.bf16.msra.mxu0 0
        %4677 = vmatprep.subr.bf16.mxu0 0
        %4678 = vmatpush1.bf16.msra.mxu0 0
        %4679 = vmatprep.subr.bf16.mxu0 0
        %4680 = vmatpush1.bf16.msra.mxu0 0
        %4681 = vmatprep.subr.bf16.mxu0 0
        %4682 = vmatpush1.bf16.msra.mxu0 0
        %4683 = vmatprep.subr.bf16.mxu0 0
        %4684 = vmatpush1.bf16.msra.mxu0 0
        %4685 = vmatprep.subr.bf16.mxu0 0
        %4686 = vmatpush1.bf16.msra.mxu0 0
        %4687 = vmatprep.subr.bf16.mxu0 0
        %4688 = vmatpush1.bf16.msra.mxu0 0
        %4689 = vmatprep.subr.bf16.mxu0 0
        %4690 = vmatpush1.bf16.msra.mxu0 0
        %4691 = vmatprep.subr.bf16.mxu0 0
        %4692 = vmatpush1.bf16.msra.mxu0 0
        %4693 = vmatprep.subr.bf16.mxu0 0
        %4694 = vmatpush1.bf16.msra.mxu0 0
        %4695 = vmatprep.subr.bf16.mxu0 0
        %4696 = vmatpush1.bf16.msra.mxu0 0
        %4697 = vmatprep.subr.bf16.mxu0 0
        %4698 = vmatpush1.bf16.msra.mxu0 0
        %4699 = vmatprep.subr.bf16.mxu0 0
        %4700 = vmatpush1.bf16.msra.mxu0 0
        %4701 = vmatprep.subr.bf16.mxu0 0
        %4702 = vmatpush1.bf16.msra.mxu0 0
        %4703 = vmatprep.mubr.bf16.mxu0 0
        %4704 = vmatmul.mubr.bf16.gmra.mrb[0].mxu0 %v4666
        %v4705 = vpop.f32.mrb[0].mxu0
        %v4706 = vadd.f32 %v4664, %v4705
        %v4707 = vpop.f32.mrb[0].mxu0
        %v4708 = vpop.f32.mrb[0].mxu0
        %v4709 = vpop.f32.mrb[0].mxu0
        %4710 = vdwg.mxu0
        %vm4711 = vcmask 122880
        %4712 = vst.msk [vmem:[%s393] sm:$0x1] %vm4711, %v4706
        %p4713 = scmp.lt.s32.totalorder %s26, 1
        %s4714 = scalar_select %p4713, %s26, 1
        %s4715 = smul.addr %s4714, 32
        %s4716 = smul.addr %s4715, 8
        %s4717 = scalar_lea.vmem %s9, %s4716
        %p4718 = scmp.lt.s32.totalorder %s26, 1
        %s4719 = scalar_select %p4718, %s26, 1
        %s4720 = smul.addr %s4719, 32
        %s4721 = smul.addr %s4720, 8
        %s4722 = scalar_lea.vmem %s10, %s4721
        %s4723 = sand.u32 %s280, 1
        %s4724 = scalar_lea.sflag [#allocation3], %s4723
        %s4725 = sand.u32 %s280, 1
        %s4726 = scalar_lea.vmem [#allocation2], %s4725
        // Predicated region
        $region57: #{tpu_custom_call.1} parent=55 // pred_check
          %p4727 = pneg %p238
        $region58: #{tpu_custom_call.1} parent=55 // pred_check_branch
          %4729 = sbr.rel (%p4727) target = $region60
        $region59: #{tpu_custom_call.1} parent=55 // pred_region
          _
        $region60: #{tpu_custom_call.1} parent=55 // pred_fallthru
          _
        // Predicated region
        $region61: #{tpu_custom_call.1} parent=55 // pred_check
          %p4730 = pneg %p264
        $region62: #{tpu_custom_call.1} parent=55 // pred_check_branch
          %4732 = sbr.rel (%p4730) target = $region64
        $region63: #{tpu_custom_call.1} parent=55 // pred_region
          _
        $region64: #{tpu_custom_call.1} parent=55 // pred_fallthru
          _
        // Predicated region
        $region65: #{tpu_custom_call.1} parent=55 // pred_check
          %p4733 = pneg %p290
        $region66: #{tpu_custom_call.1} parent=55 // pred_check_branch
          %4735 = sbr.rel (%p4733) target = $region68
        $region67: #{tpu_custom_call.1} parent=55 // pred_region
          %s4737 = ssub.s32 16, 16
          %4738 = vsyncadd %s4724, %s4737
          %s4739 = smul.addr %s26, 16
          %s4740 = scalar_lea.hbm %s11, %s4739
          %s4742 = sshll.u32 %s4726, 4
          %s4743 = int_to_ptr.vmem [resolvable:$true] %s4742
          %4745 = dma.vmem_to_hbm [thread:$0]  %s4743, 16, %s4740, %s4724
        $region68: #{tpu_custom_call.1} parent=55 // pred_fallthru
          _
      $region56: #{tpu_custom_call.1} parent=5 // pred_fallthru
        _
      %p4746 = scmp.le.s32.totalorder 2, %s21
      // Predicated region
      $region69: #{tpu_custom_call.1} parent=5 // pred_check
        %p4747 = pneg %p4746
      $region70: #{tpu_custom_call.1} parent=5 // pred_check_branch
        %4749 = sbr.rel (%p4747) target = $region72
      $region71: #{tpu_custom_call.1} parent=5 // pred_region
        %s4750 = ssub.s32 %s21, 2
        // Predicated region
        $region73: #{tpu_custom_call.1} parent=71 // pred_check
          %p4751 = pneg %p244
        $region74: #{tpu_custom_call.1} parent=71 // pred_check_branch
          %4753 = sbr.rel (%p4751) target = $region76
        $region75: #{tpu_custom_call.1} parent=71 // pred_region
          %p4754 = scmp.lt.s32.totalorder %s27, 1
          %s4755 = scalar_select %p4754, %s27, 1
          %s4756 = smul.addr %s4755, 32
          %s4757 = smul.addr %s4756, 8
          %s4758 = scalar_lea.vmem %s9, %s4757
        $region76: #{tpu_custom_call.1} parent=71 // pred_fallthru
          _
        // Predicated region
        $region77: #{tpu_custom_call.1} parent=71 // pred_check
          %p4759 = pneg %p270
        $region78: #{tpu_custom_call.1} parent=71 // pred_check_branch
          %4761 = sbr.rel (%p4759) target = $region80
        $region79: #{tpu_custom_call.1} parent=71 // pred_region
          %p4762 = scmp.lt.s32.totalorder %s27, 1
          %s4763 = scalar_select %p4762, %s27, 1
          %s4764 = smul.addr %s4763, 32
          %s4765 = smul.addr %s4764, 8
          %s4766 = scalar_lea.vmem %s10, %s4765
        $region80: #{tpu_custom_call.1} parent=71 // pred_fallthru
          _
        // Predicated region
        $region81: #{tpu_custom_call.1} parent=71 // pred_check
          %p4767 = pneg %p296
        $region82: #{tpu_custom_call.1} parent=71 // pred_check_branch
          %4769 = sbr.rel (%p4767) target = $region84
        $region83: #{tpu_custom_call.1} parent=71 // pred_region
          %s4770 = sand.u32 %s281, 1
          %s4771 = scalar_lea.sflag [#allocation3], %s4770
          %s4772 = sand.u32 %s281, 1
          %s4773 = scalar_lea.vmem [#allocation2], %s4772
          %4774 = dma.done %s4771, 16
        $region84: #{tpu_custom_call.1} parent=71 // pred_fallthru
          _
      $region72: #{tpu_custom_call.1} parent=5 // pred_fallthru
        _
    $region6: #{tpu_custom_call.1} parent=1 // loop_footer
      %s25 = sadd.s32 1, %s21
    $region7: #{tpu_custom_call.1} parent=1 // loop_footer_branch
      %20 = sbr.rel target = $region3
    $region8: #{tpu_custom_call.1} parent=1 // loop_exit
      _
    %4775 = vsyncpa [#allocation3], 1
    %s4776 = scalar_lea.sflag [#allocation3], 1
    %4777 = vsyncpa %s4776, 1

</llo_original>
